<compile_context>
chip_gen: v6e
topology: v6e:2x2x1
jax: 0.10.0
libtpu: 0.0.40
codegen_flags: <defaults>
</compile_context>

<pallas_src>
import functools
import math

import jax
import jax.numpy as jnp
from jax import lax
from jax.experimental import pallas as pl
from jax.experimental.pallas import tpu as pltpu

# ----------------------------- config ---------------------------------------
CFG = dict(
    vocab_size=9,        # len(vocab) in the reference script
    context_length=8,
    emb_dim=32,
    n_heads=4,
    n_layers=2,
    drop_rate=0.0,       # dropout is identity
    qkv_bias=False,
)
EPS = 1e-5
VPAD = 128               # lane-dense padded width for the output head
HP = 128                 # per-head 128-lane-aligned block for Q/K packing


# ------------------------- in-kernel helpers ---------------------------------
def _layernorm(x, scale, shift):
    # x: [N, D]; scale/shift: [1, D]; matches torch var(unbiased=False)
    mean = jnp.mean(x, axis=-1, keepdims=True)
    var = jnp.mean((x - mean) ** 2, axis=-1, keepdims=True)
    return scale * ((x - mean) * lax.rsqrt(var + EPS)) + shift


def _gelu(x):
    c = math.sqrt(2.0 / math.pi)
    return 0.5 * x * (1.0 + jnp.tanh(c * (x + 0.044715 * x ** 3)))


# --------------------------- fused GPT kernel --------------------------------
def _gpt_kernel(num_heads, n_layers,
                idx_ref, tok_ref, pos_ref, bias_ref,
                ln1s_ref, ln1b_ref, wqk_ref, wvo_ref, bo_ref,
                ln2s_ref, ln2b_ref, w1_ref, b1_ref, w2_ref, b2_ref,
                fns_ref, fnb_ref, wout_ref, out_ref):
    V, D = tok_ref.shape
    N = idx_ref.shape[0]          # N = B * T (batch collapsed into rows)
    KOFF = num_heads * HP         # lane offset of the K block inside qk

    # ---- embedding: one-hot matmul gather + pre-tiled positional add --------
    idx = idx_ref[...]                                                   # [N,1] i32
    onehot = (idx == lax.broadcasted_iota(jnp.int32, (N, V), 1)).astype(jnp.float32)
    x = jnp.dot(onehot, tok_ref[...], preferred_element_type=jnp.float32)
    x = x + pos_ref[...]                                                 # [N, D]

    # precomputed causal + batch-block additive bias (0 / -1e30), [N, N]
    bias = bias_ref[...]

    for l in range(n_layers):
        # ---- pre-norm 1 + multi-head causal self-attention (V·Wo fused) ----
        xn = _layernorm(x, ln1s_ref[l], ln1b_ref[l])
        # one matmul for all heads' Q and K; 1/sqrt(hd) already folded into Wq
        qk = jnp.dot(xn, wqk_ref[l], preferred_element_type=jnp.float32)  # [N, 2*H*128]

        attn = None
        for h in range(num_heads):
            qh = qk[:, h * HP:(h + 1) * HP]                  # 128-lane aligned slice
            kh = qk[:, KOFF + h * HP: KOFF + (h + 1) * HP]
            s = lax.dot_general(qh, kh, (((1,), (1,)), ((), ())),
                                preferred_element_type=jnp.float32)       # [N, N]
            s = s + bias
            m = jnp.max(s, axis=-1, keepdims=True)
            e = jnp.exp(s - m)
            p = e / jnp.sum(e, axis=-1, keepdims=True)
            # fused V * Wo projection for this head: xn @ (Wv_h @ Wo_h) -> [N, D]
            vo = jnp.dot(xn, wvo_ref[l * num_heads + h],
                         preferred_element_type=jnp.float32)
            hout = jnp.dot(p, vo, preferred_element_type=jnp.float32)     # [N, D]
            attn = hout if attn is None else attn + hout
        x = x + attn + bo_ref[l]                                          # residual 1

        # ---- pre-norm 2 + feed-forward ----
        xn2 = _layernorm(x, ln2s_ref[l], ln2b_ref[l])
        h1 = jnp.dot(xn2, w1_ref[l], preferred_element_type=jnp.float32) + b1_ref[l]
        h1 = _gelu(h1)
        x = x + jnp.dot(h1, w2_ref[l], preferred_element_type=jnp.float32) + b2_ref[l]

    # ---- final norm + output head (lane-dense, zero-padded to VPAD) ----
    xn = _layernorm(x, fns_ref[...], fnb_ref[...])
    out_ref[...] = jnp.dot(xn, wout_ref[...], preferred_element_type=jnp.float32)


def gpt_forward(params, in_idx, cfg):
    B, T = in_idx.shape
    V = cfg["vocab_size"]
    L = cfg["n_layers"]
    nh = cfg["n_heads"]
    N = B * T
    assert params["pos_tiled"].shape[0] == N, "init_params was built for a different (B, T)"

    idx = in_idx.reshape(N, 1).astype(jnp.int32)

    inputs = (idx, params["tok_emb"], params["pos_tiled"], params["bias"],
              params["ln1_s"], params["ln1_b"], params["wqk_pad"],
              params["wvo"], params["bo"],
              params["ln2_s"], params["ln2_b"], params["w1"], params["b1"],
              params["w2"], params["b2"],
              params["fn_s"], params["fn_b"], params["w_out_pad"])

    vmem = pl.BlockSpec(memory_space=pltpu.MemorySpace.VMEM)
    out = pl.pallas_call(
        functools.partial(_gpt_kernel, nh, L),
        out_shape=jax.ShapeDtypeStruct((N, VPAD), jnp.float32),
        in_specs=[vmem] * len(inputs),
        out_specs=vmem,
    )(*inputs)
    return out.reshape(B, T, VPAD)[:, :, :V]


# ----------------------------- parameters ------------------------------------
def init_params(key, cfg, batch_size, seq_len):
    V, C, D, L = cfg["vocab_size"], cfg["context_length"], cfg["emb_dim"], cfg["n_layers"]
    nh = cfg["n_heads"]
    hd = D // nh
    H = 4 * D
    inv_sqrt_hd = 1.0 / math.sqrt(hd)
    keys = iter(jax.random.split(key, 3 + 9 * L))
    nrm = lambda shape: (0.02 * jax.random.normal(next(keys), shape)).astype(jnp.float32)

    tok_emb = nrm((V, D))
    pos_emb = nrm((C, D))

    wq_l, wk_l, wv_l, wo_l = [], [], [], []
    bo_l, w1_l, b1_l, w2_l, b2_l = [], [], [], [], []
    wqk_pad_l, wvo_l = [], []

    for _ in range(L):
        wq, wk, wv, wo = nrm((D, D)), nrm((D, D)), nrm((D, D)), nrm((D, D))
        bo = nrm((1, D))
        w1, b1, w2, b2 = nrm((D, H)), nrm((1, H)), nrm((H, D)), nrm((1, D))
        wq_l.append(wq); wk_l.append(wk); wv_l.append(wv); wo_l.append(wo)
        bo_l.append(bo); w1_l.append(w1); b1_l.append(b1); w2_l.append(w2); b2_l.append(b2)

        # kernel layout: per-head 128-lane-aligned zero-padded Q/K blocks,
        # 1/sqrt(hd) folded into Wq; fused per-head V*Wo weights.
        wq_pad = jnp.zeros((D, nh * HP), jnp.float32)
        wk_pad = jnp.zeros((D, nh * HP), jnp.float32)
        wvo_heads = []
        for h in range(nh):
            sl = slice(h * hd, (h + 1) * hd)
            wq_pad = wq_pad.at[:, h * HP:h * HP + hd].set(wq[:, sl] * inv_sqrt_hd)
            wk_pad = wk_pad.at[:, h * HP:h * HP + hd].set(wk[:, sl])
            wvo_heads.append(wv[:, sl] @ wo[sl, :])                       # [D, D]
        wqk_pad_l.append(jnp.concatenate([wq_pad, wk_pad], axis=1))        # [D, 2*nh*HP]
        wvo_l.extend(wvo_heads)                                            # flat [L*nh, D, D]

    w_out = nrm((D, V))
    w_out_pad = jnp.zeros((D, VPAD), jnp.float32).at[:, :V].set(w_out)

    # derived per-call-shape constants (built ONCE here, not per forward call)
    N = batch_size * seq_len
    pos_tiled = jnp.tile(pos_emb[:seq_len], (batch_size, 1))               # [N, D]
    r = jnp.arange(N)
    allowed = ((r[:, None] // seq_len) == (r[None, :] // seq_len)) & \
              ((r[None, :] % seq_len) <= (r[:, None] % seq_len))
    bias = jnp.where(allowed, 0.0, -1e30).astype(jnp.float32)              # [N, N]

    return dict(
        # base weights (used by the pure-JAX reference)
        tok_emb=tok_emb, pos_emb=pos_emb,
        wq=jnp.stack(wq_l), wk=jnp.stack(wk_l), wv=jnp.stack(wv_l), wo=jnp.stack(wo_l),
        bo=jnp.stack(bo_l),
        w1=jnp.stack(w1_l), b1=jnp.stack(b1_l), w2=jnp.stack(w2_l), b2=jnp.stack(b2_l),
        ln1_s=jnp.ones((L, 1, D), jnp.float32), ln1_b=jnp.zeros((L, 1, D), jnp.float32),
        ln2_s=jnp.ones((L, 1, D), jnp.float32), ln2_b=jnp.zeros((L, 1, D), jnp.float32),
        fn_s=jnp.ones((1, D), jnp.float32), fn_b=jnp.zeros((1, D), jnp.float32),
        w_out=w_out,
        # kernel-layout weights / constants
        wqk_pad=jnp.stack(wqk_pad_l),          # [L, D, 2*nh*128]
        wvo=jnp.stack(wvo_l),                  # [L*nh, D, D]
        w_out_pad=w_out_pad,                   # [D, 128]
        pos_tiled=pos_tiled,                   # [B*T, D]
        bias=bias,                             # [B*T, B*T]
    )


# ---------------------- pure-JAX reference (for checking) --------------------
def gpt_reference(params, in_idx, cfg):
    B, T = in_idx.shape
    D = cfg["emb_dim"]
    nh = cfg["n_heads"]
    hd = D // nh
    L = cfg["n_layers"]
    x = params["tok_emb"][in_idx] + params["pos_emb"][:T][None, :, :]

    def ln(x, s, b):
        m = jnp.mean(x, -1, keepdims=True)
        v = jnp.mean((x - m) ** 2, -1, keepdims=True)
        return s * ((x - m) / jnp.sqrt(v + EPS)) + b

    mask = jnp.triu(jnp.ones((T, T), bool), k=1)
    for l in range(L):
        sc = x
        xn = ln(x, params["ln1_s"][l], params["ln1_b"][l])
        q = xn @ params["wq"][l]
        k = xn @ params["wk"][l]
        v = xn @ params["wv"][l]
        q = q.reshape(B, T, nh, hd).transpose(0, 2, 1, 3)
        k = k.reshape(B, T, nh, hd).transpose(0, 2, 1, 3)
        v = v.reshape(B, T, nh, hd).transpose(0, 2, 1, 3)
        scores = jnp.einsum("bhtd,bhsd->bhts", q, k) / math.sqrt(hd)
        scores = jnp.where(mask, -jnp.inf, scores)
        w = jax.nn.softmax(scores, axis=-1)
        ctx = jnp.einsum("bhts,bhsd->bhtd", w, v).transpose(0, 2, 1, 3).reshape(B, T, D)
        x = sc + (ctx @ params["wo"][l] + params["bo"][l])
        sc = x
        xn = ln(x, params["ln2_s"][l], params["ln2_b"][l])
        h = xn @ params["w1"][l] + params["b1"][l]
        h = 0.5 * h * (1 + jnp.tanh(math.sqrt(2 / math.pi) * (h + 0.044715 * h ** 3)))
        x = sc + (h @ params["w2"][l] + params["b2"][l])
    x = ln(x, params["fn_s"], params["fn_b"])
    return x @ params["w_out"]


# --------------------------------- main ---------------------------------------
if __name__ == "__main__":
    key = jax.random.PRNGKey(0)
    k_param, k_idx = jax.random.split(key)

    B, T = 2, CFG["context_length"]
    params = init_params(k_param, CFG, batch_size=B, seq_len=T)

    in_idx = jax.random.randint(k_idx, (B, T), 0, CFG["vocab_size"], dtype=jnp.int32)

    logits = gpt_forward(params, in_idx, CFG)
    logits = jax.block_until_ready(logits)

    ref = gpt_reference(params, in_idx, CFG)
    assert logits.shape == (B, T, CFG["vocab_size"]), logits.shape
    assert jnp.all(jnp.isfinite(logits))
    max_err = float(jnp.max(jnp.abs(logits - ref)))
    assert jnp.allclose(logits, ref, rtol=2e-3, atol=2e-3), max_err

    print("KERNEL_OK")
</pallas_src>

<mosaic_0001>
module attributes {stable_mosaic.version = 11 : i64} {
  func.func @_gpt_kernel(%arg0: memref<16x1xi32, #tpu.memory_space<vmem>>, %arg1: memref<9x32xf32, #tpu.memory_space<vmem>>, %arg2: memref<16x32xf32, #tpu.memory_space<vmem>>, %arg3: memref<16x16xf32, #tpu.memory_space<vmem>>, %arg4: memref<2x1x32xf32, #tpu.memory_space<vmem>>, %arg5: memref<2x1x32xf32, #tpu.memory_space<vmem>>, %arg6: memref<2x32x1024xf32, #tpu.memory_space<vmem>>, %arg7: memref<8x32x32xf32, #tpu.memory_space<vmem>>, %arg8: memref<2x1x32xf32, #tpu.memory_space<vmem>>, %arg9: memref<2x1x32xf32, #tpu.memory_space<vmem>>, %arg10: memref<2x1x32xf32, #tpu.memory_space<vmem>>, %arg11: memref<2x32x128xf32, #tpu.memory_space<vmem>>, %arg12: memref<2x1x128xf32, #tpu.memory_space<vmem>>, %arg13: memref<2x128x32xf32, #tpu.memory_space<vmem>>, %arg14: memref<2x1x32xf32, #tpu.memory_space<vmem>>, %arg15: memref<1x32xf32, #tpu.memory_space<vmem>>, %arg16: memref<1x32xf32, #tpu.memory_space<vmem>>, %arg17: memref<32x128xf32, #tpu.memory_space<vmem>>, %arg18: memref<16x128xf32, #tpu.memory_space<vmem>>) attributes {dimension_semantics = [], scalar_prefetch = 0 : i64, scratch_operands = 0 : i64, tpu.core_type = #tpu.core_type<tc>} {
    %c0 = arith.constant 0 : index
    %c0_0 = arith.constant 0 : index
    %0 = vector.load %arg0[%c0, %c0_0] : memref<16x1xi32, #tpu.memory_space<vmem>>, vector<16x1xi32>
    %1 = tpu.iota {dimensions = array<i32: 1>} : vector<16x9xi32>
    %2 = vector.broadcast %0 : vector<16x1xi32> to vector<16x9xi32>
    %3 = arith.cmpi eq, %2, %1 : vector<16x9xi32>
    %4 = arith.extui %3 : vector<16x9xi1> to vector<16x9xi32>
    %5 = arith.sitofp %4 : vector<16x9xi32> to vector<16x9xf32>
    %c0_1 = arith.constant 0 : index
    %c0_2 = arith.constant 0 : index
    %6 = vector.load %arg1[%c0_1, %c0_2] : memref<9x32xf32, #tpu.memory_space<vmem>>, vector<9x32xf32>
    %cst = arith.constant dense<0.000000e+00> : vector<16x32xf32>
    %7 = tpu.matmul %5, %6, %cst {dimension_numbers = #tpu.dot_dimension_numbers<[1], [0], [0], [1], [0, 0, 1, 1], [], []>} : vector<16x9xf32>, vector<9x32xf32>, vector<16x32xf32> -> vector<16x32xf32>
    %c0_3 = arith.constant 0 : index
    %c0_4 = arith.constant 0 : index
    %8 = vector.load %arg2[%c0_3, %c0_4] : memref<16x32xf32, #tpu.memory_space<vmem>>, vector<16x32xf32>
    %9 = arith.addf %7, %8 : vector<16x32xf32>
    %c0_5 = arith.constant 0 : index
    %c0_6 = arith.constant 0 : index
    %10 = vector.load %arg3[%c0_5, %c0_6] : memref<16x16xf32, #tpu.memory_space<vmem>>, vector<16x16xf32>
    %c0_7 = arith.constant 0 : index
    %c0_8 = arith.constant 0 : index
    %c0_9 = arith.constant 0 : index
    %11 = vector.load %arg4[%c0_7, %c0_8, %c0_9] : memref<2x1x32xf32, #tpu.memory_space<vmem>>, vector<1x1x32xf32>
    %12 = vector.shape_cast %11 : vector<1x1x32xf32> to vector<1x32xf32>
    %c0_10 = arith.constant 0 : index
    %c0_11 = arith.constant 0 : index
    %c0_12 = arith.constant 0 : index
    %13 = vector.load %arg5[%c0_10, %c0_11, %c0_12] : memref<2x1x32xf32, #tpu.memory_space<vmem>>, vector<1x1x32xf32>
    %14 = vector.shape_cast %13 : vector<1x1x32xf32> to vector<1x32xf32>
    %cst_13 = arith.constant dense<0.000000e+00> : vector<16xf32>
    %15 = vector.multi_reduction <add>, %9, %cst_13 [1] : vector<16x32xf32> to vector<16xf32>
    %16 = vector.shape_cast %15 : vector<16xf32> to vector<16x1xf32>
    %cst_14 = arith.constant 3.200000e+01 : f32
    %17 = vector.broadcast %cst_14 : f32 to vector<16x1xf32>
    %18 = arith.divf %16, %17 : vector<16x1xf32>
    %19 = vector.broadcast %18 : vector<16x1xf32> to vector<16x32xf32>
    %20 = arith.subf %9, %19 : vector<16x32xf32>
    %21 = arith.mulf %20, %20 : vector<16x32xf32>
    %cst_15 = arith.constant dense<0.000000e+00> : vector<16xf32>
    %22 = vector.multi_reduction <add>, %21, %cst_15 [1] : vector<16x32xf32> to vector<16xf32>
    %23 = vector.shape_cast %22 : vector<16xf32> to vector<16x1xf32>
    %cst_16 = arith.constant 3.200000e+01 : f32
    %24 = vector.broadcast %cst_16 : f32 to vector<16x1xf32>
    %25 = arith.divf %23, %24 : vector<16x1xf32>
    %26 = vector.broadcast %18 : vector<16x1xf32> to vector<16x32xf32>
    %27 = arith.subf %9, %26 : vector<16x32xf32>
    %cst_17 = arith.constant 9.99999974E-6 : f32
    %28 = vector.broadcast %cst_17 : f32 to vector<16x1xf32>
    %29 = arith.addf %25, %28 : vector<16x1xf32>
    %30 = math.rsqrt %29 : vector<16x1xf32>
    %31 = vector.broadcast %30 : vector<16x1xf32> to vector<16x32xf32>
    %32 = arith.mulf %27, %31 : vector<16x32xf32>
    %33 = vector.broadcast %12 : vector<1x32xf32> to vector<16x32xf32>
    %34 = arith.mulf %33, %32 : vector<16x32xf32>
    %35 = vector.broadcast %14 : vector<1x32xf32> to vector<16x32xf32>
    %36 = arith.addf %34, %35 : vector<16x32xf32>
    %c0_18 = arith.constant 0 : index
    %c0_19 = arith.constant 0 : index
    %c0_20 = arith.constant 0 : index
    %37 = vector.load %arg6[%c0_18, %c0_19, %c0_20] : memref<2x32x1024xf32, #tpu.memory_space<vmem>>, vector<1x32x1024xf32>
    %38 = vector.shape_cast %37 : vector<1x32x1024xf32> to vector<32x1024xf32>
    %cst_21 = arith.constant dense<0.000000e+00> : vector<16x1024xf32>
    %39 = tpu.matmul %36, %38, %cst_21 {dimension_numbers = #tpu.dot_dimension_numbers<[1], [0], [0], [1], [0, 0, 1, 1], [], []>} : vector<16x32xf32>, vector<32x1024xf32>, vector<16x1024xf32> -> vector<16x1024xf32>
    %40 = vector.extract_strided_slice %39 {offsets = [0, 0], sizes = [16, 128], strides = [1, 1]} : vector<16x1024xf32> to vector<16x128xf32>
    %41 = vector.extract_strided_slice %39 {offsets = [0, 512], sizes = [16, 128], strides = [1, 1]} : vector<16x1024xf32> to vector<16x128xf32>
    %cst_22 = arith.constant dense<0.000000e+00> : vector<16x16xf32>
    %42 = tpu.matmul %40, %41, %cst_22 {dimension_numbers = #tpu.dot_dimension_numbers<[1], [1], [0], [0], [0, 0, 1, 0], [], []>} : vector<16x128xf32>, vector<16x128xf32>, vector<16x16xf32> -> vector<16x16xf32>
    %43 = arith.addf %42, %10 : vector<16x16xf32>
    %cst_23 = arith.constant dense<0xFF800000> : vector<16xf32>
    %44 = vector.multi_reduction <maximumf>, %43, %cst_23 [1] : vector<16x16xf32> to vector<16xf32>
    %45 = vector.shape_cast %44 : vector<16xf32> to vector<16x1xf32>
    %46 = vector.broadcast %45 : vector<16x1xf32> to vector<16x16xf32>
    %47 = arith.subf %43, %46 : vector<16x16xf32>
    %48 = math.exp %47 : vector<16x16xf32>
    %cst_24 = arith.constant dense<0.000000e+00> : vector<16xf32>
    %49 = vector.multi_reduction <add>, %48, %cst_24 [1] : vector<16x16xf32> to vector<16xf32>
    %50 = vector.shape_cast %49 : vector<16xf32> to vector<16x1xf32>
    %51 = vector.broadcast %50 : vector<16x1xf32> to vector<16x16xf32>
    %52 = arith.divf %48, %51 : vector<16x16xf32>
    %c0_25 = arith.constant 0 : index
    %c0_26 = arith.constant 0 : index
    %c0_27 = arith.constant 0 : index
    %53 = vector.load %arg7[%c0_25, %c0_26, %c0_27] : memref<8x32x32xf32, #tpu.memory_space<vmem>>, vector<1x32x32xf32>
    %54 = vector.shape_cast %53 : vector<1x32x32xf32> to vector<32x32xf32>
    %cst_28 = arith.constant dense<0.000000e+00> : vector<16x32xf32>
    %55 = tpu.matmul %36, %54, %cst_28 {dimension_numbers = #tpu.dot_dimension_numbers<[1], [0], [0], [1], [0, 0, 1, 1], [], []>} : vector<16x32xf32>, vector<32x32xf32>, vector<16x32xf32> -> vector<16x32xf32>
    %cst_29 = arith.constant dense<0.000000e+00> : vector<16x32xf32>
    %56 = tpu.matmul %52, %55, %cst_29 {dimension_numbers = #tpu.dot_dimension_numbers<[1], [0], [0], [1], [0, 0, 1, 1], [], []>} : vector<16x16xf32>, vector<16x32xf32>, vector<16x32xf32> -> vector<16x32xf32>
    %57 = vector.extract_strided_slice %39 {offsets = [0, 128], sizes = [16, 128], strides = [1, 1]} : vector<16x1024xf32> to vector<16x128xf32>
    %58 = vector.extract_strided_slice %39 {offsets = [0, 640], sizes = [16, 128], strides = [1, 1]} : vector<16x1024xf32> to vector<16x128xf32>
    %cst_30 = arith.constant dense<0.000000e+00> : vector<16x16xf32>
    %59 = tpu.matmul %57, %58, %cst_30 {dimension_numbers = #tpu.dot_dimension_numbers<[1], [1], [0], [0], [0, 0, 1, 0], [], []>} : vector<16x128xf32>, vector<16x128xf32>, vector<16x16xf32> -> vector<16x16xf32>
    %60 = arith.addf %59, %10 : vector<16x16xf32>
    %cst_31 = arith.constant dense<0xFF800000> : vector<16xf32>
    %61 = vector.multi_reduction <maximumf>, %60, %cst_31 [1] : vector<16x16xf32> to vector<16xf32>
    %62 = vector.shape_cast %61 : vector<16xf32> to vector<16x1xf32>
    %63 = vector.broadcast %62 : vector<16x1xf32> to vector<16x16xf32>
    %64 = arith.subf %60, %63 : vector<16x16xf32>
    %65 = math.exp %64 : vector<16x16xf32>
    %cst_32 = arith.constant dense<0.000000e+00> : vector<16xf32>
    %66 = vector.multi_reduction <add>, %65, %cst_32 [1] : vector<16x16xf32> to vector<16xf32>
    %67 = vector.shape_cast %66 : vector<16xf32> to vector<16x1xf32>
    %68 = vector.broadcast %67 : vector<16x1xf32> to vector<16x16xf32>
    %69 = arith.divf %65, %68 : vector<16x16xf32>
    %c1 = arith.constant 1 : index
    %c0_33 = arith.constant 0 : index
    %c0_34 = arith.constant 0 : index
    %70 = vector.load %arg7[%c1, %c0_33, %c0_34] : memref<8x32x32xf32, #tpu.memory_space<vmem>>, vector<1x32x32xf32>
    %71 = vector.shape_cast %70 : vector<1x32x32xf32> to vector<32x32xf32>
    %cst_35 = arith.constant dense<0.000000e+00> : vector<16x32xf32>
    %72 = tpu.matmul %36, %71, %cst_35 {dimension_numbers = #tpu.dot_dimension_numbers<[1], [0], [0], [1], [0, 0, 1, 1], [], []>} : vector<16x32xf32>, vector<32x32xf32>, vector<16x32xf32> -> vector<16x32xf32>
    %cst_36 = arith.constant dense<0.000000e+00> : vector<16x32xf32>
    %73 = tpu.matmul %69, %72, %cst_36 {dimension_numbers = #tpu.dot_dimension_numbers<[1], [0], [0], [1], [0, 0, 1, 1], [], []>} : vector<16x16xf32>, vector<16x32xf32>, vector<16x32xf32> -> vector<16x32xf32>
    %74 = arith.addf %56, %73 : vector<16x32xf32>
    %75 = vector.extract_strided_slice %39 {offsets = [0, 256], sizes = [16, 128], strides = [1, 1]} : vector<16x1024xf32> to vector<16x128xf32>
    %76 = vector.extract_strided_slice %39 {offsets = [0, 768], sizes = [16, 128], strides = [1, 1]} : vector<16x1024xf32> to vector<16x128xf32>
    %cst_37 = arith.constant dense<0.000000e+00> : vector<16x16xf32>
    %77 = tpu.matmul %75, %76, %cst_37 {dimension_numbers = #tpu.dot_dimension_numbers<[1], [1], [0], [0], [0, 0, 1, 0], [], []>} : vector<16x128xf32>, vector<16x128xf32>, vector<16x16xf32> -> vector<16x16xf32>
    %78 = arith.addf %77, %10 : vector<16x16xf32>
    %cst_38 = arith.constant dense<0xFF800000> : vector<16xf32>
    %79 = vector.multi_reduction <maximumf>, %78, %cst_38 [1] : vector<16x16xf32> to vector<16xf32>
    %80 = vector.shape_cast %79 : vector<16xf32> to vector<16x1xf32>
    %81 = vector.broadcast %80 : vector<16x1xf32> to vector<16x16xf32>
    %82 = arith.subf %78, %81 : vector<16x16xf32>
    %83 = math.exp %82 : vector<16x16xf32>
    %cst_39 = arith.constant dense<0.000000e+00> : vector<16xf32>
    %84 = vector.multi_reduction <add>, %83, %cst_39 [1] : vector<16x16xf32> to vector<16xf32>
    %85 = vector.shape_cast %84 : vector<16xf32> to vector<16x1xf32>
    %86 = vector.broadcast %85 : vector<16x1xf32> to vector<16x16xf32>
    %87 = arith.divf %83, %86 : vector<16x16xf32>
    %c2 = arith.constant 2 : index
    %c0_40 = arith.constant 0 : index
    %c0_41 = arith.constant 0 : index
    %88 = vector.load %arg7[%c2, %c0_40, %c0_41] : memref<8x32x32xf32, #tpu.memory_space<vmem>>, vector<1x32x32xf32>
    %89 = vector.shape_cast %88 : vector<1x32x32xf32> to vector<32x32xf32>
    %cst_42 = arith.constant dense<0.000000e+00> : vector<16x32xf32>
    %90 = tpu.matmul %36, %89, %cst_42 {dimension_numbers = #tpu.dot_dimension_numbers<[1], [0], [0], [1], [0, 0, 1, 1], [], []>} : vector<16x32xf32>, vector<32x32xf32>, vector<16x32xf32> -> vector<16x32xf32>
    %cst_43 = arith.constant dense<0.000000e+00> : vector<16x32xf32>
    %91 = tpu.matmul %87, %90, %cst_43 {dimension_numbers = #tpu.dot_dimension_numbers<[1], [0], [0], [1], [0, 0, 1, 1], [], []>} : vector<16x16xf32>, vector<16x32xf32>, vector<16x32xf32> -> vector<16x32xf32>
    %92 = arith.addf %74, %91 : vector<16x32xf32>
    %93 = vector.extract_strided_slice %39 {offsets = [0, 384], sizes = [16, 128], strides = [1, 1]} : vector<16x1024xf32> to vector<16x128xf32>
    %94 = vector.extract_strided_slice %39 {offsets = [0, 896], sizes = [16, 128], strides = [1, 1]} : vector<16x1024xf32> to vector<16x128xf32>
    %cst_44 = arith.constant dense<0.000000e+00> : vector<16x16xf32>
    %95 = tpu.matmul %93, %94, %cst_44 {dimension_numbers = #tpu.dot_dimension_numbers<[1], [1], [0], [0], [0, 0, 1, 0], [], []>} : vector<16x128xf32>, vector<16x128xf32>, vector<16x16xf32> -> vector<16x16xf32>
    %96 = arith.addf %95, %10 : vector<16x16xf32>
    %cst_45 = arith.constant dense<0xFF800000> : vector<16xf32>
    %97 = vector.multi_reduction <maximumf>, %96, %cst_45 [1] : vector<16x16xf32> to vector<16xf32>
    %98 = vector.shape_cast %97 : vector<16xf32> to vector<16x1xf32>
    %99 = vector.broadcast %98 : vector<16x1xf32> to vector<16x16xf32>
    %100 = arith.subf %96, %99 : vector<16x16xf32>
    %101 = math.exp %100 : vector<16x16xf32>
    %cst_46 = arith.constant dense<0.000000e+00> : vector<16xf32>
    %102 = vector.multi_reduction <add>, %101, %cst_46 [1] : vector<16x16xf32> to vector<16xf32>
    %103 = vector.shape_cast %102 : vector<16xf32> to vector<16x1xf32>
    %104 = vector.broadcast %103 : vector<16x1xf32> to vector<16x16xf32>
    %105 = arith.divf %101, %104 : vector<16x16xf32>
    %c3 = arith.constant 3 : index
    %c0_47 = arith.constant 0 : index
    %c0_48 = arith.constant 0 : index
    %106 = vector.load %arg7[%c3, %c0_47, %c0_48] : memref<8x32x32xf32, #tpu.memory_space<vmem>>, vector<1x32x32xf32>
    %107 = vector.shape_cast %106 : vector<1x32x32xf32> to vector<32x32xf32>
    %cst_49 = arith.constant dense<0.000000e+00> : vector<16x32xf32>
    %108 = tpu.matmul %36, %107, %cst_49 {dimension_numbers = #tpu.dot_dimension_numbers<[1], [0], [0], [1], [0, 0, 1, 1], [], []>} : vector<16x32xf32>, vector<32x32xf32>, vector<16x32xf32> -> vector<16x32xf32>
    %cst_50 = arith.constant dense<0.000000e+00> : vector<16x32xf32>
    %109 = tpu.matmul %105, %108, %cst_50 {dimension_numbers = #tpu.dot_dimension_numbers<[1], [0], [0], [1], [0, 0, 1, 1], [], []>} : vector<16x16xf32>, vector<16x32xf32>, vector<16x32xf32> -> vector<16x32xf32>
    %110 = arith.addf %92, %109 : vector<16x32xf32>
    %111 = arith.addf %9, %110 : vector<16x32xf32>
    %c0_51 = arith.constant 0 : index
    %c0_52 = arith.constant 0 : index
    %c0_53 = arith.constant 0 : index
    %112 = vector.load %arg8[%c0_51, %c0_52, %c0_53] : memref<2x1x32xf32, #tpu.memory_space<vmem>>, vector<1x1x32xf32>
    %113 = vector.shape_cast %112 : vector<1x1x32xf32> to vector<1x32xf32>
    %114 = vector.broadcast %113 : vector<1x32xf32> to vector<16x32xf32>
    %115 = arith.addf %111, %114 : vector<16x32xf32>
    %c0_54 = arith.constant 0 : index
    %c0_55 = arith.constant 0 : index
    %c0_56 = arith.constant 0 : index
    %116 = vector.load %arg9[%c0_54, %c0_55, %c0_56] : memref<2x1x32xf32, #tpu.memory_space<vmem>>, vector<1x1x32xf32>
    %117 = vector.shape_cast %116 : vector<1x1x32xf32> to vector<1x32xf32>
    %c0_57 = arith.constant 0 : index
    %c0_58 = arith.constant 0 : index
    %c0_59 = arith.constant 0 : index
    %118 = vector.load %arg10[%c0_57, %c0_58, %c0_59] : memref<2x1x32xf32, #tpu.memory_space<vmem>>, vector<1x1x32xf32>
    %119 = vector.shape_cast %118 : vector<1x1x32xf32> to vector<1x32xf32>
    %cst_60 = arith.constant dense<0.000000e+00> : vector<16xf32>
    %120 = vector.multi_reduction <add>, %115, %cst_60 [1] : vector<16x32xf32> to vector<16xf32>
    %121 = vector.shape_cast %120 : vector<16xf32> to vector<16x1xf32>
    %cst_61 = arith.constant 3.200000e+01 : f32
    %122 = vector.broadcast %cst_61 : f32 to vector<16x1xf32>
    %123 = arith.divf %121, %122 : vector<16x1xf32>
    %124 = vector.broadcast %123 : vector<16x1xf32> to vector<16x32xf32>
    %125 = arith.subf %115, %124 : vector<16x32xf32>
    %126 = arith.mulf %125, %125 : vector<16x32xf32>
    %cst_62 = arith.constant dense<0.000000e+00> : vector<16xf32>
    %127 = vector.multi_reduction <add>, %126, %cst_62 [1] : vector<16x32xf32> to vector<16xf32>
    %128 = vector.shape_cast %127 : vector<16xf32> to vector<16x1xf32>
    %cst_63 = arith.constant 3.200000e+01 : f32
    %129 = vector.broadcast %cst_63 : f32 to vector<16x1xf32>
    %130 = arith.divf %128, %129 : vector<16x1xf32>
    %131 = vector.broadcast %123 : vector<16x1xf32> to vector<16x32xf32>
    %132 = arith.subf %115, %131 : vector<16x32xf32>
    %cst_64 = arith.constant 9.99999974E-6 : f32
    %133 = vector.broadcast %cst_64 : f32 to vector<16x1xf32>
    %134 = arith.addf %130, %133 : vector<16x1xf32>
    %135 = math.rsqrt %134 : vector<16x1xf32>
    %136 = vector.broadcast %135 : vector<16x1xf32> to vector<16x32xf32>
    %137 = arith.mulf %132, %136 : vector<16x32xf32>
    %138 = vector.broadcast %117 : vector<1x32xf32> to vector<16x32xf32>
    %139 = arith.mulf %138, %137 : vector<16x32xf32>
    %140 = vector.broadcast %119 : vector<1x32xf32> to vector<16x32xf32>
    %141 = arith.addf %139, %140 : vector<16x32xf32>
    %c0_65 = arith.constant 0 : index
    %c0_66 = arith.constant 0 : index
    %c0_67 = arith.constant 0 : index
    %142 = vector.load %arg11[%c0_65, %c0_66, %c0_67] : memref<2x32x128xf32, #tpu.memory_space<vmem>>, vector<1x32x128xf32>
    %143 = vector.shape_cast %142 : vector<1x32x128xf32> to vector<32x128xf32>
    %cst_68 = arith.constant dense<0.000000e+00> : vector<16x128xf32>
    %144 = tpu.matmul %141, %143, %cst_68 {dimension_numbers = #tpu.dot_dimension_numbers<[1], [0], [0], [1], [0, 0, 1, 1], [], []>} : vector<16x32xf32>, vector<32x128xf32>, vector<16x128xf32> -> vector<16x128xf32>
    %c0_69 = arith.constant 0 : index
    %c0_70 = arith.constant 0 : index
    %c0_71 = arith.constant 0 : index
    %145 = vector.load %arg12[%c0_69, %c0_70, %c0_71] : memref<2x1x128xf32, #tpu.memory_space<vmem>>, vector<1x1x128xf32>
    %146 = vector.shape_cast %145 : vector<1x1x128xf32> to vector<1x128xf32>
    %147 = vector.broadcast %146 : vector<1x128xf32> to vector<16x128xf32>
    %148 = arith.addf %144, %147 : vector<16x128xf32>
    %cst_72 = arith.constant 5.000000e-01 : f32
    %149 = vector.broadcast %cst_72 : f32 to vector<16x128xf32>
    %150 = arith.mulf %149, %148 : vector<16x128xf32>
    %151 = arith.mulf %148, %148 : vector<16x128xf32>
    %152 = arith.mulf %148, %151 : vector<16x128xf32>
    %cst_73 = arith.constant 4.471500e-02 : f32
    %153 = vector.broadcast %cst_73 : f32 to vector<16x128xf32>
    %154 = arith.mulf %153, %152 : vector<16x128xf32>
    %155 = arith.addf %148, %154 : vector<16x128xf32>
    %cst_74 = arith.constant 0.797884583 : f32
    %156 = vector.broadcast %cst_74 : f32 to vector<16x128xf32>
    %157 = arith.mulf %156, %155 : vector<16x128xf32>
    %158 = math.tanh %157 : vector<16x128xf32>
    %cst_75 = arith.constant 1.000000e+00 : f32
    %159 = vector.broadcast %cst_75 : f32 to vector<16x128xf32>
    %160 = arith.addf %159, %158 : vector<16x128xf32>
    %161 = arith.mulf %150, %160 : vector<16x128xf32>
    %c0_76 = arith.constant 0 : index
    %c0_77 = arith.constant 0 : index
    %c0_78 = arith.constant 0 : index
    %162 = vector.load %arg13[%c0_76, %c0_77, %c0_78] : memref<2x128x32xf32, #tpu.memory_space<vmem>>, vector<1x128x32xf32>
    %163 = vector.shape_cast %162 : vector<1x128x32xf32> to vector<128x32xf32>
    %cst_79 = arith.constant dense<0.000000e+00> : vector<16x32xf32>
    %164 = tpu.matmul %161, %163, %cst_79 {dimension_numbers = #tpu.dot_dimension_numbers<[1], [0], [0], [1], [0, 0, 1, 1], [], []>} : vector<16x128xf32>, vector<128x32xf32>, vector<16x32xf32> -> vector<16x32xf32>
    %165 = arith.addf %115, %164 : vector<16x32xf32>
    %c0_80 = arith.constant 0 : index
    %c0_81 = arith.constant 0 : index
    %c0_82 = arith.constant 0 : index
    %166 = vector.load %arg14[%c0_80, %c0_81, %c0_82] : memref<2x1x32xf32, #tpu.memory_space<vmem>>, vector<1x1x32xf32>
    %167 = vector.shape_cast %166 : vector<1x1x32xf32> to vector<1x32xf32>
    %168 = vector.broadcast %167 : vector<1x32xf32> to vector<16x32xf32>
    %169 = arith.addf %165, %168 : vector<16x32xf32>
    %c1_83 = arith.constant 1 : index
    %c0_84 = arith.constant 0 : index
    %c0_85 = arith.constant 0 : index
    %170 = vector.load %arg4[%c1_83, %c0_84, %c0_85] : memref<2x1x32xf32, #tpu.memory_space<vmem>>, vector<1x1x32xf32>
    %171 = vector.shape_cast %170 : vector<1x1x32xf32> to vector<1x32xf32>
    %c1_86 = arith.constant 1 : index
    %c0_87 = arith.constant 0 : index
    %c0_88 = arith.constant 0 : index
    %172 = vector.load %arg5[%c1_86, %c0_87, %c0_88] : memref<2x1x32xf32, #tpu.memory_space<vmem>>, vector<1x1x32xf32>
    %173 = vector.shape_cast %172 : vector<1x1x32xf32> to vector<1x32xf32>
    %cst_89 = arith.constant dense<0.000000e+00> : vector<16xf32>
    %174 = vector.multi_reduction <add>, %169, %cst_89 [1] : vector<16x32xf32> to vector<16xf32>
    %175 = vector.shape_cast %174 : vector<16xf32> to vector<16x1xf32>
    %cst_90 = arith.constant 3.200000e+01 : f32
    %176 = vector.broadcast %cst_90 : f32 to vector<16x1xf32>
    %177 = arith.divf %175, %176 : vector<16x1xf32>
    %178 = vector.broadcast %177 : vector<16x1xf32> to vector<16x32xf32>
    %179 = arith.subf %169, %178 : vector<16x32xf32>
    %180 = arith.mulf %179, %179 : vector<16x32xf32>
    %cst_91 = arith.constant dense<0.000000e+00> : vector<16xf32>
    %181 = vector.multi_reduction <add>, %180, %cst_91 [1] : vector<16x32xf32> to vector<16xf32>
    %182 = vector.shape_cast %181 : vector<16xf32> to vector<16x1xf32>
    %cst_92 = arith.constant 3.200000e+01 : f32
    %183 = vector.broadcast %cst_92 : f32 to vector<16x1xf32>
    %184 = arith.divf %182, %183 : vector<16x1xf32>
    %185 = vector.broadcast %177 : vector<16x1xf32> to vector<16x32xf32>
    %186 = arith.subf %169, %185 : vector<16x32xf32>
    %cst_93 = arith.constant 9.99999974E-6 : f32
    %187 = vector.broadcast %cst_93 : f32 to vector<16x1xf32>
    %188 = arith.addf %184, %187 : vector<16x1xf32>
    %189 = math.rsqrt %188 : vector<16x1xf32>
    %190 = vector.broadcast %189 : vector<16x1xf32> to vector<16x32xf32>
    %191 = arith.mulf %186, %190 : vector<16x32xf32>
    %192 = vector.broadcast %171 : vector<1x32xf32> to vector<16x32xf32>
    %193 = arith.mulf %192, %191 : vector<16x32xf32>
    %194 = vector.broadcast %173 : vector<1x32xf32> to vector<16x32xf32>
    %195 = arith.addf %193, %194 : vector<16x32xf32>
    %c1_94 = arith.constant 1 : index
    %c0_95 = arith.constant 0 : index
    %c0_96 = arith.constant 0 : index
    %196 = vector.load %arg6[%c1_94, %c0_95, %c0_96] : memref<2x32x1024xf32, #tpu.memory_space<vmem>>, vector<1x32x1024xf32>
    %197 = vector.shape_cast %196 : vector<1x32x1024xf32> to vector<32x1024xf32>
    %cst_97 = arith.constant dense<0.000000e+00> : vector<16x1024xf32>
    %198 = tpu.matmul %195, %197, %cst_97 {dimension_numbers = #tpu.dot_dimension_numbers<[1], [0], [0], [1], [0, 0, 1, 1], [], []>} : vector<16x32xf32>, vector<32x1024xf32>, vector<16x1024xf32> -> vector<16x1024xf32>
    %199 = vector.extract_strided_slice %198 {offsets = [0, 0], sizes = [16, 128], strides = [1, 1]} : vector<16x1024xf32> to vector<16x128xf32>
    %200 = vector.extract_strided_slice %198 {offsets = [0, 512], sizes = [16, 128], strides = [1, 1]} : vector<16x1024xf32> to vector<16x128xf32>
    %cst_98 = arith.constant dense<0.000000e+00> : vector<16x16xf32>
    %201 = tpu.matmul %199, %200, %cst_98 {dimension_numbers = #tpu.dot_dimension_numbers<[1], [1], [0], [0], [0, 0, 1, 0], [], []>} : vector<16x128xf32>, vector<16x128xf32>, vector<16x16xf32> -> vector<16x16xf32>
    %202 = arith.addf %201, %10 : vector<16x16xf32>
    %cst_99 = arith.constant dense<0xFF800000> : vector<16xf32>
    %203 = vector.multi_reduction <maximumf>, %202, %cst_99 [1] : vector<16x16xf32> to vector<16xf32>
    %204 = vector.shape_cast %203 : vector<16xf32> to vector<16x1xf32>
    %205 = vector.broadcast %204 : vector<16x1xf32> to vector<16x16xf32>
    %206 = arith.subf %202, %205 : vector<16x16xf32>
    %207 = math.exp %206 : vector<16x16xf32>
    %cst_100 = arith.constant dense<0.000000e+00> : vector<16xf32>
    %208 = vector.multi_reduction <add>, %207, %cst_100 [1] : vector<16x16xf32> to vector<16xf32>
    %209 = vector.shape_cast %208 : vector<16xf32> to vector<16x1xf32>
    %210 = vector.broadcast %209 : vector<16x1xf32> to vector<16x16xf32>
    %211 = arith.divf %207, %210 : vector<16x16xf32>
    %c4 = arith.constant 4 : index
    %c0_101 = arith.constant 0 : index
    %c0_102 = arith.constant 0 : index
    %212 = vector.load %arg7[%c4, %c0_101, %c0_102] : memref<8x32x32xf32, #tpu.memory_space<vmem>>, vector<1x32x32xf32>
    %213 = vector.shape_cast %212 : vector<1x32x32xf32> to vector<32x32xf32>
    %cst_103 = arith.constant dense<0.000000e+00> : vector<16x32xf32>
    %214 = tpu.matmul %195, %213, %cst_103 {dimension_numbers = #tpu.dot_dimension_numbers<[1], [0], [0], [1], [0, 0, 1, 1], [], []>} : vector<16x32xf32>, vector<32x32xf32>, vector<16x32xf32> -> vector<16x32xf32>
    %cst_104 = arith.constant dense<0.000000e+00> : vector<16x32xf32>
    %215 = tpu.matmul %211, %214, %cst_104 {dimension_numbers = #tpu.dot_dimension_numbers<[1], [0], [0], [1], [0, 0, 1, 1], [], []>} : vector<16x16xf32>, vector<16x32xf32>, vector<16x32xf32> -> vector<16x32xf32>
    %216 = vector.extract_strided_slice %198 {offsets = [0, 128], sizes = [16, 128], strides = [1, 1]} : vector<16x1024xf32> to vector<16x128xf32>
    %217 = vector.extract_strided_slice %198 {offsets = [0, 640], sizes = [16, 128], strides = [1, 1]} : vector<16x1024xf32> to vector<16x128xf32>
    %cst_105 = arith.constant dense<0.000000e+00> : vector<16x16xf32>
    %218 = tpu.matmul %216, %217, %cst_105 {dimension_numbers = #tpu.dot_dimension_numbers<[1], [1], [0], [0], [0, 0, 1, 0], [], []>} : vector<16x128xf32>, vector<16x128xf32>, vector<16x16xf32> -> vector<16x16xf32>
    %219 = arith.addf %218, %10 : vector<16x16xf32>
    %cst_106 = arith.constant dense<0xFF800000> : vector<16xf32>
    %220 = vector.multi_reduction <maximumf>, %219, %cst_106 [1] : vector<16x16xf32> to vector<16xf32>
    %221 = vector.shape_cast %220 : vector<16xf32> to vector<16x1xf32>
    %222 = vector.broadcast %221 : vector<16x1xf32> to vector<16x16xf32>
    %223 = arith.subf %219, %222 : vector<16x16xf32>
    %224 = math.exp %223 : vector<16x16xf32>
    %cst_107 = arith.constant dense<0.000000e+00> : vector<16xf32>
    %225 = vector.multi_reduction <add>, %224, %cst_107 [1] : vector<16x16xf32> to vector<16xf32>
    %226 = vector.shape_cast %225 : vector<16xf32> to vector<16x1xf32>
    %227 = vector.broadcast %226 : vector<16x1xf32> to vector<16x16xf32>
    %228 = arith.divf %224, %227 : vector<16x16xf32>
    %c5 = arith.constant 5 : index
    %c0_108 = arith.constant 0 : index
    %c0_109 = arith.constant 0 : index
    %229 = vector.load %arg7[%c5, %c0_108, %c0_109] : memref<8x32x32xf32, #tpu.memory_space<vmem>>, vector<1x32x32xf32>
    %230 = vector.shape_cast %229 : vector<1x32x32xf32> to vector<32x32xf32>
    %cst_110 = arith.constant dense<0.000000e+00> : vector<16x32xf32>
    %231 = tpu.matmul %195, %230, %cst_110 {dimension_numbers = #tpu.dot_dimension_numbers<[1], [0], [0], [1], [0, 0, 1, 1], [], []>} : vector<16x32xf32>, vector<32x32xf32>, vector<16x32xf32> -> vector<16x32xf32>
    %cst_111 = arith.constant dense<0.000000e+00> : vector<16x32xf32>
    %232 = tpu.matmul %228, %231, %cst_111 {dimension_numbers = #tpu.dot_dimension_numbers<[1], [0], [0], [1], [0, 0, 1, 1], [], []>} : vector<16x16xf32>, vector<16x32xf32>, vector<16x32xf32> -> vector<16x32xf32>
    %233 = arith.addf %215, %232 : vector<16x32xf32>
    %234 = vector.extract_strided_slice %198 {offsets = [0, 256], sizes = [16, 128], strides = [1, 1]} : vector<16x1024xf32> to vector<16x128xf32>
    %235 = vector.extract_strided_slice %198 {offsets = [0, 768], sizes = [16, 128], strides = [1, 1]} : vector<16x1024xf32> to vector<16x128xf32>
    %cst_112 = arith.constant dense<0.000000e+00> : vector<16x16xf32>
    %236 = tpu.matmul %234, %235, %cst_112 {dimension_numbers = #tpu.dot_dimension_numbers<[1], [1], [0], [0], [0, 0, 1, 0], [], []>} : vector<16x128xf32>, vector<16x128xf32>, vector<16x16xf32> -> vector<16x16xf32>
    %237 = arith.addf %236, %10 : vector<16x16xf32>
    %cst_113 = arith.constant dense<0xFF800000> : vector<16xf32>
    %238 = vector.multi_reduction <maximumf>, %237, %cst_113 [1] : vector<16x16xf32> to vector<16xf32>
    %239 = vector.shape_cast %238 : vector<16xf32> to vector<16x1xf32>
    %240 = vector.broadcast %239 : vector<16x1xf32> to vector<16x16xf32>
    %241 = arith.subf %237, %240 : vector<16x16xf32>
    %242 = math.exp %241 : vector<16x16xf32>
    %cst_114 = arith.constant dense<0.000000e+00> : vector<16xf32>
    %243 = vector.multi_reduction <add>, %242, %cst_114 [1] : vector<16x16xf32> to vector<16xf32>
    %244 = vector.shape_cast %243 : vector<16xf32> to vector<16x1xf32>
    %245 = vector.broadcast %244 : vector<16x1xf32> to vector<16x16xf32>
    %246 = arith.divf %242, %245 : vector<16x16xf32>
    %c6 = arith.constant 6 : index
    %c0_115 = arith.constant 0 : index
    %c0_116 = arith.constant 0 : index
    %247 = vector.load %arg7[%c6, %c0_115, %c0_116] : memref<8x32x32xf32, #tpu.memory_space<vmem>>, vector<1x32x32xf32>
    %248 = vector.shape_cast %247 : vector<1x32x32xf32> to vector<32x32xf32>
    %cst_117 = arith.constant dense<0.000000e+00> : vector<16x32xf32>
    %249 = tpu.matmul %195, %248, %cst_117 {dimension_numbers = #tpu.dot_dimension_numbers<[1], [0], [0], [1], [0, 0, 1, 1], [], []>} : vector<16x32xf32>, vector<32x32xf32>, vector<16x32xf32> -> vector<16x32xf32>
    %cst_118 = arith.constant dense<0.000000e+00> : vector<16x32xf32>
    %250 = tpu.matmul %246, %249, %cst_118 {dimension_numbers = #tpu.dot_dimension_numbers<[1], [0], [0], [1], [0, 0, 1, 1], [], []>} : vector<16x16xf32>, vector<16x32xf32>, vector<16x32xf32> -> vector<16x32xf32>
    %251 = arith.addf %233, %250 : vector<16x32xf32>
    %252 = vector.extract_strided_slice %198 {offsets = [0, 384], sizes = [16, 128], strides = [1, 1]} : vector<16x1024xf32> to vector<16x128xf32>
    %253 = vector.extract_strided_slice %198 {offsets = [0, 896], sizes = [16, 128], strides = [1, 1]} : vector<16x1024xf32> to vector<16x128xf32>
    %cst_119 = arith.constant dense<0.000000e+00> : vector<16x16xf32>
    %254 = tpu.matmul %252, %253, %cst_119 {dimension_numbers = #tpu.dot_dimension_numbers<[1], [1], [0], [0], [0, 0, 1, 0], [], []>} : vector<16x128xf32>, vector<16x128xf32>, vector<16x16xf32> -> vector<16x16xf32>
    %255 = arith.addf %254, %10 : vector<16x16xf32>
    %cst_120 = arith.constant dense<0xFF800000> : vector<16xf32>
    %256 = vector.multi_reduction <maximumf>, %255, %cst_120 [1] : vector<16x16xf32> to vector<16xf32>
    %257 = vector.shape_cast %256 : vector<16xf32> to vector<16x1xf32>
    %258 = vector.broadcast %257 : vector<16x1xf32> to vector<16x16xf32>
    %259 = arith.subf %255, %258 : vector<16x16xf32>
    %260 = math.exp %259 : vector<16x16xf32>
    %cst_121 = arith.constant dense<0.000000e+00> : vector<16xf32>
    %261 = vector.multi_reduction <add>, %260, %cst_121 [1] : vector<16x16xf32> to vector<16xf32>
    %262 = vector.shape_cast %261 : vector<16xf32> to vector<16x1xf32>
    %263 = vector.broadcast %262 : vector<16x1xf32> to vector<16x16xf32>
    %264 = arith.divf %260, %263 : vector<16x16xf32>
    %c7 = arith.constant 7 : index
    %c0_122 = arith.constant 0 : index
    %c0_123 = arith.constant 0 : index
    %265 = vector.load %arg7[%c7, %c0_122, %c0_123] : memref<8x32x32xf32, #tpu.memory_space<vmem>>, vector<1x32x32xf32>
    %266 = vector.shape_cast %265 : vector<1x32x32xf32> to vector<32x32xf32>
    %cst_124 = arith.constant dense<0.000000e+00> : vector<16x32xf32>
    %267 = tpu.matmul %195, %266, %cst_124 {dimension_numbers = #tpu.dot_dimension_numbers<[1], [0], [0], [1], [0, 0, 1, 1], [], []>} : vector<16x32xf32>, vector<32x32xf32>, vector<16x32xf32> -> vector<16x32xf32>
    %cst_125 = arith.constant dense<0.000000e+00> : vector<16x32xf32>
    %268 = tpu.matmul %264, %267, %cst_125 {dimension_numbers = #tpu.dot_dimension_numbers<[1], [0], [0], [1], [0, 0, 1, 1], [], []>} : vector<16x16xf32>, vector<16x32xf32>, vector<16x32xf32> -> vector<16x32xf32>
    %269 = arith.addf %251, %268 : vector<16x32xf32>
    %270 = arith.addf %169, %269 : vector<16x32xf32>
    %c1_126 = arith.constant 1 : index
    %c0_127 = arith.constant 0 : index
    %c0_128 = arith.constant 0 : index
    %271 = vector.load %arg8[%c1_126, %c0_127, %c0_128] : memref<2x1x32xf32, #tpu.memory_space<vmem>>, vector<1x1x32xf32>
    %272 = vector.shape_cast %271 : vector<1x1x32xf32> to vector<1x32xf32>
    %273 = vector.broadcast %272 : vector<1x32xf32> to vector<16x32xf32>
    %274 = arith.addf %270, %273 : vector<16x32xf32>
    %c1_129 = arith.constant 1 : index
    %c0_130 = arith.constant 0 : index
    %c0_131 = arith.constant 0 : index
    %275 = vector.load %arg9[%c1_129, %c0_130, %c0_131] : memref<2x1x32xf32, #tpu.memory_space<vmem>>, vector<1x1x32xf32>
    %276 = vector.shape_cast %275 : vector<1x1x32xf32> to vector<1x32xf32>
    %c1_132 = arith.constant 1 : index
    %c0_133 = arith.constant 0 : index
    %c0_134 = arith.constant 0 : index
    %277 = vector.load %arg10[%c1_132, %c0_133, %c0_134] : memref<2x1x32xf32, #tpu.memory_space<vmem>>, vector<1x1x32xf32>
    %278 = vector.shape_cast %277 : vector<1x1x32xf32> to vector<1x32xf32>
    %cst_135 = arith.constant dense<0.000000e+00> : vector<16xf32>
    %279 = vector.multi_reduction <add>, %274, %cst_135 [1] : vector<16x32xf32> to vector<16xf32>
    %280 = vector.shape_cast %279 : vector<16xf32> to vector<16x1xf32>
    %cst_136 = arith.constant 3.200000e+01 : f32
    %281 = vector.broadcast %cst_136 : f32 to vector<16x1xf32>
    %282 = arith.divf %280, %281 : vector<16x1xf32>
    %283 = vector.broadcast %282 : vector<16x1xf32> to vector<16x32xf32>
    %284 = arith.subf %274, %283 : vector<16x32xf32>
    %285 = arith.mulf %284, %284 : vector<16x32xf32>
    %cst_137 = arith.constant dense<0.000000e+00> : vector<16xf32>
    %286 = vector.multi_reduction <add>, %285, %cst_137 [1] : vector<16x32xf32> to vector<16xf32>
    %287 = vector.shape_cast %286 : vector<16xf32> to vector<16x1xf32>
    %cst_138 = arith.constant 3.200000e+01 : f32
    %288 = vector.broadcast %cst_138 : f32 to vector<16x1xf32>
    %289 = arith.divf %287, %288 : vector<16x1xf32>
    %290 = vector.broadcast %282 : vector<16x1xf32> to vector<16x32xf32>
    %291 = arith.subf %274, %290 : vector<16x32xf32>
    %cst_139 = arith.constant 9.99999974E-6 : f32
    %292 = vector.broadcast %cst_139 : f32 to vector<16x1xf32>
    %293 = arith.addf %289, %292 : vector<16x1xf32>
    %294 = math.rsqrt %293 : vector<16x1xf32>
    %295 = vector.broadcast %294 : vector<16x1xf32> to vector<16x32xf32>
    %296 = arith.mulf %291, %295 : vector<16x32xf32>
    %297 = vector.broadcast %276 : vector<1x32xf32> to vector<16x32xf32>
    %298 = arith.mulf %297, %296 : vector<16x32xf32>
    %299 = vector.broadcast %278 : vector<1x32xf32> to vector<16x32xf32>
    %300 = arith.addf %298, %299 : vector<16x32xf32>
    %c1_140 = arith.constant 1 : index
    %c0_141 = arith.constant 0 : index
    %c0_142 = arith.constant 0 : index
    %301 = vector.load %arg11[%c1_140, %c0_141, %c0_142] : memref<2x32x128xf32, #tpu.memory_space<vmem>>, vector<1x32x128xf32>
    %302 = vector.shape_cast %301 : vector<1x32x128xf32> to vector<32x128xf32>
    %cst_143 = arith.constant dense<0.000000e+00> : vector<16x128xf32>
    %303 = tpu.matmul %300, %302, %cst_143 {dimension_numbers = #tpu.dot_dimension_numbers<[1], [0], [0], [1], [0, 0, 1, 1], [], []>} : vector<16x32xf32>, vector<32x128xf32>, vector<16x128xf32> -> vector<16x128xf32>
    %c1_144 = arith.constant 1 : index
    %c0_145 = arith.constant 0 : index
    %c0_146 = arith.constant 0 : index
    %304 = vector.load %arg12[%c1_144, %c0_145, %c0_146] : memref<2x1x128xf32, #tpu.memory_space<vmem>>, vector<1x1x128xf32>
    %305 = vector.shape_cast %304 : vector<1x1x128xf32> to vector<1x128xf32>
    %306 = vector.broadcast %305 : vector<1x128xf32> to vector<16x128xf32>
    %307 = arith.addf %303, %306 : vector<16x128xf32>
    %cst_147 = arith.constant 5.000000e-01 : f32
    %308 = vector.broadcast %cst_147 : f32 to vector<16x128xf32>
    %309 = arith.mulf %308, %307 : vector<16x128xf32>
    %310 = arith.mulf %307, %307 : vector<16x128xf32>
    %311 = arith.mulf %307, %310 : vector<16x128xf32>
    %cst_148 = arith.constant 4.471500e-02 : f32
    %312 = vector.broadcast %cst_148 : f32 to vector<16x128xf32>
    %313 = arith.mulf %312, %311 : vector<16x128xf32>
    %314 = arith.addf %307, %313 : vector<16x128xf32>
    %cst_149 = arith.constant 0.797884583 : f32
    %315 = vector.broadcast %cst_149 : f32 to vector<16x128xf32>
    %316 = arith.mulf %315, %314 : vector<16x128xf32>
    %317 = math.tanh %316 : vector<16x128xf32>
    %cst_150 = arith.constant 1.000000e+00 : f32
    %318 = vector.broadcast %cst_150 : f32 to vector<16x128xf32>
    %319 = arith.addf %318, %317 : vector<16x128xf32>
    %320 = arith.mulf %309, %319 : vector<16x128xf32>
    %c1_151 = arith.constant 1 : index
    %c0_152 = arith.constant 0 : index
    %c0_153 = arith.constant 0 : index
    %321 = vector.load %arg13[%c1_151, %c0_152, %c0_153] : memref<2x128x32xf32, #tpu.memory_space<vmem>>, vector<1x128x32xf32>
    %322 = vector.shape_cast %321 : vector<1x128x32xf32> to vector<128x32xf32>
    %cst_154 = arith.constant dense<0.000000e+00> : vector<16x32xf32>
    %323 = tpu.matmul %320, %322, %cst_154 {dimension_numbers = #tpu.dot_dimension_numbers<[1], [0], [0], [1], [0, 0, 1, 1], [], []>} : vector<16x128xf32>, vector<128x32xf32>, vector<16x32xf32> -> vector<16x32xf32>
    %324 = arith.addf %274, %323 : vector<16x32xf32>
    %c1_155 = arith.constant 1 : index
    %c0_156 = arith.constant 0 : index
    %c0_157 = arith.constant 0 : index
    %325 = vector.load %arg14[%c1_155, %c0_156, %c0_157] : memref<2x1x32xf32, #tpu.memory_space<vmem>>, vector<1x1x32xf32>
    %326 = vector.shape_cast %325 : vector<1x1x32xf32> to vector<1x32xf32>
    %327 = vector.broadcast %326 : vector<1x32xf32> to vector<16x32xf32>
    %328 = arith.addf %324, %327 : vector<16x32xf32>
    %c0_158 = arith.constant 0 : index
    %c0_159 = arith.constant 0 : index
    %329 = vector.load %arg15[%c0_158, %c0_159] : memref<1x32xf32, #tpu.memory_space<vmem>>, vector<1x32xf32>
    %c0_160 = arith.constant 0 : index
    %c0_161 = arith.constant 0 : index
    %330 = vector.load %arg16[%c0_160, %c0_161] : memref<1x32xf32, #tpu.memory_space<vmem>>, vector<1x32xf32>
    %cst_162 = arith.constant dense<0.000000e+00> : vector<16xf32>
    %331 = vector.multi_reduction <add>, %328, %cst_162 [1] : vector<16x32xf32> to vector<16xf32>
    %332 = vector.shape_cast %331 : vector<16xf32> to vector<16x1xf32>
    %cst_163 = arith.constant 3.200000e+01 : f32
    %333 = vector.broadcast %cst_163 : f32 to vector<16x1xf32>
    %334 = arith.divf %332, %333 : vector<16x1xf32>
    %335 = vector.broadcast %334 : vector<16x1xf32> to vector<16x32xf32>
    %336 = arith.subf %328, %335 : vector<16x32xf32>
    %337 = arith.mulf %336, %336 : vector<16x32xf32>
    %cst_164 = arith.constant dense<0.000000e+00> : vector<16xf32>
    %338 = vector.multi_reduction <add>, %337, %cst_164 [1] : vector<16x32xf32> to vector<16xf32>
    %339 = vector.shape_cast %338 : vector<16xf32> to vector<16x1xf32>
    %cst_165 = arith.constant 3.200000e+01 : f32
    %340 = vector.broadcast %cst_165 : f32 to vector<16x1xf32>
    %341 = arith.divf %339, %340 : vector<16x1xf32>
    %342 = vector.broadcast %334 : vector<16x1xf32> to vector<16x32xf32>
    %343 = arith.subf %328, %342 : vector<16x32xf32>
    %cst_166 = arith.constant 9.99999974E-6 : f32
    %344 = vector.broadcast %cst_166 : f32 to vector<16x1xf32>
    %345 = arith.addf %341, %344 : vector<16x1xf32>
    %346 = math.rsqrt %345 : vector<16x1xf32>
    %347 = vector.broadcast %346 : vector<16x1xf32> to vector<16x32xf32>
    %348 = arith.mulf %343, %347 : vector<16x32xf32>
    %349 = vector.broadcast %329 : vector<1x32xf32> to vector<16x32xf32>
    %350 = arith.mulf %349, %348 : vector<16x32xf32>
    %351 = vector.broadcast %330 : vector<1x32xf32> to vector<16x32xf32>
    %352 = arith.addf %350, %351 : vector<16x32xf32>
    %c0_167 = arith.constant 0 : index
    %c0_168 = arith.constant 0 : index
    %353 = vector.load %arg17[%c0_167, %c0_168] : memref<32x128xf32, #tpu.memory_space<vmem>>, vector<32x128xf32>
    %cst_169 = arith.constant dense<0.000000e+00> : vector<16x128xf32>
    %354 = tpu.matmul %352, %353, %cst_169 {dimension_numbers = #tpu.dot_dimension_numbers<[1], [0], [0], [1], [0, 0, 1, 1], [], []>} : vector<16x32xf32>, vector<32x128xf32>, vector<16x128xf32> -> vector<16x128xf32>
    %c0_170 = arith.constant 0 : index
    %c0_171 = arith.constant 0 : index
    %355 = vector.load %arg18[%c0_170, %c0_171] : memref<16x128xf32, #tpu.memory_space<vmem>>, vector<16x128xf32>
    tpu.vector_store %arg18[%c0_170, %c0_171], %354 {strides = array<i32>} : memref<16x128xf32, #tpu.memory_space<vmem>>, vector<16x128xf32>,
    return
  }
}

</mosaic_0001>

<llo_original>
// kernel: tpu_custom_call.1
$region0: #{tpu_custom_call.1}
  #allocation0 [shape = 'u32[]', space=smem, size = 0x4, offset = 0x4, fixed_abs, tag = 'smem constant byte address 0x4 - core index']
  #allocation1 [shape = 'u32[144,128]{1,0:T(1,128)}', space=vmem, size = 0x12000, scoped, tag = 'internal scratch']
  %s0 = inlined_call_operand.vmem [shape: s32[16,1], index: 0, kind: input, shape index: {}]
  %s1 = inlined_call_operand.hbm [shape: f32[9,32], index: 1, kind: input, shape index: {}]
  %s2 = inlined_call_operand.hbm [shape: f32[16,32], index: 2, kind: input, shape index: {}]
  %s3 = inlined_call_operand.hbm [shape: f32[16,16], index: 3, kind: input, shape index: {}]
  %s4 = inlined_call_operand.hbm [shape: f32[2,1,32], index: 4, kind: input, shape index: {}]
  %s5 = inlined_call_operand.hbm [shape: f32[2,1,32], index: 5, kind: input, shape index: {}]
  %s6 = inlined_call_operand.hbm [shape: f32[2,32,1024], index: 6, kind: input, shape index: {}]
  %s7 = inlined_call_operand.vmem [shape: f32[8,32,32], index: 7, kind: input, shape index: {}]
  %s8 = inlined_call_operand.hbm [shape: f32[2,1,32], index: 8, kind: input, shape index: {}]
  %s9 = inlined_call_operand.hbm [shape: f32[2,1,32], index: 9, kind: input, shape index: {}]
  %s10 = inlined_call_operand.vmem [shape: f32[2,1,32], index: 10, kind: input, shape index: {}]
  %s11 = inlined_call_operand.vmem [shape: f32[2,32,128], index: 11, kind: input, shape index: {}]
  %s12 = inlined_call_operand.vmem [shape: f32[2,1,128], index: 12, kind: input, shape index: {}]
  %s13 = inlined_call_operand.vmem [shape: f32[2,128,32], index: 13, kind: input, shape index: {}]
  %s14 = inlined_call_operand.vmem [shape: f32[2,1,32], index: 14, kind: input, shape index: {}]
  %s15 = inlined_call_operand.vmem [shape: f32[1,32], index: 15, kind: input, shape index: {}]
  %s16 = inlined_call_operand.vmem [shape: f32[1,32], index: 16, kind: input, shape index: {}]
  %s17 = inlined_call_operand.vmem [shape: f32[32,128], index: 17, kind: input, shape index: {}]
  %s18 = inlined_call_operand.hbm [shape: f32[16,128], index: 18, kind: output, shape index: {}]
  %s19 = sld [smem:[#allocation0]]
  $region114: #{tpu_custom_call.1} parent=0
    _
  %s21 = ssub.s32 1, %s19
  %s22 = scalar_select 0, %s21, %s19
  $region1: #{tpu_custom_call.1} parent=0
    #allocation2 [shape = 'u8[8192]{0}', space=vmem, size = 0x2000, scoped, tag = 'input window, operand 1, single buffered']
    #allocation3 [shape = 's32[1]{0}', space=sflag, size = 0x4, scoped, tag = 'scoped memory for tpu_custom_call.1']
    #allocation4 [shape = 's32[1]{0}', space=sflag, size = 0x4, scoped, tag = 'scoped memory for tpu_custom_call.1']
    #allocation5 [shape = 'u8[8192]{0}', space=vmem, size = 0x2000, scoped, tag = 'input window, operand 2, single buffered']
    #allocation6 [shape = 's32[1]{0}', space=sflag, size = 0x4, scoped, tag = 'scoped memory for tpu_custom_call.1']
    #allocation7 [shape = 'u8[8192]{0}', space=vmem, size = 0x2000, scoped, tag = 'input window, operand 3, single buffered']
    #allocation8 [shape = 'u8[1024]{0}', space=vmem, size = 0x400, scoped, tag = 'input window, operand 4, single buffered']
    #allocation9 [shape = 's32[1]{0}', space=sflag, size = 0x4, scoped, tag = 'scoped memory for tpu_custom_call.1']
    #allocation10 [shape = 'u8[1024]{0}', space=vmem, size = 0x400, scoped, tag = 'input window, operand 5, single buffered']
    #allocation11 [shape = 'u8[262144]{0}', space=vmem, size = 0x40000, scoped, tag = 'input window, operand 6, single buffered']
    #allocation12 [shape = 's32[1]{0}', space=sflag, size = 0x4, scoped, tag = 'scoped memory for tpu_custom_call.1']
    #allocation13 [shape = 'u8[1024]{0}', space=vmem, size = 0x400, scoped, tag = 'input window, operand 8, single buffered']
    #allocation14 [shape = 'u8[1024]{0}', space=vmem, size = 0x400, scoped, tag = 'input window, operand 9, single buffered']
    #allocation15 [shape = 's32[1]{0}', space=sflag, size = 0x4, scoped, tag = 'scoped memory for tpu_custom_call.1']
    #allocation16 [shape = 'u8[8192]{0}', space=vmem, size = 0x2000, scoped, tag = 'output window, operand 0, single buffered']
    %23 = vsyncpa [#allocation3], 0
    %24 = vsyncpa [#allocation6], 0
    %25 = vsyncpa [#allocation9], 0
    %26 = vsyncpa [#allocation12], 0
    %27 = vsyncpa [#allocation15], 0
    %28 = vsyncpa [#allocation4], 0
    // Predicated region
    $region2: #{tpu_custom_call.1} parent=1 // pred_check
      _
    $region3: #{tpu_custom_call.1} parent=1 // pred_check_branch
      %30 = sbr.rel (0) target = $region5
    $region4: #{tpu_custom_call.1} parent=1 // pred_region
      _
    $region5: #{tpu_custom_call.1} parent=1 // pred_fallthru
      _
    // Predicated region
    $region6: #{tpu_custom_call.1} parent=1 // pred_check
      _
    $region7: #{tpu_custom_call.1} parent=1 // pred_check_branch
      %32 = sbr.rel (0) target = $region9
    $region8: #{tpu_custom_call.1} parent=1 // pred_region
      %s34 = ssub.s32 256, 256
      %35 = vsyncadd [#allocation3], %s34
      %s36 = sshll.u32 [#allocation2], 4
      %s37 = int_to_ptr.vmem [resolvable:$true] %s36
      %42 = dma.hbm_to_vmem [thread:$0]  %s1, 256, %s37, [#allocation3], 128, 128, 8
    $region9: #{tpu_custom_call.1} parent=1 // pred_fallthru
      _
    // Predicated region
    $region10: #{tpu_custom_call.1} parent=1 // pred_check
      _
    $region11: #{tpu_custom_call.1} parent=1 // pred_check_branch
      %44 = sbr.rel (0) target = $region13
    $region12: #{tpu_custom_call.1} parent=1 // pred_region
      %s46 = ssub.s32 256, 256
      %47 = vsyncadd [#allocation6], %s46
      %s48 = sshll.u32 [#allocation5], 4
      %s49 = int_to_ptr.vmem [resolvable:$true] %s48
      %54 = dma.hbm_to_vmem [thread:$0]  %s2, 256, %s49, [#allocation6], 128, 128, 8
    $region13: #{tpu_custom_call.1} parent=1 // pred_fallthru
      _
    // Predicated region
    $region14: #{tpu_custom_call.1} parent=1 // pred_check
      _
    $region15: #{tpu_custom_call.1} parent=1 // pred_check_branch
      %56 = sbr.rel (0) target = $region17
    $region16: #{tpu_custom_call.1} parent=1 // pred_region
      %s58 = ssub.s32 256, 256
      %59 = vsyncadd [#allocation6], %s58
      %s60 = sshll.u32 [#allocation7], 4
      %s61 = int_to_ptr.vmem [resolvable:$true] %s60
      %66 = dma.hbm_to_vmem [thread:$0]  %s3, 256, %s61, [#allocation6], 128, 128, 8
    $region17: #{tpu_custom_call.1} parent=1 // pred_fallthru
      _
    // Predicated region
    $region18: #{tpu_custom_call.1} parent=1 // pred_check
      _
    $region19: #{tpu_custom_call.1} parent=1 // pred_check_branch
      %68 = sbr.rel (0) target = $region21
    $region20: #{tpu_custom_call.1} parent=1 // pred_region
      %s70 = ssub.s32 32, 32
      %71 = vsyncadd [#allocation9], %s70
      %s72 = sshll.u32 [#allocation8], 4
      %s73 = int_to_ptr.vmem [resolvable:$true] %s72
      %78 = dma.hbm_to_vmem [thread:$0]  %s4, 32, %s73, [#allocation9], 16, 16, 1
    $region21: #{tpu_custom_call.1} parent=1 // pred_fallthru
      _
    // Predicated region
    $region22: #{tpu_custom_call.1} parent=1 // pred_check
      _
    $region23: #{tpu_custom_call.1} parent=1 // pred_check_branch
      %80 = sbr.rel (0) target = $region25
    $region24: #{tpu_custom_call.1} parent=1 // pred_region
      %s82 = ssub.s32 32, 32
      %83 = vsyncadd [#allocation9], %s82
      %s84 = sshll.u32 [#allocation10], 4
      %s85 = int_to_ptr.vmem [resolvable:$true] %s84
      %90 = dma.hbm_to_vmem [thread:$0]  %s5, 32, %s85, [#allocation9], 16, 16, 1
    $region25: #{tpu_custom_call.1} parent=1 // pred_fallthru
      _
    // Predicated region
    $region26: #{tpu_custom_call.1} parent=1 // pred_check
      _
    $region27: #{tpu_custom_call.1} parent=1 // pred_check_branch
      %92 = sbr.rel (0) target = $region29
    $region28: #{tpu_custom_call.1} parent=1 // pred_region
      %s94 = ssub.s32 8192, 8192
      %95 = vsyncadd [#allocation12], %s94
      %s96 = sshll.u32 [#allocation11], 4
      %s97 = int_to_ptr.vmem [resolvable:$true] %s96
      %102 = dma.hbm_to_vmem [thread:$0]  %s6, 8192, %s97, [#allocation12], 1024, 1024, 64
    $region29: #{tpu_custom_call.1} parent=1 // pred_fallthru
      _
    // Predicated region
    $region30: #{tpu_custom_call.1} parent=1 // pred_check
      _
    $region31: #{tpu_custom_call.1} parent=1 // pred_check_branch
      %104 = sbr.rel (0) target = $region33
    $region32: #{tpu_custom_call.1} parent=1 // pred_region
      _
    $region33: #{tpu_custom_call.1} parent=1 // pred_fallthru
      _
    // Predicated region
    $region34: #{tpu_custom_call.1} parent=1 // pred_check
      _
    $region35: #{tpu_custom_call.1} parent=1 // pred_check_branch
      %106 = sbr.rel (0) target = $region37
    $region36: #{tpu_custom_call.1} parent=1 // pred_region
      %s108 = ssub.s32 32, 32
      %109 = vsyncadd [#allocation12], %s108
      %s110 = sshll.u32 [#allocation13], 4
      %s111 = int_to_ptr.vmem [resolvable:$true] %s110
      %116 = dma.hbm_to_vmem [thread:$0]  %s8, 32, %s111, [#allocation12], 16, 16, 1
    $region37: #{tpu_custom_call.1} parent=1 // pred_fallthru
      _
    // Predicated region
    $region38: #{tpu_custom_call.1} parent=1 // pred_check
      _
    $region39: #{tpu_custom_call.1} parent=1 // pred_check_branch
      %118 = sbr.rel (0) target = $region41
    $region40: #{tpu_custom_call.1} parent=1 // pred_region
      %s120 = ssub.s32 32, 32
      %121 = vsyncadd [#allocation15], %s120
      %s122 = sshll.u32 [#allocation14], 4
      %s123 = int_to_ptr.vmem [resolvable:$true] %s122
      %128 = dma.hbm_to_vmem [thread:$0]  %s9, 32, %s123, [#allocation15], 16, 16, 1
    $region41: #{tpu_custom_call.1} parent=1 // pred_fallthru
      _
    // Predicated region
    $region42: #{tpu_custom_call.1} parent=1 // pred_check
      _
    $region43: #{tpu_custom_call.1} parent=1 // pred_check_branch
      %130 = sbr.rel (0) target = $region45
    $region44: #{tpu_custom_call.1} parent=1 // pred_region
      _
    $region45: #{tpu_custom_call.1} parent=1 // pred_fallthru
      _
    // Predicated region
    $region46: #{tpu_custom_call.1} parent=1 // pred_check
      _
    $region47: #{tpu_custom_call.1} parent=1 // pred_check_branch
      %132 = sbr.rel (0) target = $region49
    $region48: #{tpu_custom_call.1} parent=1 // pred_region
      _
    $region49: #{tpu_custom_call.1} parent=1 // pred_fallthru
      _
    // Predicated region
    $region50: #{tpu_custom_call.1} parent=1 // pred_check
      _
    $region51: #{tpu_custom_call.1} parent=1 // pred_check_branch
      %134 = sbr.rel (0) target = $region53
    $region52: #{tpu_custom_call.1} parent=1 // pred_region
      _
    $region53: #{tpu_custom_call.1} parent=1 // pred_fallthru
      _
    // Predicated region
    $region54: #{tpu_custom_call.1} parent=1 // pred_check
      _
    $region55: #{tpu_custom_call.1} parent=1 // pred_check_branch
      %136 = sbr.rel (0) target = $region57
    $region56: #{tpu_custom_call.1} parent=1 // pred_region
      _
    $region57: #{tpu_custom_call.1} parent=1 // pred_fallthru
      _
    // Predicated region
    $region58: #{tpu_custom_call.1} parent=1 // pred_check
      _
    $region59: #{tpu_custom_call.1} parent=1 // pred_check_branch
      %138 = sbr.rel (0) target = $region61
    $region60: #{tpu_custom_call.1} parent=1 // pred_region
      _
    $region61: #{tpu_custom_call.1} parent=1 // pred_fallthru
      _
    // Predicated region
    $region62: #{tpu_custom_call.1} parent=1 // pred_check
      _
    $region63: #{tpu_custom_call.1} parent=1 // pred_check_branch
      %140 = sbr.rel (0) target = $region65
    $region64: #{tpu_custom_call.1} parent=1 // pred_region
      _
    $region65: #{tpu_custom_call.1} parent=1 // pred_fallthru
      _
    // Predicated region
    $region66: #{tpu_custom_call.1} parent=1 // pred_check
      _
    $region67: #{tpu_custom_call.1} parent=1 // pred_check_branch
      %142 = sbr.rel (0) target = $region69
    $region68: #{tpu_custom_call.1} parent=1 // pred_region
      _
    $region69: #{tpu_custom_call.1} parent=1 // pred_fallthru
      _
    // Predicated region
    $region70: #{tpu_custom_call.1} parent=1 // pred_check
      _
    $region71: #{tpu_custom_call.1} parent=1 // pred_check_branch
      %144 = sbr.rel (0) target = $region73
    $region72: #{tpu_custom_call.1} parent=1 // pred_region
      _
    $region73: #{tpu_custom_call.1} parent=1 // pred_fallthru
      _
    // Predicated region
    $region74: #{tpu_custom_call.1} parent=1 // pred_check
      _
    $region75: #{tpu_custom_call.1} parent=1 // pred_check_branch
      %146 = sbr.rel (0) target = $region77
    $region76: #{tpu_custom_call.1} parent=1 // pred_region
      %147 = dma.done [#allocation3], 256
    $region77: #{tpu_custom_call.1} parent=1 // pred_fallthru
      _
    // Predicated region
    $region78: #{tpu_custom_call.1} parent=1 // pred_check
      _
    $region79: #{tpu_custom_call.1} parent=1 // pred_check_branch
      %149 = sbr.rel (0) target = $region81
    $region80: #{tpu_custom_call.1} parent=1 // pred_region
      %150 = dma.done [#allocation6], 256
    $region81: #{tpu_custom_call.1} parent=1 // pred_fallthru
      _
    // Predicated region
    $region82: #{tpu_custom_call.1} parent=1 // pred_check
      _
    $region83: #{tpu_custom_call.1} parent=1 // pred_check_branch
      %152 = sbr.rel (0) target = $region85
    $region84: #{tpu_custom_call.1} parent=1 // pred_region
      %153 = dma.done [#allocation6], 256
    $region85: #{tpu_custom_call.1} parent=1 // pred_fallthru
      _
    // Predicated region
    $region86: #{tpu_custom_call.1} parent=1 // pred_check
      _
    $region87: #{tpu_custom_call.1} parent=1 // pred_check_branch
      %155 = sbr.rel (0) target = $region89
    $region88: #{tpu_custom_call.1} parent=1 // pred_region
      %156 = dma.done [#allocation9], 32
    $region89: #{tpu_custom_call.1} parent=1 // pred_fallthru
      _
    // Predicated region
    $region90: #{tpu_custom_call.1} parent=1 // pred_check
      _
    $region91: #{tpu_custom_call.1} parent=1 // pred_check_branch
      %158 = sbr.rel (0) target = $region93
    $region92: #{tpu_custom_call.1} parent=1 // pred_region
      %159 = dma.done [#allocation9], 32
    $region93: #{tpu_custom_call.1} parent=1 // pred_fallthru
      _
    // Predicated region
    $region94: #{tpu_custom_call.1} parent=1 // pred_check
      _
    $region95: #{tpu_custom_call.1} parent=1 // pred_check_branch
      %161 = sbr.rel (0) target = $region97
    $region96: #{tpu_custom_call.1} parent=1 // pred_region
      %162 = dma.done [#allocation12], 8192
    $region97: #{tpu_custom_call.1} parent=1 // pred_fallthru
      _
    // Predicated region
    $region98: #{tpu_custom_call.1} parent=1 // pred_check
      _
    $region99: #{tpu_custom_call.1} parent=1 // pred_check_branch
      %164 = sbr.rel (0) target = $region101
    $region100: #{tpu_custom_call.1} parent=1 // pred_region
      %165 = dma.done [#allocation12], 32
    $region101: #{tpu_custom_call.1} parent=1 // pred_fallthru
      _
    // Predicated region
    $region102: #{tpu_custom_call.1} parent=1 // pred_check
      _
    $region103: #{tpu_custom_call.1} parent=1 // pred_check_branch
      %167 = sbr.rel (0) target = $region105
    $region104: #{tpu_custom_call.1} parent=1 // pred_region
      %168 = dma.done [#allocation15], 32
    $region105: #{tpu_custom_call.1} parent=1 // pred_fallthru
      _
    %v169 = vld [vmem:[%s0] sm:$0xff]
    %v170 = vld [vmem:[%s0 + $0x8] sm:$0xff]
    %v171 = vlaneseq
    %v172 = vand.u32 %v171, 127
    %173 = vset.pattern.permute.xlu0 0
    %174 = vperm.xlu0 %173, %v169
    %v175 = vpop.permute.xlu0 %174
    %176 = vset.pattern.permute.xlu0 0
    %177 = vperm.xlu0 %176, %v170
    %v178 = vpop.permute.xlu0 %177
    %vm179 = vcmp.eq.s32.totalorder %v175, %v172
    %vm180 = vcmp.eq.s32.totalorder %v178, %v172
    %v181 = vsel %vm179, 1, 0
    %v182 = vsel %vm180, 1, 0
    %v183 = vcvt.s32.f32 %v181
    %v184 = vcvt.s32.f32 %v182
    %v185 = vld [vmem:[#allocation2] sm:$0xff]
    %v186 = vld [vmem:[#allocation2 + $0x8] sm:$0x1]
    %v187 = vld [vmem:[#allocation5] sm:$0xff]
    %v188 = vld [vmem:[#allocation5 + $0x8] sm:$0xff]
    %vm189 = vcmask 72704
    %v191 = vsel %vm189, %v183, 0
    %v194 = vsel %vm189, %v184, 0
    %vm196 = vcmask 1040384
    %v198 = vsel %vm196, %v186, 0
    %200 = vmatprep.subr.mxu0 0.0
    %201 = vmatpush1.msra.mxu0 0.0
    %202 = vmatprep.subr.mxu0 0.0
    %203 = vmatpush1.msra.mxu0 0.0
    %204 = vmatprep.subr.mxu0 0.0
    %205 = vmatpush1.msra.mxu0 0.0
    %206 = vmatprep.subr.mxu0 0.0
    %207 = vmatpush1.msra.mxu0 0.0
    %208 = vmatprep.subr.mxu0 0.0
    %209 = vmatpush1.msra.mxu0 0.0
    %210 = vmatprep.subr.mxu0 0.0
    %211 = vmatpush1.msra.mxu0 0.0
    %212 = vmatprep.subr.mxu0 0.0
    %213 = vmatpush1.msra.mxu0 0.0
    %214 = vmatprep.subr.mxu0 0.0
    %215 = vmatpush1.msra.mxu0 0.0
    %216 = vmatprep.subr.mxu0 0.0
    %217 = vmatpush1.msra.mxu0 0.0
    %218 = vmatprep.subr.mxu0 0.0
    %219 = vmatpush1.msra.mxu0 0.0
    %220 = vmatprep.subr.mxu0 0.0
    %221 = vmatpush1.msra.mxu0 0.0
    %222 = vmatprep.subr.mxu0 0.0
    %223 = vmatpush1.msra.mxu0 0.0
    %224 = vmatprep.subr.mxu0 0.0
    %225 = vmatpush1.msra.mxu0 0.0
    %226 = vmatprep.subr.mxu0 0.0
    %227 = vmatpush1.msra.mxu0 0.0
    %228 = vmatprep.subr.mxu0 0.0
    %229 = vmatpush1.msra.mxu0 %v198
    %230 = vmatprep.subr.mxu0 0.0
    %231 = vmatpush1.msra.mxu0 %v185
    %232 = vmatprep.subr.mxu0 0.0
    %233 = vmatpush2.msra.mxu0 0.0
    %234 = vmatprep.subr.mxu0 0.0
    %235 = vmatpush2.msra.mxu0 0.0
    %236 = vmatprep.subr.mxu0 0.0
    %237 = vmatpush2.msra.mxu0 0.0
    %238 = vmatprep.subr.mxu0 0.0
    %239 = vmatpush2.msra.mxu0 0.0
    %240 = vmatprep.subr.mxu0 0.0
    %241 = vmatpush2.msra.mxu0 0.0
    %242 = vmatprep.subr.mxu0 0.0
    %243 = vmatpush2.msra.mxu0 0.0
    %244 = vmatprep.subr.mxu0 0.0
    %245 = vmatpush2.msra.mxu0 0.0
    %246 = vmatprep.subr.mxu0 0.0
    %247 = vmatpush2.msra.mxu0 0.0
    %248 = vmatprep.subr.mxu0 0.0
    %249 = vmatpush2.msra.mxu0 0.0
    %250 = vmatprep.subr.mxu0 0.0
    %251 = vmatpush2.msra.mxu0 0.0
    %252 = vmatprep.subr.mxu0 0.0
    %253 = vmatpush2.msra.mxu0 0.0
    %254 = vmatprep.subr.mxu0 0.0
    %255 = vmatpush2.msra.mxu0 0.0
    %256 = vmatprep.subr.mxu0 0.0
    %257 = vmatpush2.msra.mxu0 0.0
    %258 = vmatprep.subr.mxu0 0.0
    %259 = vmatpush2.msra.mxu0 0.0
    %260 = vmatprep.subr.mxu0 0.0
    %261 = vmatpush2.msra.mxu0 0.0
    %262 = vmatprep.subr.mxu0 0.0
    %263 = vmatpush2.msra.mxu0 0.0
    %264 = vmatprep.mubr.f32.mxu0 0.0
    %265 = vmatmul.mubr.f32.gmra.mxu0 %v191
    %v266 = vpop.f32.mrf.mxu0
    %v267 = vadd.f32 %v187, %v266
    %v268 = vpop.f32.mrf.mxu0
    %269 = vmatprep.mubr.f32.mxu0 0.0
    %270 = vmatmul.mubr.f32.gmra.mxu0 %v194
    %v271 = vpop.f32.mrf.mxu0
    %v272 = vadd.f32 %v188, %v271
    %v273 = vpop.f32.mrf.mxu0
    %274 = vdwg.mxu0
    %v275 = vld [vmem:[#allocation7] sm:$0xff]
    %v276 = vld [vmem:[#allocation7 + $0x8] sm:$0xff]
    %v277 = vld [vmem:[#allocation8] sm:$0x1]
    %v278 = vld [vmem:[#allocation10] sm:$0x1]
    %vm279 = vcmask 261120
    %v280 = vsel %vm279, %v267, 0.0
    %281 = vadd.xlane.f32.xlu0 %v280
    %v282 = vpop.xlane.xlu0 %281
    %v283 = vsel %vm279, %v272, 0.0
    %284 = vadd.xlane.f32.xlu0 %v283
    %v285 = vpop.xlane.xlu0 %284
    %v286 = vrcp.pop 32.0
    %v287 = vmul.f32 %v282, %v286
    %v288 = vmul.f32 %v285, %v286
    %v289 = vsub.f32 %v267, %v287
    %v290 = vsub.f32 %v272, %v288
    %v291 = vmul.f32 %v289, %v289
    %v292 = vmul.f32 %v290, %v290
    %v293 = vsel %vm279, %v291, 0.0
    %294 = vadd.xlane.f32.xlu0 %v293
    %v295 = vpop.xlane.xlu0 %294
    %v296 = vsel %vm279, %v292, 0.0
    %297 = vadd.xlane.f32.xlu0 %v296
    %v298 = vpop.xlane.xlu0 %297
    %v299 = vmul.f32 %v295, %v286
    %v300 = vmul.f32 %v298, %v286
    %v301 = vadd.f32 %v299, 1e-05
    %v302 = vadd.f32 %v300, 1e-05
    %v303 = vrsqrt.pop %v301
    %v304 = vrsqrt.pop %v302
    %v305 = vmul.f32 %v289, %v303
    %v306 = vmul.f32 %v290, %v304
    %v308 = vlaneseq
    %v309 = vshrl.u32 %v308, 7
    %v310 = vsub.s32 0, %v309
    %v311 = vrot.slane %v277, %v310
    %v313 = vmul.f32 %v311, %v305
    %v314 = vmul.f32 %v311, %v306
    %v316 = vlaneseq
    %v317 = vshrl.u32 %v316, 7
    %v318 = vsub.s32 0, %v317
    %v319 = vrot.slane %v278, %v318
    %v321 = vadd.f32 %v313, %v319
    %v322 = vadd.f32 %v314, %v319
    %v323 = vld [vmem:[#allocation11] sm:$0xff]
    %v324 = vld [vmem:[#allocation11 + $0x8] sm:$0xff]
    %v325 = vld [vmem:[#allocation11 + $0x10] sm:$0xff]
    %v326 = vld [vmem:[#allocation11 + $0x18] sm:$0xff]
    %v327 = vld [vmem:[#allocation11 + $0x20] sm:$0xff]
    %v328 = vld [vmem:[#allocation11 + $0x28] sm:$0xff]
    %v329 = vld [vmem:[#allocation11 + $0x30] sm:$0xff]
    %v330 = vld [vmem:[#allocation11 + $0x38] sm:$0xff]
    %v331 = vld [vmem:[#allocation11 + $0x40] sm:$0xff]
    %v332 = vld [vmem:[#allocation11 + $0x48] sm:$0xff]
    %v333 = vld [vmem:[#allocation11 + $0x50] sm:$0xff]
    %v334 = vld [vmem:[#allocation11 + $0x58] sm:$0xff]
    %v335 = vld [vmem:[#allocation11 + $0x60] sm:$0xff]
    %v336 = vld [vmem:[#allocation11 + $0x68] sm:$0xff]
    %v337 = vld [vmem:[#allocation11 + $0x70] sm:$0xff]
    %v338 = vld [vmem:[#allocation11 + $0x78] sm:$0xff]
    %v339 = vld [vmem:[#allocation11 + $0x80] sm:$0xff]
    %v340 = vld [vmem:[#allocation11 + $0x88] sm:$0xff]
    %v341 = vld [vmem:[#allocation11 + $0x90] sm:$0xff]
    %v342 = vld [vmem:[#allocation11 + $0x98] sm:$0xff]
    %v343 = vld [vmem:[#allocation11 + $0xa0] sm:$0xff]
    %v344 = vld [vmem:[#allocation11 + $0xa8] sm:$0xff]
    %v345 = vld [vmem:[#allocation11 + $0xb0] sm:$0xff]
    %v346 = vld [vmem:[#allocation11 + $0xb8] sm:$0xff]
    %v347 = vld [vmem:[#allocation11 + $0xc0] sm:$0xff]
    %v348 = vld [vmem:[#allocation11 + $0xc8] sm:$0xff]
    %v349 = vld [vmem:[#allocation11 + $0xd0] sm:$0xff]
    %v350 = vld [vmem:[#allocation11 + $0xd8] sm:$0xff]
    %v351 = vld [vmem:[#allocation11 + $0xe0] sm:$0xff]
    %v352 = vld [vmem:[#allocation11 + $0xe8] sm:$0xff]
    %v353 = vld [vmem:[#allocation11 + $0xf0] sm:$0xff]
    %v354 = vld [vmem:[#allocation11 + $0xf8] sm:$0xff]
    %v356 = vsel %vm279, %v321, 0
    %v359 = vsel %vm279, %v322, 0
    %361 = vmatprep.subr.mxu0 0.0
    %362 = vmatpush1.msra.mxu0 0.0
    %363 = vmatprep.subr.mxu0 0.0
    %364 = vmatpush1.msra.mxu0 0.0
    %365 = vmatprep.subr.mxu0 0.0
    %366 = vmatpush1.msra.mxu0 0.0
    %367 = vmatprep.subr.mxu0 0.0
    %368 = vmatpush1.msra.mxu0 0.0
    %369 = vmatprep.subr.mxu0 0.0
    %370 = vmatpush1.msra.mxu0 0.0
    %371 = vmatprep.subr.mxu0 0.0
    %372 = vmatpush1.msra.mxu0 0.0
    %373 = vmatprep.subr.mxu0 0.0
    %374 = vmatpush1.msra.mxu0 0.0
    %375 = vmatprep.subr.mxu0 0.0
    %376 = vmatpush1.msra.mxu0 0.0
    %377 = vmatprep.subr.mxu0 0.0
    %378 = vmatpush1.msra.mxu0 0.0
    %379 = vmatprep.subr.mxu0 0.0
    %380 = vmatpush1.msra.mxu0 0.0
    %381 = vmatprep.subr.mxu0 0.0
    %382 = vmatpush1.msra.mxu0 0.0
    %383 = vmatprep.subr.mxu0 0.0
    %384 = vmatpush1.msra.mxu0 0.0
    %385 = vmatprep.subr.mxu0 %v348
    %386 = vmatpush1.msra.mxu0 %v347
    %387 = vmatprep.subr.mxu0 %v340
    %388 = vmatpush1.msra.mxu0 %v339
    %389 = vmatprep.subr.mxu0 %v332
    %390 = vmatpush1.msra.mxu0 %v331
    %391 = vmatprep.subr.mxu0 %v324
    %392 = vmatpush1.msra.mxu0 %v323
    %393 = vmatprep.subr.mxu0 0.0
    %394 = vmatpush2.msra.mxu0 0.0
    %395 = vmatprep.subr.mxu0 0.0
    %396 = vmatpush2.msra.mxu0 0.0
    %397 = vmatprep.subr.mxu0 0.0
    %398 = vmatpush2.msra.mxu0 0.0
    %399 = vmatprep.subr.mxu0 0.0
    %400 = vmatpush2.msra.mxu0 0.0
    %401 = vmatprep.subr.mxu0 0.0
    %402 = vmatpush2.msra.mxu0 0.0
    %403 = vmatprep.subr.mxu0 0.0
    %404 = vmatpush2.msra.mxu0 0.0
    %405 = vmatprep.subr.mxu0 0.0
    %406 = vmatpush2.msra.mxu0 0.0
    %407 = vmatprep.subr.mxu0 0.0
    %408 = vmatpush2.msra.mxu0 0.0
    %409 = vmatprep.subr.mxu0 0.0
    %410 = vmatpush2.msra.mxu0 0.0
    %411 = vmatprep.subr.mxu0 0.0
    %412 = vmatpush2.msra.mxu0 0.0
    %413 = vmatprep.subr.mxu0 0.0
    %414 = vmatpush2.msra.mxu0 0.0
    %415 = vmatprep.subr.mxu0 0.0
    %416 = vmatpush2.msra.mxu0 0.0
    %417 = vmatprep.subr.mxu0 0.0
    %418 = vmatpush2.msra.mxu0 0.0
    %419 = vmatprep.subr.mxu0 0.0
    %420 = vmatpush2.msra.mxu0 0.0
    %421 = vmatprep.subr.mxu0 0.0
    %422 = vmatpush2.msra.mxu0 0.0
    %423 = vmatprep.subr.mxu0 0.0
    %424 = vmatpush2.msra.mxu0 0.0
    %425 = vmatprep.mubr.f32.mxu0 0.0
    %426 = vmatmul.mubr.f32.gmra.mxu0 %v356
    %v427 = vpop.f32.mrf.mxu0
    %v428 = vadd.f32 0.0, %v427
    %v429 = vpop.f32.mrf.mxu0
    %v430 = vadd.f32 0.0, %v429
    %431 = vmatprep.mubr.f32.mxu0 0.0
    %432 = vmatmul.mubr.f32.gmra.mxu0 %v359
    %v433 = vpop.f32.mrf.mxu0
    %v434 = vadd.f32 0.0, %v433
    %v435 = vpop.f32.mrf.mxu0
    %v436 = vadd.f32 0.0, %v435
    %437 = vdwg.mxu0
    %438 = vmatprep.subr.mxu0 0.0
    %439 = vmatpush1.msra.mxu0 0.0
    %440 = vmatprep.subr.mxu0 0.0
    %441 = vmatpush1.msra.mxu0 0.0
    %442 = vmatprep.subr.mxu0 0.0
    %443 = vmatpush1.msra.mxu0 0.0
    %444 = vmatprep.subr.mxu0 0.0
    %445 = vmatpush1.msra.mxu0 0.0
    %446 = vmatprep.subr.mxu0 0.0
    %447 = vmatpush1.msra.mxu0 0.0
    %448 = vmatprep.subr.mxu0 0.0
    %449 = vmatpush1.msra.mxu0 0.0
    %450 = vmatprep.subr.mxu0 0.0
    %451 = vmatpush1.msra.mxu0 0.0
    %452 = vmatprep.subr.mxu0 0.0
    %453 = vmatpush1.msra.mxu0 0.0
    %454 = vmatprep.subr.mxu0 0.0
    %455 = vmatpush1.msra.mxu0 0.0
    %456 = vmatprep.subr.mxu0 0.0
    %457 = vmatpush1.msra.mxu0 0.0
    %458 = vmatprep.subr.mxu0 0.0
    %459 = vmatpush1.msra.mxu0 0.0
    %460 = vmatprep.subr.mxu0 0.0
    %461 = vmatpush1.msra.mxu0 0.0
    %462 = vmatprep.subr.mxu0 %v350
    %463 = vmatpush1.msra.mxu0 %v349
    %464 = vmatprep.subr.mxu0 %v342
    %465 = vmatpush1.msra.mxu0 %v341
    %466 = vmatprep.subr.mxu0 %v334
    %467 = vmatpush1.msra.mxu0 %v333
    %468 = vmatprep.subr.mxu0 %v326
    %469 = vmatpush1.msra.mxu0 %v325
    %470 = vmatprep.subr.mxu0 0.0
    %471 = vmatpush2.msra.mxu0 0.0
    %472 = vmatprep.subr.mxu0 0.0
    %473 = vmatpush2.msra.mxu0 0.0
    %474 = vmatprep.subr.mxu0 0.0
    %475 = vmatpush2.msra.mxu0 0.0
    %476 = vmatprep.subr.mxu0 0.0
    %477 = vmatpush2.msra.mxu0 0.0
    %478 = vmatprep.subr.mxu0 0.0
    %479 = vmatpush2.msra.mxu0 0.0
    %480 = vmatprep.subr.mxu0 0.0
    %481 = vmatpush2.msra.mxu0 0.0
    %482 = vmatprep.subr.mxu0 0.0
    %483 = vmatpush2.msra.mxu0 0.0
    %484 = vmatprep.subr.mxu0 0.0
    %485 = vmatpush2.msra.mxu0 0.0
    %486 = vmatprep.subr.mxu0 0.0
    %487 = vmatpush2.msra.mxu0 0.0
    %488 = vmatprep.subr.mxu0 0.0
    %489 = vmatpush2.msra.mxu0 0.0
    %490 = vmatprep.subr.mxu0 0.0
    %491 = vmatpush2.msra.mxu0 0.0
    %492 = vmatprep.subr.mxu0 0.0
    %493 = vmatpush2.msra.mxu0 0.0
    %494 = vmatprep.subr.mxu0 0.0
    %495 = vmatpush2.msra.mxu0 0.0
    %496 = vmatprep.subr.mxu0 0.0
    %497 = vmatpush2.msra.mxu0 0.0
    %498 = vmatprep.subr.mxu0 0.0
    %499 = vmatpush2.msra.mxu0 0.0
    %500 = vmatprep.subr.mxu0 0.0
    %501 = vmatpush2.msra.mxu0 0.0
    %502 = vmatprep.mubr.f32.mxu0 0.0
    %503 = vmatmul.mubr.f32.gmra.mxu0 %v356
    %v504 = vpop.f32.mrf.mxu0
    %v505 = vadd.f32 0.0, %v504
    %v506 = vpop.f32.mrf.mxu0
    %v507 = vadd.f32 0.0, %v506
    %508 = vmatprep.mubr.f32.mxu0 0.0
    %509 = vmatmul.mubr.f32.gmra.mxu0 %v359
    %v510 = vpop.f32.mrf.mxu0
    %v511 = vadd.f32 0.0, %v510
    %v512 = vpop.f32.mrf.mxu0
    %v513 = vadd.f32 0.0, %v512
    %514 = vdwg.mxu0
    %515 = vmatprep.subr.mxu0 0.0
    %516 = vmatpush1.msra.mxu0 0.0
    %517 = vmatprep.subr.mxu0 0.0
    %518 = vmatpush1.msra.mxu0 0.0
    %519 = vmatprep.subr.mxu0 0.0
    %520 = vmatpush1.msra.mxu0 0.0
    %521 = vmatprep.subr.mxu0 0.0
    %522 = vmatpush1.msra.mxu0 0.0
    %523 = vmatprep.subr.mxu0 0.0
    %524 = vmatpush1.msra.mxu0 0.0
    %525 = vmatprep.subr.mxu0 0.0
    %526 = vmatpush1.msra.mxu0 0.0
    %527 = vmatprep.subr.mxu0 0.0
    %528 = vmatpush1.msra.mxu0 0.0
    %529 = vmatprep.subr.mxu0 0.0
    %530 = vmatpush1.msra.mxu0 0.0
    %531 = vmatprep.subr.mxu0 0.0
    %532 = vmatpush1.msra.mxu0 0.0
    %533 = vmatprep.subr.mxu0 0.0
    %534 = vmatpush1.msra.mxu0 0.0
    %535 = vmatprep.subr.mxu0 0.0
    %536 = vmatpush1.msra.mxu0 0.0
    %537 = vmatprep.subr.mxu0 0.0
    %538 = vmatpush1.msra.mxu0 0.0
    %539 = vmatprep.subr.mxu0 %v352
    %540 = vmatpush1.msra.mxu0 %v351
    %541 = vmatprep.subr.mxu0 %v344
    %542 = vmatpush1.msra.mxu0 %v343
    %543 = vmatprep.subr.mxu0 %v336
    %544 = vmatpush1.msra.mxu0 %v335
    %545 = vmatprep.subr.mxu0 %v328
    %546 = vmatpush1.msra.mxu0 %v327
    %547 = vmatprep.subr.mxu0 0.0
    %548 = vmatpush2.msra.mxu0 0.0
    %549 = vmatprep.subr.mxu0 0.0
    %550 = vmatpush2.msra.mxu0 0.0
    %551 = vmatprep.subr.mxu0 0.0
    %552 = vmatpush2.msra.mxu0 0.0
    %553 = vmatprep.subr.mxu0 0.0
    %554 = vmatpush2.msra.mxu0 0.0
    %555 = vmatprep.subr.mxu0 0.0
    %556 = vmatpush2.msra.mxu0 0.0
    %557 = vmatprep.subr.mxu0 0.0
    %558 = vmatpush2.msra.mxu0 0.0
    %559 = vmatprep.subr.mxu0 0.0
    %560 = vmatpush2.msra.mxu0 0.0
    %561 = vmatprep.subr.mxu0 0.0
    %562 = vmatpush2.msra.mxu0 0.0
    %563 = vmatprep.subr.mxu0 0.0
    %564 = vmatpush2.msra.mxu0 0.0
    %565 = vmatprep.subr.mxu0 0.0
    %566 = vmatpush2.msra.mxu0 0.0
    %567 = vmatprep.subr.mxu0 0.0
    %568 = vmatpush2.msra.mxu0 0.0
    %569 = vmatprep.subr.mxu0 0.0
    %570 = vmatpush2.msra.mxu0 0.0
    %571 = vmatprep.subr.mxu0 0.0
    %572 = vmatpush2.msra.mxu0 0.0
    %573 = vmatprep.subr.mxu0 0.0
    %574 = vmatpush2.msra.mxu0 0.0
    %575 = vmatprep.subr.mxu0 0.0
    %576 = vmatpush2.msra.mxu0 0.0
    %577 = vmatprep.subr.mxu0 0.0
    %578 = vmatpush2.msra.mxu0 0.0
    %579 = vmatprep.mubr.f32.mxu0 0.0
    %580 = vmatmul.mubr.f32.gmra.mxu0 %v356
    %v581 = vpop.f32.mrf.mxu0
    %v582 = vadd.f32 0.0, %v581
    %v583 = vpop.f32.mrf.mxu0
    %v584 = vadd.f32 0.0, %v583
    %585 = vmatprep.mubr.f32.mxu0 0.0
    %586 = vmatmul.mubr.f32.gmra.mxu0 %v359
    %v587 = vpop.f32.mrf.mxu0
    %v588 = vadd.f32 0.0, %v587
    %v589 = vpop.f32.mrf.mxu0
    %v590 = vadd.f32 0.0, %v589
    %591 = vdwg.mxu0
    %592 = vmatprep.subr.mxu0 0.0
    %593 = vmatpush1.msra.mxu0 0.0
    %594 = vmatprep.subr.mxu0 0.0
    %595 = vmatpush1.msra.mxu0 0.0
    %596 = vmatprep.subr.mxu0 0.0
    %597 = vmatpush1.msra.mxu0 0.0
    %598 = vmatprep.subr.mxu0 0.0
    %599 = vmatpush1.msra.mxu0 0.0
    %600 = vmatprep.subr.mxu0 0.0
    %601 = vmatpush1.msra.mxu0 0.0
    %602 = vmatprep.subr.mxu0 0.0
    %603 = vmatpush1.msra.mxu0 0.0
    %604 = vmatprep.subr.mxu0 0.0
    %605 = vmatpush1.msra.mxu0 0.0
    %606 = vmatprep.subr.mxu0 0.0
    %607 = vmatpush1.msra.mxu0 0.0
    %608 = vmatprep.subr.mxu0 0.0
    %609 = vmatpush1.msra.mxu0 0.0
    %610 = vmatprep.subr.mxu0 0.0
    %611 = vmatpush1.msra.mxu0 0.0
    %612 = vmatprep.subr.mxu0 0.0
    %613 = vmatpush1.msra.mxu0 0.0
    %614 = vmatprep.subr.mxu0 0.0
    %615 = vmatpush1.msra.mxu0 0.0
    %616 = vmatprep.subr.mxu0 %v354
    %617 = vmatpush1.msra.mxu0 %v353
    %618 = vmatprep.subr.mxu0 %v346
    %619 = vmatpush1.msra.mxu0 %v345
    %620 = vmatprep.subr.mxu0 %v338
    %621 = vmatpush1.msra.mxu0 %v337
    %622 = vmatprep.subr.mxu0 %v330
    %623 = vmatpush1.msra.mxu0 %v329
    %624 = vmatprep.subr.mxu0 0.0
    %625 = vmatpush2.msra.mxu0 0.0
    %626 = vmatprep.subr.mxu0 0.0
    %627 = vmatpush2.msra.mxu0 0.0
    %628 = vmatprep.subr.mxu0 0.0
    %629 = vmatpush2.msra.mxu0 0.0
    %630 = vmatprep.subr.mxu0 0.0
    %631 = vmatpush2.msra.mxu0 0.0
    %632 = vmatprep.subr.mxu0 0.0
    %633 = vmatpush2.msra.mxu0 0.0
    %634 = vmatprep.subr.mxu0 0.0
    %635 = vmatpush2.msra.mxu0 0.0
    %636 = vmatprep.subr.mxu0 0.0
    %637 = vmatpush2.msra.mxu0 0.0
    %638 = vmatprep.subr.mxu0 0.0
    %639 = vmatpush2.msra.mxu0 0.0
    %640 = vmatprep.subr.mxu0 0.0
    %641 = vmatpush2.msra.mxu0 0.0
    %642 = vmatprep.subr.mxu0 0.0
    %643 = vmatpush2.msra.mxu0 0.0
    %644 = vmatprep.subr.mxu0 0.0
    %645 = vmatpush2.msra.mxu0 0.0
    %646 = vmatprep.subr.mxu0 0.0
    %647 = vmatpush2.msra.mxu0 0.0
    %648 = vmatprep.subr.mxu0 0.0
    %649 = vmatpush2.msra.mxu0 0.0
    %650 = vmatprep.subr.mxu0 0.0
    %651 = vmatpush2.msra.mxu0 0.0
    %652 = vmatprep.subr.mxu0 0.0
    %653 = vmatpush2.msra.mxu0 0.0
    %654 = vmatprep.subr.mxu0 0.0
    %655 = vmatpush2.msra.mxu0 0.0
    %656 = vmatprep.mubr.f32.mxu0 0.0
    %657 = vmatmul.mubr.f32.gmra.mxu0 %v356
    %v658 = vpop.f32.mrf.mxu0
    %v659 = vadd.f32 0.0, %v658
    %v660 = vpop.f32.mrf.mxu0
    %v661 = vadd.f32 0.0, %v660
    %662 = vmatprep.mubr.f32.mxu0 0.0
    %663 = vmatmul.mubr.f32.gmra.mxu0 %v359
    %v664 = vpop.f32.mrf.mxu0
    %v665 = vadd.f32 0.0, %v664
    %v666 = vpop.f32.mrf.mxu0
    %v667 = vadd.f32 0.0, %v666
    %668 = vdwg.mxu0
    %669 = vmatprep.subr.mxu0 0.0
    %670 = vmatpush1.xpose.msra.mxu0 0.0
    %671 = vmatprep.subr.mxu0 0.0
    %672 = vmatpush1.xpose.msra.mxu0 0.0
    %673 = vmatprep.subr.mxu0 0.0
    %674 = vmatpush1.xpose.msra.mxu0 0.0
    %675 = vmatprep.subr.mxu0 0.0
    %676 = vmatpush1.xpose.msra.mxu0 0.0
    %677 = vmatprep.subr.mxu0 0.0
    %678 = vmatpush1.xpose.msra.mxu0 0.0
    %679 = vmatprep.subr.mxu0 0.0
    %680 = vmatpush1.xpose.msra.mxu0 0.0
    %681 = vmatprep.subr.mxu0 0.0
    %682 = vmatpush1.xpose.msra.mxu0 0.0
    %683 = vmatprep.subr.mxu0 0.0
    %684 = vmatpush1.xpose.msra.mxu0 0.0
    %685 = vmatprep.subr.mxu0 0.0
    %686 = vmatpush1.xpose.msra.mxu0 0.0
    %687 = vmatprep.subr.mxu0 0.0
    %688 = vmatpush1.xpose.msra.mxu0 0.0
    %689 = vmatprep.subr.mxu0 0.0
    %690 = vmatpush1.xpose.msra.mxu0 0.0
    %691 = vmatprep.subr.mxu0 0.0
    %692 = vmatpush1.xpose.msra.mxu0 0.0
    %693 = vmatprep.subr.mxu0 0.0
    %694 = vmatpush1.xpose.msra.mxu0 0.0
    %695 = vmatprep.subr.mxu0 0.0
    %696 = vmatpush1.xpose.msra.mxu0 0.0
    %697 = vmatprep.subr.mxu0 0.0
    %698 = vmatpush1.xpose.msra.mxu0 %v588
    %699 = vmatprep.subr.mxu0 0.0
    %700 = vmatpush1.xpose.msra.mxu0 %v582
    %701 = vmatprep.subr.mxu0 0.0
    %702 = vmatpush2.xpose.msra.mxu0 0.0
    %703 = vmatprep.subr.mxu0 0.0
    %704 = vmatpush2.xpose.msra.mxu0 0.0
    %705 = vmatprep.subr.mxu0 0.0
    %706 = vmatpush2.xpose.msra.mxu0 0.0
    %707 = vmatprep.subr.mxu0 0.0
    %708 = vmatpush2.xpose.msra.mxu0 0.0
    %709 = vmatprep.subr.mxu0 0.0
    %710 = vmatpush2.xpose.msra.mxu0 0.0
    %711 = vmatprep.subr.mxu0 0.0
    %712 = vmatpush2.xpose.msra.mxu0 0.0
    %713 = vmatprep.subr.mxu0 0.0
    %714 = vmatpush2.xpose.msra.mxu0 0.0
    %715 = vmatprep.subr.mxu0 0.0
    %716 = vmatpush2.xpose.msra.mxu0 0.0
    %717 = vmatprep.subr.mxu0 0.0
    %718 = vmatpush2.xpose.msra.mxu0 0.0
    %719 = vmatprep.subr.mxu0 0.0
    %720 = vmatpush2.xpose.msra.mxu0 0.0
    %721 = vmatprep.subr.mxu0 0.0
    %722 = vmatpush2.xpose.msra.mxu0 0.0
    %723 = vmatprep.subr.mxu0 0.0
    %724 = vmatpush2.xpose.msra.mxu0 0.0
    %725 = vmatprep.subr.mxu0 0.0
    %726 = vmatpush2.xpose.msra.mxu0 0.0
    %727 = vmatprep.subr.mxu0 0.0
    %728 = vmatpush2.xpose.msra.mxu0 0.0
    %729 = vmatprep.subr.mxu0 0.0
    %730 = vmatpush2.xpose.msra.mxu0 0.0
    %731 = vmatprep.subr.mxu0 0.0
    %732 = vmatpush2.xpose.msra.mxu0 0.0
    %733 = vmatprep.mubr.f32.mxu0 0.0
    %734 = vmatmul.mubr.f32.gmra.mxu0 %v428
    %v735 = vpop.f32.mrf.mxu0
    %v736 = vadd.f32 %v275, %v735
    %v737 = vpop.f32.mrf.mxu0
    %738 = vmatprep.mubr.f32.mxu0 0.0
    %739 = vmatmul.mubr.f32.gmra.mxu0 %v434
    %v740 = vpop.f32.mrf.mxu0
    %v741 = vadd.f32 %v276, %v740
    %v742 = vpop.f32.mrf.mxu0
    %743 = vdwg.mxu0
    %vm744 = vcmask 130048
    %v745 = vsel %vm744, %v736, -inf
    %746 = vmax.xlane.f32.xlu0 %v745
    %v747 = vpop.xlane.xlu0 %746
    %v748 = vsel %vm744, %v741, -inf
    %749 = vmax.xlane.f32.xlu0 %v748
    %v750 = vpop.xlane.xlu0 %749
    %v751 = vsub.f32 %v736, %v747
    %v752 = vsub.f32 %v741, %v750
    %v753 = vmul.f32 %v751, 1.442695
    %v754 = vpow.pop %v753
    %v755 = vmul.f32 %v752, 1.442695
    %v756 = vpow.pop %v755
    %v757 = vsel %vm744, %v754, 0.0
    %758 = vadd.xlane.f32.xlu0 %v757
    %v759 = vpop.xlane.xlu0 %758
    %v760 = vsel %vm744, %v756, 0.0
    %761 = vadd.xlane.f32.xlu0 %v760
    %v762 = vpop.xlane.xlu0 %761
    %v763 = vrcp.pop %v759
    %v764 = vmul.f32 %v754, %v763
    %v765 = vrcp.pop %v762
    %v766 = vmul.f32 %v756, %v765
    %v767 = vld [vmem:[%s7] sm:$0xff]
    %v768 = vld [vmem:[%s7 + $0x8] sm:$0xff]
    %v769 = vld [vmem:[%s7 + $0x10] sm:$0xff]
    %v770 = vld [vmem:[%s7 + $0x18] sm:$0xff]
    %771 = vmatprep.subr.mxu0 0.0
    %772 = vmatpush1.msra.mxu0 0.0
    %773 = vmatprep.subr.mxu0 0.0
    %774 = vmatpush1.msra.mxu0 0.0
    %775 = vmatprep.subr.mxu0 0.0
    %776 = vmatpush1.msra.mxu0 0.0
    %777 = vmatprep.subr.mxu0 0.0
    %778 = vmatpush1.msra.mxu0 0.0
    %779 = vmatprep.subr.mxu0 0.0
    %780 = vmatpush1.msra.mxu0 0.0
    %781 = vmatprep.subr.mxu0 0.0
    %782 = vmatpush1.msra.mxu0 0.0
    %783 = vmatprep.subr.mxu0 0.0
    %784 = vmatpush1.msra.mxu0 0.0
    %785 = vmatprep.subr.mxu0 0.0
    %786 = vmatpush1.msra.mxu0 0.0
    %787 = vmatprep.subr.mxu0 0.0
    %788 = vmatpush1.msra.mxu0 0.0
    %789 = vmatprep.subr.mxu0 0.0
    %790 = vmatpush1.msra.mxu0 0.0
    %791 = vmatprep.subr.mxu0 0.0
    %792 = vmatpush1.msra.mxu0 0.0
    %793 = vmatprep.subr.mxu0 0.0
    %794 = vmatpush1.msra.mxu0 0.0
    %795 = vmatprep.subr.mxu0 0.0
    %796 = vmatpush1.msra.mxu0 %v770
    %797 = vmatprep.subr.mxu0 0.0
    %798 = vmatpush1.msra.mxu0 %v769
    %799 = vmatprep.subr.mxu0 0.0
    %800 = vmatpush1.msra.mxu0 %v768
    %801 = vmatprep.subr.mxu0 0.0
    %802 = vmatpush1.msra.mxu0 %v767
    %803 = vmatprep.subr.mxu0 0.0
    %804 = vmatpush2.msra.mxu0 0.0
    %805 = vmatprep.subr.mxu0 0.0
    %806 = vmatpush2.msra.mxu0 0.0
    %807 = vmatprep.subr.mxu0 0.0
    %808 = vmatpush2.msra.mxu0 0.0
    %809 = vmatprep.subr.mxu0 0.0
    %810 = vmatpush2.msra.mxu0 0.0
    %811 = vmatprep.subr.mxu0 0.0
    %812 = vmatpush2.msra.mxu0 0.0
    %813 = vmatprep.subr.mxu0 0.0
    %814 = vmatpush2.msra.mxu0 0.0
    %815 = vmatprep.subr.mxu0 0.0
    %816 = vmatpush2.msra.mxu0 0.0
    %817 = vmatprep.subr.mxu0 0.0
    %818 = vmatpush2.msra.mxu0 0.0
    %819 = vmatprep.subr.mxu0 0.0
    %820 = vmatpush2.msra.mxu0 0.0
    %821 = vmatprep.subr.mxu0 0.0
    %822 = vmatpush2.msra.mxu0 0.0
    %823 = vmatprep.subr.mxu0 0.0
    %824 = vmatpush2.msra.mxu0 0.0
    %825 = vmatprep.subr.mxu0 0.0
    %826 = vmatpush2.msra.mxu0 0.0
    %827 = vmatprep.subr.mxu0 0.0
    %828 = vmatpush2.msra.mxu0 0.0
    %829 = vmatprep.subr.mxu0 0.0
    %830 = vmatpush2.msra.mxu0 0.0
    %831 = vmatprep.subr.mxu0 0.0
    %832 = vmatpush2.msra.mxu0 0.0
    %833 = vmatprep.subr.mxu0 0.0
    %834 = vmatpush2.msra.mxu0 0.0
    %835 = vmatprep.mubr.f32.mxu0 0.0
    %836 = vmatmul.mubr.f32.gmra.mxu0 %v356
    %v837 = vpop.f32.mrf.mxu0
    %v838 = vadd.f32 0.0, %v837
    %v839 = vpop.f32.mrf.mxu0
    %840 = vmatprep.mubr.f32.mxu0 0.0
    %841 = vmatmul.mubr.f32.gmra.mxu0 %v359
    %v842 = vpop.f32.mrf.mxu0
    %v843 = vadd.f32 0.0, %v842
    %v844 = vpop.f32.mrf.mxu0
    %845 = vdwg.mxu0
    %846 = vmatprep.subr.mxu0 0.0
    %847 = vmatpush1.xpose.msra.mxu0 0.0
    %848 = vmatprep.subr.mxu0 0.0
    %849 = vmatpush1.xpose.msra.mxu0 0.0
    %850 = vmatprep.subr.mxu0 0.0
    %851 = vmatpush1.xpose.msra.mxu0 0.0
    %852 = vmatprep.subr.mxu0 0.0
    %853 = vmatpush1.xpose.msra.mxu0 0.0
    %854 = vmatprep.subr.mxu0 0.0
    %855 = vmatpush1.xpose.msra.mxu0 0.0
    %856 = vmatprep.subr.mxu0 0.0
    %857 = vmatpush1.xpose.msra.mxu0 0.0
    %858 = vmatprep.subr.mxu0 0.0
    %859 = vmatpush1.xpose.msra.mxu0 0.0
    %860 = vmatprep.subr.mxu0 0.0
    %861 = vmatpush1.xpose.msra.mxu0 0.0
    %862 = vmatprep.subr.mxu0 0.0
    %863 = vmatpush1.xpose.msra.mxu0 0.0
    %864 = vmatprep.subr.mxu0 0.0
    %865 = vmatpush1.xpose.msra.mxu0 0.0
    %866 = vmatprep.subr.mxu0 0.0
    %867 = vmatpush1.xpose.msra.mxu0 0.0
    %868 = vmatprep.subr.mxu0 0.0
    %869 = vmatpush1.xpose.msra.mxu0 0.0
    %870 = vmatprep.subr.mxu0 0.0
    %871 = vmatpush1.xpose.msra.mxu0 0.0
    %872 = vmatprep.subr.mxu0 0.0
    %873 = vmatpush1.xpose.msra.mxu0 0.0
    %874 = vmatprep.subr.mxu0 0.0
    %875 = vmatpush1.xpose.msra.mxu0 %v590
    %876 = vmatprep.subr.mxu0 0.0
    %877 = vmatpush1.xpose.msra.mxu0 %v584
    %878 = vmatprep.subr.mxu0 0.0
    %879 = vmatpush2.xpose.msra.mxu0 0.0
    %880 = vmatprep.subr.mxu0 0.0
    %881 = vmatpush2.xpose.msra.mxu0 0.0
    %882 = vmatprep.subr.mxu0 0.0
    %883 = vmatpush2.xpose.msra.mxu0 0.0
    %884 = vmatprep.subr.mxu0 0.0
    %885 = vmatpush2.xpose.msra.mxu0 0.0
    %886 = vmatprep.subr.mxu0 0.0
    %887 = vmatpush2.xpose.msra.mxu0 0.0
    %888 = vmatprep.subr.mxu0 0.0
    %889 = vmatpush2.xpose.msra.mxu0 0.0
    %890 = vmatprep.subr.mxu0 0.0
    %891 = vmatpush2.xpose.msra.mxu0 0.0
    %892 = vmatprep.subr.mxu0 0.0
    %893 = vmatpush2.xpose.msra.mxu0 0.0
    %894 = vmatprep.subr.mxu0 0.0
    %895 = vmatpush2.xpose.msra.mxu0 0.0
    %896 = vmatprep.subr.mxu0 0.0
    %897 = vmatpush2.xpose.msra.mxu0 0.0
    %898 = vmatprep.subr.mxu0 0.0
    %899 = vmatpush2.xpose.msra.mxu0 0.0
    %900 = vmatprep.subr.mxu0 0.0
    %901 = vmatpush2.xpose.msra.mxu0 0.0
    %902 = vmatprep.subr.mxu0 0.0
    %903 = vmatpush2.xpose.msra.mxu0 0.0
    %904 = vmatprep.subr.mxu0 0.0
    %905 = vmatpush2.xpose.msra.mxu0 0.0
    %906 = vmatprep.subr.mxu0 0.0
    %907 = vmatpush2.xpose.msra.mxu0 0.0
    %908 = vmatprep.subr.mxu0 0.0
    %909 = vmatpush2.xpose.msra.mxu0 0.0
    %910 = vmatprep.mubr.f32.mxu0 0.0
    %911 = vmatmul.mubr.f32.gmra.mxu0 %v430
    %v912 = vpop.f32.mrf.mxu0
    %v913 = vadd.f32 %v275, %v912
    %v914 = vpop.f32.mrf.mxu0
    %915 = vmatprep.mubr.f32.mxu0 0.0
    %916 = vmatmul.mubr.f32.gmra.mxu0 %v436
    %v917 = vpop.f32.mrf.mxu0
    %v918 = vadd.f32 %v276, %v917
    %v919 = vpop.f32.mrf.mxu0
    %920 = vdwg.mxu0
    %v921 = vsel %vm744, %v913, -inf
    %922 = vmax.xlane.f32.xlu0 %v921
    %v923 = vpop.xlane.xlu0 %922
    %v924 = vsel %vm744, %v918, -inf
    %925 = vmax.xlane.f32.xlu0 %v924
    %v926 = vpop.xlane.xlu0 %925
    %v927 = vsub.f32 %v913, %v923
    %v928 = vsub.f32 %v918, %v926
    %v929 = vmul.f32 %v927, 1.442695
    %v930 = vpow.pop %v929
    %v931 = vmul.f32 %v928, 1.442695
    %v932 = vpow.pop %v931
    %v933 = vsel %vm744, %v930, 0.0
    %934 = vadd.xlane.f32.xlu0 %v933
    %v935 = vpop.xlane.xlu0 %934
    %v936 = vsel %vm744, %v932, 0.0
    %937 = vadd.xlane.f32.xlu0 %v936
    %v938 = vpop.xlane.xlu0 %937
    %v939 = vrcp.pop %v935
    %v940 = vmul.f32 %v930, %v939
    %v941 = vrcp.pop %v938
    %v942 = vmul.f32 %v932, %v941
    %s943 = scalar_lea.vmem %s7, 32
    %v944 = vld [vmem:[%s943] sm:$0xff]
    %v945 = vld [vmem:[%s943 + $0x8] sm:$0xff]
    %v946 = vld [vmem:[%s943 + $0x10] sm:$0xff]
    %v947 = vld [vmem:[%s943 + $0x18] sm:$0xff]
    %948 = vmatprep.subr.mxu0 0.0
    %949 = vmatpush1.msra.mxu0 0.0
    %950 = vmatprep.subr.mxu0 0.0
    %951 = vmatpush1.msra.mxu0 0.0
    %952 = vmatprep.subr.mxu0 0.0
    %953 = vmatpush1.msra.mxu0 0.0
    %954 = vmatprep.subr.mxu0 0.0
    %955 = vmatpush1.msra.mxu0 0.0
    %956 = vmatprep.subr.mxu0 0.0
    %957 = vmatpush1.msra.mxu0 0.0
    %958 = vmatprep.subr.mxu0 0.0
    %959 = vmatpush1.msra.mxu0 0.0
    %960 = vmatprep.subr.mxu0 0.0
    %961 = vmatpush1.msra.mxu0 0.0
    %962 = vmatprep.subr.mxu0 0.0
    %963 = vmatpush1.msra.mxu0 0.0
    %964 = vmatprep.subr.mxu0 0.0
    %965 = vmatpush1.msra.mxu0 0.0
    %966 = vmatprep.subr.mxu0 0.0
    %967 = vmatpush1.msra.mxu0 0.0
    %968 = vmatprep.subr.mxu0 0.0
    %969 = vmatpush1.msra.mxu0 0.0
    %970 = vmatprep.subr.mxu0 0.0
    %971 = vmatpush1.msra.mxu0 0.0
    %972 = vmatprep.subr.mxu0 0.0
    %973 = vmatpush1.msra.mxu0 %v947
    %974 = vmatprep.subr.mxu0 0.0
    %975 = vmatpush1.msra.mxu0 %v946
    %976 = vmatprep.subr.mxu0 0.0
    %977 = vmatpush1.msra.mxu0 %v945
    %978 = vmatprep.subr.mxu0 0.0
    %979 = vmatpush1.msra.mxu0 %v944
    %980 = vmatprep.subr.mxu0 0.0
    %981 = vmatpush2.msra.mxu0 0.0
    %982 = vmatprep.subr.mxu0 0.0
    %983 = vmatpush2.msra.mxu0 0.0
    %984 = vmatprep.subr.mxu0 0.0
    %985 = vmatpush2.msra.mxu0 0.0
    %986 = vmatprep.subr.mxu0 0.0
    %987 = vmatpush2.msra.mxu0 0.0
    %988 = vmatprep.subr.mxu0 0.0
    %989 = vmatpush2.msra.mxu0 0.0
    %990 = vmatprep.subr.mxu0 0.0
    %991 = vmatpush2.msra.mxu0 0.0
    %992 = vmatprep.subr.mxu0 0.0
    %993 = vmatpush2.msra.mxu0 0.0
    %994 = vmatprep.subr.mxu0 0.0
    %995 = vmatpush2.msra.mxu0 0.0
    %996 = vmatprep.subr.mxu0 0.0
    %997 = vmatpush2.msra.mxu0 0.0
    %998 = vmatprep.subr.mxu0 0.0
    %999 = vmatpush2.msra.mxu0 0.0
    %1000 = vmatprep.subr.mxu0 0.0
    %1001 = vmatpush2.msra.mxu0 0.0
    %1002 = vmatprep.subr.mxu0 0.0
    %1003 = vmatpush2.msra.mxu0 0.0
    %1004 = vmatprep.subr.mxu0 0.0
    %1005 = vmatpush2.msra.mxu0 0.0
    %1006 = vmatprep.subr.mxu0 0.0
    %1007 = vmatpush2.msra.mxu0 0.0
    %1008 = vmatprep.subr.mxu0 0.0
    %1009 = vmatpush2.msra.mxu0 0.0
    %1010 = vmatprep.subr.mxu0 0.0
    %1011 = vmatpush2.msra.mxu0 0.0
    %1012 = vmatprep.mubr.f32.mxu0 0.0
    %1013 = vmatmul.mubr.f32.gmra.mxu0 %v356
    %v1014 = vpop.f32.mrf.mxu0
    %v1015 = vadd.f32 0.0, %v1014
    %v1016 = vpop.f32.mrf.mxu0
    %1017 = vmatprep.mubr.f32.mxu0 0.0
    %1018 = vmatmul.mubr.f32.gmra.mxu0 %v359
    %v1019 = vpop.f32.mrf.mxu0
    %v1020 = vadd.f32 0.0, %v1019
    %v1021 = vpop.f32.mrf.mxu0
    %1022 = vdwg.mxu0
    %v1024 = vsel %vm744, %v940, 0
    %v1027 = vsel %vm744, %v942, 0
    %1029 = vmatprep.subr.mxu0 0.0
    %1030 = vmatpush1.msra.mxu0 0.0
    %1031 = vmatprep.subr.mxu0 0.0
    %1032 = vmatpush1.msra.mxu0 0.0
    %1033 = vmatprep.subr.mxu0 0.0
    %1034 = vmatpush1.msra.mxu0 0.0
    %1035 = vmatprep.subr.mxu0 0.0
    %1036 = vmatpush1.msra.mxu0 0.0
    %1037 = vmatprep.subr.mxu0 0.0
    %1038 = vmatpush1.msra.mxu0 0.0
    %1039 = vmatprep.subr.mxu0 0.0
    %1040 = vmatpush1.msra.mxu0 0.0
    %1041 = vmatprep.subr.mxu0 0.0
    %1042 = vmatpush1.msra.mxu0 0.0
    %1043 = vmatprep.subr.mxu0 0.0
    %1044 = vmatpush1.msra.mxu0 0.0
    %1045 = vmatprep.subr.mxu0 0.0
    %1046 = vmatpush1.msra.mxu0 0.0
    %1047 = vmatprep.subr.mxu0 0.0
    %1048 = vmatpush1.msra.mxu0 0.0
    %1049 = vmatprep.subr.mxu0 0.0
    %1050 = vmatpush1.msra.mxu0 0.0
    %1051 = vmatprep.subr.mxu0 0.0
    %1052 = vmatpush1.msra.mxu0 0.0
    %1053 = vmatprep.subr.mxu0 0.0
    %1054 = vmatpush1.msra.mxu0 0.0
    %1055 = vmatprep.subr.mxu0 0.0
    %1056 = vmatpush1.msra.mxu0 0.0
    %1057 = vmatprep.subr.mxu0 0.0
    %1058 = vmatpush1.msra.mxu0 %v1020
    %1059 = vmatprep.subr.mxu0 0.0
    %1060 = vmatpush1.msra.mxu0 %v1015
    %1061 = vmatprep.subr.mxu0 0.0
    %1062 = vmatpush2.msra.mxu0 0.0
    %1063 = vmatprep.subr.mxu0 0.0
    %1064 = vmatpush2.msra.mxu0 0.0
    %1065 = vmatprep.subr.mxu0 0.0
    %1066 = vmatpush2.msra.mxu0 0.0
    %1067 = vmatprep.subr.mxu0 0.0
    %1068 = vmatpush2.msra.mxu0 0.0
    %1069 = vmatprep.subr.mxu0 0.0
    %1070 = vmatpush2.msra.mxu0 0.0
    %1071 = vmatprep.subr.mxu0 0.0
    %1072 = vmatpush2.msra.mxu0 0.0
    %1073 = vmatprep.subr.mxu0 0.0
    %1074 = vmatpush2.msra.mxu0 0.0
    %1075 = vmatprep.subr.mxu0 0.0
    %1076 = vmatpush2.msra.mxu0 0.0
    %1077 = vmatprep.subr.mxu0 0.0
    %1078 = vmatpush2.msra.mxu0 0.0
    %1079 = vmatprep.subr.mxu0 0.0
    %1080 = vmatpush2.msra.mxu0 0.0
    %1081 = vmatprep.subr.mxu0 0.0
    %1082 = vmatpush2.msra.mxu0 0.0
    %1083 = vmatprep.subr.mxu0 0.0
    %1084 = vmatpush2.msra.mxu0 0.0
    %1085 = vmatprep.subr.mxu0 0.0
    %1086 = vmatpush2.msra.mxu0 0.0
    %1087 = vmatprep.subr.mxu0 0.0
    %1088 = vmatpush2.msra.mxu0 0.0
    %1089 = vmatprep.subr.mxu0 0.0
    %1090 = vmatpush2.msra.mxu0 0.0
    %1091 = vmatprep.subr.mxu0 0.0
    %1092 = vmatpush2.msra.mxu0 0.0
    %1093 = vmatprep.mubr.f32.mxu0 0.0
    %1094 = vmatmul.mubr.f32.gmra.mxu0 %v1024
    %v1095 = vpop.f32.mrf.mxu0
    %v1096 = vadd.f32 0.0, %v1095
    %v1097 = vpop.f32.mrf.mxu0
    %1098 = vmatprep.mubr.f32.mxu0 0.0
    %1099 = vmatmul.mubr.f32.gmra.mxu0 %v1027
    %v1100 = vpop.f32.mrf.mxu0
    %v1101 = vadd.f32 0.0, %v1100
    %v1102 = vpop.f32.mrf.mxu0
    %1103 = vdwg.mxu0
    %v1105 = vsel %vm744, %v764, 0
    %v1108 = vsel %vm744, %v766, 0
    %1110 = vmatprep.subr.mxu0 0.0
    %1111 = vmatpush1.msra.mxu0 0.0
    %1112 = vmatprep.subr.mxu0 0.0
    %1113 = vmatpush1.msra.mxu0 0.0
    %1114 = vmatprep.subr.mxu0 0.0
    %1115 = vmatpush1.msra.mxu0 0.0
    %1116 = vmatprep.subr.mxu0 0.0
    %1117 = vmatpush1.msra.mxu0 0.0
    %1118 = vmatprep.subr.mxu0 0.0
    %1119 = vmatpush1.msra.mxu0 0.0
    %1120 = vmatprep.subr.mxu0 0.0
    %1121 = vmatpush1.msra.mxu0 0.0
    %1122 = vmatprep.subr.mxu0 0.0
    %1123 = vmatpush1.msra.mxu0 0.0
    %1124 = vmatprep.subr.mxu0 0.0
    %1125 = vmatpush1.msra.mxu0 0.0
    %1126 = vmatprep.subr.mxu0 0.0
    %1127 = vmatpush1.msra.mxu0 0.0
    %1128 = vmatprep.subr.mxu0 0.0
    %1129 = vmatpush1.msra.mxu0 0.0
    %1130 = vmatprep.subr.mxu0 0.0
    %1131 = vmatpush1.msra.mxu0 0.0
    %1132 = vmatprep.subr.mxu0 0.0
    %1133 = vmatpush1.msra.mxu0 0.0
    %1134 = vmatprep.subr.mxu0 0.0
    %1135 = vmatpush1.msra.mxu0 0.0
    %1136 = vmatprep.subr.mxu0 0.0
    %1137 = vmatpush1.msra.mxu0 0.0
    %1138 = vmatprep.subr.mxu0 0.0
    %1139 = vmatpush1.msra.mxu0 %v843
    %1140 = vmatprep.subr.mxu0 0.0
    %1141 = vmatpush1.msra.mxu0 %v838
    %1142 = vmatprep.subr.mxu0 0.0
    %1143 = vmatpush2.msra.mxu0 0.0
    %1144 = vmatprep.subr.mxu0 0.0
    %1145 = vmatpush2.msra.mxu0 0.0
    %1146 = vmatprep.subr.mxu0 0.0
    %1147 = vmatpush2.msra.mxu0 0.0
    %1148 = vmatprep.subr.mxu0 0.0
    %1149 = vmatpush2.msra.mxu0 0.0
    %1150 = vmatprep.subr.mxu0 0.0
    %1151 = vmatpush2.msra.mxu0 0.0
    %1152 = vmatprep.subr.mxu0 0.0
    %1153 = vmatpush2.msra.mxu0 0.0
    %1154 = vmatprep.subr.mxu0 0.0
    %1155 = vmatpush2.msra.mxu0 0.0
    %1156 = vmatprep.subr.mxu0 0.0
    %1157 = vmatpush2.msra.mxu0 0.0
    %1158 = vmatprep.subr.mxu0 0.0
    %1159 = vmatpush2.msra.mxu0 0.0
    %1160 = vmatprep.subr.mxu0 0.0
    %1161 = vmatpush2.msra.mxu0 0.0
    %1162 = vmatprep.subr.mxu0 0.0
    %1163 = vmatpush2.msra.mxu0 0.0
    %1164 = vmatprep.subr.mxu0 0.0
    %1165 = vmatpush2.msra.mxu0 0.0
    %1166 = vmatprep.subr.mxu0 0.0
    %1167 = vmatpush2.msra.mxu0 0.0
    %1168 = vmatprep.subr.mxu0 0.0
    %1169 = vmatpush2.msra.mxu0 0.0
    %1170 = vmatprep.subr.mxu0 0.0
    %1171 = vmatpush2.msra.mxu0 0.0
    %1172 = vmatprep.subr.mxu0 0.0
    %1173 = vmatpush2.msra.mxu0 0.0
    %1174 = vmatprep.mubr.f32.mxu0 0.0
    %1175 = vmatmul.mubr.f32.gmra.mxu0 %v1105
    %v1176 = vpop.f32.mrf.mxu0
    %v1177 = vadd.f32 %v1096, %v1176
    %v1178 = vpop.f32.mrf.mxu0
    %1179 = vmatprep.mubr.f32.mxu0 0.0
    %1180 = vmatmul.mubr.f32.gmra.mxu0 %v1108
    %v1181 = vpop.f32.mrf.mxu0
    %v1182 = vadd.f32 %v1101, %v1181
    %v1183 = vpop.f32.mrf.mxu0
    %1184 = vdwg.mxu0
    %1185 = vmatprep.subr.mxu0 0.0
    %1186 = vmatpush1.xpose.msra.mxu0 0.0
    %1187 = vmatprep.subr.mxu0 0.0
    %1188 = vmatpush1.xpose.msra.mxu0 0.0
    %1189 = vmatprep.subr.mxu0 0.0
    %1190 = vmatpush1.xpose.msra.mxu0 0.0
    %1191 = vmatprep.subr.mxu0 0.0
    %1192 = vmatpush1.xpose.msra.mxu0 0.0
    %1193 = vmatprep.subr.mxu0 0.0
    %1194 = vmatpush1.xpose.msra.mxu0 0.0
    %1195 = vmatprep.subr.mxu0 0.0
    %1196 = vmatpush1.xpose.msra.mxu0 0.0
    %1197 = vmatprep.subr.mxu0 0.0
    %1198 = vmatpush1.xpose.msra.mxu0 0.0
    %1199 = vmatprep.subr.mxu0 0.0
    %1200 = vmatpush1.xpose.msra.mxu0 0.0
    %1201 = vmatprep.subr.mxu0 0.0
    %1202 = vmatpush1.xpose.msra.mxu0 0.0
    %1203 = vmatprep.subr.mxu0 0.0
    %1204 = vmatpush1.xpose.msra.mxu0 0.0
    %1205 = vmatprep.subr.mxu0 0.0
    %1206 = vmatpush1.xpose.msra.mxu0 0.0
    %1207 = vmatprep.subr.mxu0 0.0
    %1208 = vmatpush1.xpose.msra.mxu0 0.0
    %1209 = vmatprep.subr.mxu0 0.0
    %1210 = vmatpush1.xpose.msra.mxu0 0.0
    %1211 = vmatprep.subr.mxu0 0.0
    %1212 = vmatpush1.xpose.msra.mxu0 0.0
    %1213 = vmatprep.subr.mxu0 0.0
    %1214 = vmatpush1.xpose.msra.mxu0 %v665
    %1215 = vmatprep.subr.mxu0 0.0
    %1216 = vmatpush1.xpose.msra.mxu0 %v659
    %1217 = vmatprep.subr.mxu0 0.0
    %1218 = vmatpush2.xpose.msra.mxu0 0.0
    %1219 = vmatprep.subr.mxu0 0.0
    %1220 = vmatpush2.xpose.msra.mxu0 0.0
    %1221 = vmatprep.subr.mxu0 0.0
    %1222 = vmatpush2.xpose.msra.mxu0 0.0
    %1223 = vmatprep.subr.mxu0 0.0
    %1224 = vmatpush2.xpose.msra.mxu0 0.0
    %1225 = vmatprep.subr.mxu0 0.0
    %1226 = vmatpush2.xpose.msra.mxu0 0.0
    %1227 = vmatprep.subr.mxu0 0.0
    %1228 = vmatpush2.xpose.msra.mxu0 0.0
    %1229 = vmatprep.subr.mxu0 0.0
    %1230 = vmatpush2.xpose.msra.mxu0 0.0
    %1231 = vmatprep.subr.mxu0 0.0
    %1232 = vmatpush2.xpose.msra.mxu0 0.0
    %1233 = vmatprep.subr.mxu0 0.0
    %1234 = vmatpush2.xpose.msra.mxu0 0.0
    %1235 = vmatprep.subr.mxu0 0.0
    %1236 = vmatpush2.xpose.msra.mxu0 0.0
    %1237 = vmatprep.subr.mxu0 0.0
    %1238 = vmatpush2.xpose.msra.mxu0 0.0
    %1239 = vmatprep.subr.mxu0 0.0
    %1240 = vmatpush2.xpose.msra.mxu0 0.0
    %1241 = vmatprep.subr.mxu0 0.0
    %1242 = vmatpush2.xpose.msra.mxu0 0.0
    %1243 = vmatprep.subr.mxu0 0.0
    %1244 = vmatpush2.xpose.msra.mxu0 0.0
    %1245 = vmatprep.subr.mxu0 0.0
    %1246 = vmatpush2.xpose.msra.mxu0 0.0
    %1247 = vmatprep.subr.mxu0 0.0
    %1248 = vmatpush2.xpose.msra.mxu0 0.0
    %1249 = vmatprep.mubr.f32.mxu0 0.0
    %1250 = vmatmul.mubr.f32.gmra.mxu0 %v505
    %v1251 = vpop.f32.mrf.mxu0
    %v1252 = vadd.f32 %v275, %v1251
    %v1253 = vpop.f32.mrf.mxu0
    %1254 = vmatprep.mubr.f32.mxu0 0.0
    %1255 = vmatmul.mubr.f32.gmra.mxu0 %v511
    %v1256 = vpop.f32.mrf.mxu0
    %v1257 = vadd.f32 %v276, %v1256
    %v1258 = vpop.f32.mrf.mxu0
    %1259 = vdwg.mxu0
    %v1260 = vsel %vm744, %v1252, -inf
    %1261 = vmax.xlane.f32.xlu0 %v1260
    %v1262 = vpop.xlane.xlu0 %1261
    %v1263 = vsel %vm744, %v1257, -inf
    %1264 = vmax.xlane.f32.xlu0 %v1263
    %v1265 = vpop.xlane.xlu0 %1264
    %v1266 = vsub.f32 %v1252, %v1262
    %v1267 = vsub.f32 %v1257, %v1265
    %v1268 = vmul.f32 %v1266, 1.442695
    %v1269 = vpow.pop %v1268
    %v1270 = vmul.f32 %v1267, 1.442695
    %v1271 = vpow.pop %v1270
    %v1272 = vsel %vm744, %v1269, 0.0
    %1273 = vadd.xlane.f32.xlu0 %v1272
    %v1274 = vpop.xlane.xlu0 %1273
    %v1275 = vsel %vm744, %v1271, 0.0
    %1276 = vadd.xlane.f32.xlu0 %v1275
    %v1277 = vpop.xlane.xlu0 %1276
    %v1278 = vrcp.pop %v1274
    %v1279 = vmul.f32 %v1269, %v1278
    %v1280 = vrcp.pop %v1277
    %v1281 = vmul.f32 %v1271, %v1280
    %s1282 = scalar_lea.vmem %s7, 64
    %v1283 = vld [vmem:[%s1282] sm:$0xff]
    %v1284 = vld [vmem:[%s1282 + $0x8] sm:$0xff]
    %v1285 = vld [vmem:[%s1282 + $0x10] sm:$0xff]
    %v1286 = vld [vmem:[%s1282 + $0x18] sm:$0xff]
    %1287 = vmatprep.subr.mxu0 0.0
    %1288 = vmatpush1.msra.mxu0 0.0
    %1289 = vmatprep.subr.mxu0 0.0
    %1290 = vmatpush1.msra.mxu0 0.0
    %1291 = vmatprep.subr.mxu0 0.0
    %1292 = vmatpush1.msra.mxu0 0.0
    %1293 = vmatprep.subr.mxu0 0.0
    %1294 = vmatpush1.msra.mxu0 0.0
    %1295 = vmatprep.subr.mxu0 0.0
    %1296 = vmatpush1.msra.mxu0 0.0
    %1297 = vmatprep.subr.mxu0 0.0
    %1298 = vmatpush1.msra.mxu0 0.0
    %1299 = vmatprep.subr.mxu0 0.0
    %1300 = vmatpush1.msra.mxu0 0.0
    %1301 = vmatprep.subr.mxu0 0.0
    %1302 = vmatpush1.msra.mxu0 0.0
    %1303 = vmatprep.subr.mxu0 0.0
    %1304 = vmatpush1.msra.mxu0 0.0
    %1305 = vmatprep.subr.mxu0 0.0
    %1306 = vmatpush1.msra.mxu0 0.0
    %1307 = vmatprep.subr.mxu0 0.0
    %1308 = vmatpush1.msra.mxu0 0.0
    %1309 = vmatprep.subr.mxu0 0.0
    %1310 = vmatpush1.msra.mxu0 0.0
    %1311 = vmatprep.subr.mxu0 0.0
    %1312 = vmatpush1.msra.mxu0 %v1286
    %1313 = vmatprep.subr.mxu0 0.0
    %1314 = vmatpush1.msra.mxu0 %v1285
    %1315 = vmatprep.subr.mxu0 0.0
    %1316 = vmatpush1.msra.mxu0 %v1284
    %1317 = vmatprep.subr.mxu0 0.0
    %1318 = vmatpush1.msra.mxu0 %v1283
    %1319 = vmatprep.subr.mxu0 0.0
    %1320 = vmatpush2.msra.mxu0 0.0
    %1321 = vmatprep.subr.mxu0 0.0
    %1322 = vmatpush2.msra.mxu0 0.0
    %1323 = vmatprep.subr.mxu0 0.0
    %1324 = vmatpush2.msra.mxu0 0.0
    %1325 = vmatprep.subr.mxu0 0.0
    %1326 = vmatpush2.msra.mxu0 0.0
    %1327 = vmatprep.subr.mxu0 0.0
    %1328 = vmatpush2.msra.mxu0 0.0
    %1329 = vmatprep.subr.mxu0 0.0
    %1330 = vmatpush2.msra.mxu0 0.0
    %1331 = vmatprep.subr.mxu0 0.0
    %1332 = vmatpush2.msra.mxu0 0.0
    %1333 = vmatprep.subr.mxu0 0.0
    %1334 = vmatpush2.msra.mxu0 0.0
    %1335 = vmatprep.subr.mxu0 0.0
    %1336 = vmatpush2.msra.mxu0 0.0
    %1337 = vmatprep.subr.mxu0 0.0
    %1338 = vmatpush2.msra.mxu0 0.0
    %1339 = vmatprep.subr.mxu0 0.0
    %1340 = vmatpush2.msra.mxu0 0.0
    %1341 = vmatprep.subr.mxu0 0.0
    %1342 = vmatpush2.msra.mxu0 0.0
    %1343 = vmatprep.subr.mxu0 0.0
    %1344 = vmatpush2.msra.mxu0 0.0
    %1345 = vmatprep.subr.mxu0 0.0
    %1346 = vmatpush2.msra.mxu0 0.0
    %1347 = vmatprep.subr.mxu0 0.0
    %1348 = vmatpush2.msra.mxu0 0.0
    %1349 = vmatprep.subr.mxu0 0.0
    %1350 = vmatpush2.msra.mxu0 0.0
    %1351 = vmatprep.mubr.f32.mxu0 0.0
    %1352 = vmatmul.mubr.f32.gmra.mxu0 %v356
    %v1353 = vpop.f32.mrf.mxu0
    %v1354 = vadd.f32 0.0, %v1353
    %v1355 = vpop.f32.mrf.mxu0
    %1356 = vmatprep.mubr.f32.mxu0 0.0
    %1357 = vmatmul.mubr.f32.gmra.mxu0 %v359
    %v1358 = vpop.f32.mrf.mxu0
    %v1359 = vadd.f32 0.0, %v1358
    %v1360 = vpop.f32.mrf.mxu0
    %1361 = vdwg.mxu0
    %v1363 = vsel %vm744, %v1279, 0
    %v1366 = vsel %vm744, %v1281, 0
    %1368 = vmatprep.subr.mxu0 0.0
    %1369 = vmatpush1.msra.mxu0 0.0
    %1370 = vmatprep.subr.mxu0 0.0
    %1371 = vmatpush1.msra.mxu0 0.0
    %1372 = vmatprep.subr.mxu0 0.0
    %1373 = vmatpush1.msra.mxu0 0.0
    %1374 = vmatprep.subr.mxu0 0.0
    %1375 = vmatpush1.msra.mxu0 0.0
    %1376 = vmatprep.subr.mxu0 0.0
    %1377 = vmatpush1.msra.mxu0 0.0
    %1378 = vmatprep.subr.mxu0 0.0
    %1379 = vmatpush1.msra.mxu0 0.0
    %1380 = vmatprep.subr.mxu0 0.0
    %1381 = vmatpush1.msra.mxu0 0.0
    %1382 = vmatprep.subr.mxu0 0.0
    %1383 = vmatpush1.msra.mxu0 0.0
    %1384 = vmatprep.subr.mxu0 0.0
    %1385 = vmatpush1.msra.mxu0 0.0
    %1386 = vmatprep.subr.mxu0 0.0
    %1387 = vmatpush1.msra.mxu0 0.0
    %1388 = vmatprep.subr.mxu0 0.0
    %1389 = vmatpush1.msra.mxu0 0.0
    %1390 = vmatprep.subr.mxu0 0.0
    %1391 = vmatpush1.msra.mxu0 0.0
    %1392 = vmatprep.subr.mxu0 0.0
    %1393 = vmatpush1.msra.mxu0 0.0
    %1394 = vmatprep.subr.mxu0 0.0
    %1395 = vmatpush1.msra.mxu0 0.0
    %1396 = vmatprep.subr.mxu0 0.0
    %1397 = vmatpush1.msra.mxu0 %v1359
    %1398 = vmatprep.subr.mxu0 0.0
    %1399 = vmatpush1.msra.mxu0 %v1354
    %1400 = vmatprep.subr.mxu0 0.0
    %1401 = vmatpush2.msra.mxu0 0.0
    %1402 = vmatprep.subr.mxu0 0.0
    %1403 = vmatpush2.msra.mxu0 0.0
    %1404 = vmatprep.subr.mxu0 0.0
    %1405 = vmatpush2.msra.mxu0 0.0
    %1406 = vmatprep.subr.mxu0 0.0
    %1407 = vmatpush2.msra.mxu0 0.0
    %1408 = vmatprep.subr.mxu0 0.0
    %1409 = vmatpush2.msra.mxu0 0.0
    %1410 = vmatprep.subr.mxu0 0.0
    %1411 = vmatpush2.msra.mxu0 0.0
    %1412 = vmatprep.subr.mxu0 0.0
    %1413 = vmatpush2.msra.mxu0 0.0
    %1414 = vmatprep.subr.mxu0 0.0
    %1415 = vmatpush2.msra.mxu0 0.0
    %1416 = vmatprep.subr.mxu0 0.0
    %1417 = vmatpush2.msra.mxu0 0.0
    %1418 = vmatprep.subr.mxu0 0.0
    %1419 = vmatpush2.msra.mxu0 0.0
    %1420 = vmatprep.subr.mxu0 0.0
    %1421 = vmatpush2.msra.mxu0 0.0
    %1422 = vmatprep.subr.mxu0 0.0
    %1423 = vmatpush2.msra.mxu0 0.0
    %1424 = vmatprep.subr.mxu0 0.0
    %1425 = vmatpush2.msra.mxu0 0.0
    %1426 = vmatprep.subr.mxu0 0.0
    %1427 = vmatpush2.msra.mxu0 0.0
    %1428 = vmatprep.subr.mxu0 0.0
    %1429 = vmatpush2.msra.mxu0 0.0
    %1430 = vmatprep.subr.mxu0 0.0
    %1431 = vmatpush2.msra.mxu0 0.0
    %1432 = vmatprep.mubr.f32.mxu0 0.0
    %1433 = vmatmul.mubr.f32.gmra.mxu0 %v1363
    %v1434 = vpop.f32.mrf.mxu0
    %v1435 = vadd.f32 0.0, %v1434
    %v1436 = vpop.f32.mrf.mxu0
    %1437 = vmatprep.mubr.f32.mxu0 0.0
    %1438 = vmatmul.mubr.f32.gmra.mxu0 %v1366
    %v1439 = vpop.f32.mrf.mxu0
    %v1440 = vadd.f32 0.0, %v1439
    %v1441 = vpop.f32.mrf.mxu0
    %1442 = vdwg.mxu0
    %v1443 = vadd.f32 %v1177, %v1435
    %v1444 = vadd.f32 %v1182, %v1440
    %1445 = vmatprep.subr.mxu0 0.0
    %1446 = vmatpush1.xpose.msra.mxu0 0.0
    %1447 = vmatprep.subr.mxu0 0.0
    %1448 = vmatpush1.xpose.msra.mxu0 0.0
    %1449 = vmatprep.subr.mxu0 0.0
    %1450 = vmatpush1.xpose.msra.mxu0 0.0
    %1451 = vmatprep.subr.mxu0 0.0
    %1452 = vmatpush1.xpose.msra.mxu0 0.0
    %1453 = vmatprep.subr.mxu0 0.0
    %1454 = vmatpush1.xpose.msra.mxu0 0.0
    %1455 = vmatprep.subr.mxu0 0.0
    %1456 = vmatpush1.xpose.msra.mxu0 0.0
    %1457 = vmatprep.subr.mxu0 0.0
    %1458 = vmatpush1.xpose.msra.mxu0 0.0
    %1459 = vmatprep.subr.mxu0 0.0
    %1460 = vmatpush1.xpose.msra.mxu0 0.0
    %1461 = vmatprep.subr.mxu0 0.0
    %1462 = vmatpush1.xpose.msra.mxu0 0.0
    %1463 = vmatprep.subr.mxu0 0.0
    %1464 = vmatpush1.xpose.msra.mxu0 0.0
    %1465 = vmatprep.subr.mxu0 0.0
    %1466 = vmatpush1.xpose.msra.mxu0 0.0
    %1467 = vmatprep.subr.mxu0 0.0
    %1468 = vmatpush1.xpose.msra.mxu0 0.0
    %1469 = vmatprep.subr.mxu0 0.0
    %1470 = vmatpush1.xpose.msra.mxu0 0.0
    %1471 = vmatprep.subr.mxu0 0.0
    %1472 = vmatpush1.xpose.msra.mxu0 0.0
    %1473 = vmatprep.subr.mxu0 0.0
    %1474 = vmatpush1.xpose.msra.mxu0 %v667
    %1475 = vmatprep.subr.mxu0 0.0
    %1476 = vmatpush1.xpose.msra.mxu0 %v661
    %1477 = vmatprep.subr.mxu0 0.0
    %1478 = vmatpush2.xpose.msra.mxu0 0.0
    %1479 = vmatprep.subr.mxu0 0.0
    %1480 = vmatpush2.xpose.msra.mxu0 0.0
    %1481 = vmatprep.subr.mxu0 0.0
    %1482 = vmatpush2.xpose.msra.mxu0 0.0
    %1483 = vmatprep.subr.mxu0 0.0
    %1484 = vmatpush2.xpose.msra.mxu0 0.0
    %1485 = vmatprep.subr.mxu0 0.0
    %1486 = vmatpush2.xpose.msra.mxu0 0.0
    %1487 = vmatprep.subr.mxu0 0.0
    %1488 = vmatpush2.xpose.msra.mxu0 0.0
    %1489 = vmatprep.subr.mxu0 0.0
    %1490 = vmatpush2.xpose.msra.mxu0 0.0
    %1491 = vmatprep.subr.mxu0 0.0
    %1492 = vmatpush2.xpose.msra.mxu0 0.0
    %1493 = vmatprep.subr.mxu0 0.0
    %1494 = vmatpush2.xpose.msra.mxu0 0.0
    %1495 = vmatprep.subr.mxu0 0.0
    %1496 = vmatpush2.xpose.msra.mxu0 0.0
    %1497 = vmatprep.subr.mxu0 0.0
    %1498 = vmatpush2.xpose.msra.mxu0 0.0
    %1499 = vmatprep.subr.mxu0 0.0
    %1500 = vmatpush2.xpose.msra.mxu0 0.0
    %1501 = vmatprep.subr.mxu0 0.0
    %1502 = vmatpush2.xpose.msra.mxu0 0.0
    %1503 = vmatprep.subr.mxu0 0.0
    %1504 = vmatpush2.xpose.msra.mxu0 0.0
    %1505 = vmatprep.subr.mxu0 0.0
    %1506 = vmatpush2.xpose.msra.mxu0 0.0
    %1507 = vmatprep.subr.mxu0 0.0
    %1508 = vmatpush2.xpose.msra.mxu0 0.0
    %1509 = vmatprep.mubr.f32.mxu0 0.0
    %1510 = vmatmul.mubr.f32.gmra.mxu0 %v507
    %v1511 = vpop.f32.mrf.mxu0
    %v1512 = vadd.f32 %v275, %v1511
    %v1513 = vpop.f32.mrf.mxu0
    %1514 = vmatprep.mubr.f32.mxu0 0.0
    %1515 = vmatmul.mubr.f32.gmra.mxu0 %v513
    %v1516 = vpop.f32.mrf.mxu0
    %v1517 = vadd.f32 %v276, %v1516
    %v1518 = vpop.f32.mrf.mxu0
    %1519 = vdwg.mxu0
    %v1520 = vsel %vm744, %v1512, -inf
    %1521 = vmax.xlane.f32.xlu0 %v1520
    %v1522 = vpop.xlane.xlu0 %1521
    %v1523 = vsel %vm744, %v1517, -inf
    %1524 = vmax.xlane.f32.xlu0 %v1523
    %v1525 = vpop.xlane.xlu0 %1524
    %v1526 = vsub.f32 %v1512, %v1522
    %v1527 = vsub.f32 %v1517, %v1525
    %v1528 = vmul.f32 %v1526, 1.442695
    %v1529 = vpow.pop %v1528
    %v1530 = vmul.f32 %v1527, 1.442695
    %v1531 = vpow.pop %v1530
    %v1532 = vsel %vm744, %v1529, 0.0
    %1533 = vadd.xlane.f32.xlu0 %v1532
    %v1534 = vpop.xlane.xlu0 %1533
    %v1535 = vsel %vm744, %v1531, 0.0
    %1536 = vadd.xlane.f32.xlu0 %v1535
    %v1537 = vpop.xlane.xlu0 %1536
    %v1538 = vrcp.pop %v1534
    %v1539 = vmul.f32 %v1529, %v1538
    %v1540 = vrcp.pop %v1537
    %v1541 = vmul.f32 %v1531, %v1540
    %s1542 = scalar_lea.vmem %s7, 96
    %v1543 = vld [vmem:[%s1542] sm:$0xff]
    %v1544 = vld [vmem:[%s1542 + $0x8] sm:$0xff]
    %v1545 = vld [vmem:[%s1542 + $0x10] sm:$0xff]
    %v1546 = vld [vmem:[%s1542 + $0x18] sm:$0xff]
    %1547 = vmatprep.subr.mxu0 0.0
    %1548 = vmatpush1.msra.mxu0 0.0
    %1549 = vmatprep.subr.mxu0 0.0
    %1550 = vmatpush1.msra.mxu0 0.0
    %1551 = vmatprep.subr.mxu0 0.0
    %1552 = vmatpush1.msra.mxu0 0.0
    %1553 = vmatprep.subr.mxu0 0.0
    %1554 = vmatpush1.msra.mxu0 0.0
    %1555 = vmatprep.subr.mxu0 0.0
    %1556 = vmatpush1.msra.mxu0 0.0
    %1557 = vmatprep.subr.mxu0 0.0
    %1558 = vmatpush1.msra.mxu0 0.0
    %1559 = vmatprep.subr.mxu0 0.0
    %1560 = vmatpush1.msra.mxu0 0.0
    %1561 = vmatprep.subr.mxu0 0.0
    %1562 = vmatpush1.msra.mxu0 0.0
    %1563 = vmatprep.subr.mxu0 0.0
    %1564 = vmatpush1.msra.mxu0 0.0
    %1565 = vmatprep.subr.mxu0 0.0
    %1566 = vmatpush1.msra.mxu0 0.0
    %1567 = vmatprep.subr.mxu0 0.0
    %1568 = vmatpush1.msra.mxu0 0.0
    %1569 = vmatprep.subr.mxu0 0.0
    %1570 = vmatpush1.msra.mxu0 0.0
    %1571 = vmatprep.subr.mxu0 0.0
    %1572 = vmatpush1.msra.mxu0 %v1546
    %1573 = vmatprep.subr.mxu0 0.0
    %1574 = vmatpush1.msra.mxu0 %v1545
    %1575 = vmatprep.subr.mxu0 0.0
    %1576 = vmatpush1.msra.mxu0 %v1544
    %1577 = vmatprep.subr.mxu0 0.0
    %1578 = vmatpush1.msra.mxu0 %v1543
    %1579 = vmatprep.subr.mxu0 0.0
    %1580 = vmatpush2.msra.mxu0 0.0
    %1581 = vmatprep.subr.mxu0 0.0
    %1582 = vmatpush2.msra.mxu0 0.0
    %1583 = vmatprep.subr.mxu0 0.0
    %1584 = vmatpush2.msra.mxu0 0.0
    %1585 = vmatprep.subr.mxu0 0.0
    %1586 = vmatpush2.msra.mxu0 0.0
    %1587 = vmatprep.subr.mxu0 0.0
    %1588 = vmatpush2.msra.mxu0 0.0
    %1589 = vmatprep.subr.mxu0 0.0
    %1590 = vmatpush2.msra.mxu0 0.0
    %1591 = vmatprep.subr.mxu0 0.0
    %1592 = vmatpush2.msra.mxu0 0.0
    %1593 = vmatprep.subr.mxu0 0.0
    %1594 = vmatpush2.msra.mxu0 0.0
    %1595 = vmatprep.subr.mxu0 0.0
    %1596 = vmatpush2.msra.mxu0 0.0
    %1597 = vmatprep.subr.mxu0 0.0
    %1598 = vmatpush2.msra.mxu0 0.0
    %1599 = vmatprep.subr.mxu0 0.0
    %1600 = vmatpush2.msra.mxu0 0.0
    %1601 = vmatprep.subr.mxu0 0.0
    %1602 = vmatpush2.msra.mxu0 0.0
    %1603 = vmatprep.subr.mxu0 0.0
    %1604 = vmatpush2.msra.mxu0 0.0
    %1605 = vmatprep.subr.mxu0 0.0
    %1606 = vmatpush2.msra.mxu0 0.0
    %1607 = vmatprep.subr.mxu0 0.0
    %1608 = vmatpush2.msra.mxu0 0.0
    %1609 = vmatprep.subr.mxu0 0.0
    %1610 = vmatpush2.msra.mxu0 0.0
    %1611 = vmatprep.mubr.f32.mxu0 0.0
    %1612 = vmatmul.mubr.f32.gmra.mxu0 %v356
    %v1613 = vpop.f32.mrf.mxu0
    %v1614 = vadd.f32 0.0, %v1613
    %v1615 = vpop.f32.mrf.mxu0
    %1616 = vmatprep.mubr.f32.mxu0 0.0
    %1617 = vmatmul.mubr.f32.gmra.mxu0 %v359
    %v1618 = vpop.f32.mrf.mxu0
    %v1619 = vadd.f32 0.0, %v1618
    %v1620 = vpop.f32.mrf.mxu0
    %1621 = vdwg.mxu0
    %v1623 = vsel %vm744, %v1539, 0
    %v1626 = vsel %vm744, %v1541, 0
    %1628 = vmatprep.subr.mxu0 0.0
    %1629 = vmatpush1.msra.mxu0 0.0
    %1630 = vmatprep.subr.mxu0 0.0
    %1631 = vmatpush1.msra.mxu0 0.0
    %1632 = vmatprep.subr.mxu0 0.0
    %1633 = vmatpush1.msra.mxu0 0.0
    %1634 = vmatprep.subr.mxu0 0.0
    %1635 = vmatpush1.msra.mxu0 0.0
    %1636 = vmatprep.subr.mxu0 0.0
    %1637 = vmatpush1.msra.mxu0 0.0
    %1638 = vmatprep.subr.mxu0 0.0
    %1639 = vmatpush1.msra.mxu0 0.0
    %1640 = vmatprep.subr.mxu0 0.0
    %1641 = vmatpush1.msra.mxu0 0.0
    %1642 = vmatprep.subr.mxu0 0.0
    %1643 = vmatpush1.msra.mxu0 0.0
    %1644 = vmatprep.subr.mxu0 0.0
    %1645 = vmatpush1.msra.mxu0 0.0
    %1646 = vmatprep.subr.mxu0 0.0
    %1647 = vmatpush1.msra.mxu0 0.0
    %1648 = vmatprep.subr.mxu0 0.0
    %1649 = vmatpush1.msra.mxu0 0.0
    %1650 = vmatprep.subr.mxu0 0.0
    %1651 = vmatpush1.msra.mxu0 0.0
    %1652 = vmatprep.subr.mxu0 0.0
    %1653 = vmatpush1.msra.mxu0 0.0
    %1654 = vmatprep.subr.mxu0 0.0
    %1655 = vmatpush1.msra.mxu0 0.0
    %1656 = vmatprep.subr.mxu0 0.0
    %1657 = vmatpush1.msra.mxu0 %v1619
    %1658 = vmatprep.subr.mxu0 0.0
    %1659 = vmatpush1.msra.mxu0 %v1614
    %1660 = vmatprep.subr.mxu0 0.0
    %1661 = vmatpush2.msra.mxu0 0.0
    %1662 = vmatprep.subr.mxu0 0.0
    %1663 = vmatpush2.msra.mxu0 0.0
    %1664 = vmatprep.subr.mxu0 0.0
    %1665 = vmatpush2.msra.mxu0 0.0
    %1666 = vmatprep.subr.mxu0 0.0
    %1667 = vmatpush2.msra.mxu0 0.0
    %1668 = vmatprep.subr.mxu0 0.0
    %1669 = vmatpush2.msra.mxu0 0.0
    %1670 = vmatprep.subr.mxu0 0.0
    %1671 = vmatpush2.msra.mxu0 0.0
    %1672 = vmatprep.subr.mxu0 0.0
    %1673 = vmatpush2.msra.mxu0 0.0
    %1674 = vmatprep.subr.mxu0 0.0
    %1675 = vmatpush2.msra.mxu0 0.0
    %1676 = vmatprep.subr.mxu0 0.0
    %1677 = vmatpush2.msra.mxu0 0.0
    %1678 = vmatprep.subr.mxu0 0.0
    %1679 = vmatpush2.msra.mxu0 0.0
    %1680 = vmatprep.subr.mxu0 0.0
    %1681 = vmatpush2.msra.mxu0 0.0
    %1682 = vmatprep.subr.mxu0 0.0
    %1683 = vmatpush2.msra.mxu0 0.0
    %1684 = vmatprep.subr.mxu0 0.0
    %1685 = vmatpush2.msra.mxu0 0.0
    %1686 = vmatprep.subr.mxu0 0.0
    %1687 = vmatpush2.msra.mxu0 0.0
    %1688 = vmatprep.subr.mxu0 0.0
    %1689 = vmatpush2.msra.mxu0 0.0
    %1690 = vmatprep.subr.mxu0 0.0
    %1691 = vmatpush2.msra.mxu0 0.0
    %1692 = vmatprep.mubr.f32.mxu0 0.0
    %1693 = vmatmul.mubr.f32.gmra.mxu0 %v1623
    %v1694 = vpop.f32.mrf.mxu0
    %v1695 = vadd.f32 0.0, %v1694
    %v1696 = vpop.f32.mrf.mxu0
    %1697 = vmatprep.mubr.f32.mxu0 0.0
    %1698 = vmatmul.mubr.f32.gmra.mxu0 %v1626
    %v1699 = vpop.f32.mrf.mxu0
    %v1700 = vadd.f32 0.0, %v1699
    %v1701 = vpop.f32.mrf.mxu0
    %1702 = vdwg.mxu0
    %v1703 = vadd.f32 %v1443, %v1695
    %v1704 = vadd.f32 %v1444, %v1700
    %v1705 = vadd.f32 %v267, %v1703
    %v1706 = vadd.f32 %v272, %v1704
    %v1707 = vld [vmem:[#allocation13] sm:$0x1]
    %v1709 = vlaneseq
    %v1710 = vshrl.u32 %v1709, 7
    %v1711 = vsub.s32 0, %v1710
    %v1712 = vrot.slane %v1707, %v1711
    %v1714 = vadd.f32 %v1705, %v1712
    %v1715 = vadd.f32 %v1706, %v1712
    %v1716 = vld [vmem:[#allocation14] sm:$0x1]
    %v1717 = vld [vmem:[%s10] sm:$0x1]
    %v1718 = vsel %vm279, %v1714, 0.0
    %1719 = vadd.xlane.f32.xlu0 %v1718
    %v1720 = vpop.xlane.xlu0 %1719
    %v1721 = vsel %vm279, %v1715, 0.0
    %1722 = vadd.xlane.f32.xlu0 %v1721
    %v1723 = vpop.xlane.xlu0 %1722
    %v1724 = vmul.f32 %v1720, %v286
    %v1725 = vmul.f32 %v1723, %v286
    %v1726 = vsub.f32 %v1714, %v1724
    %v1727 = vsub.f32 %v1715, %v1725
    %v1728 = vmul.f32 %v1726, %v1726
    %v1729 = vmul.f32 %v1727, %v1727
    %v1730 = vsel %vm279, %v1728, 0.0
    %1731 = vadd.xlane.f32.xlu0 %v1730
    %v1732 = vpop.xlane.xlu0 %1731
    %v1733 = vsel %vm279, %v1729, 0.0
    %1734 = vadd.xlane.f32.xlu0 %v1733
    %v1735 = vpop.xlane.xlu0 %1734
    %v1736 = vmul.f32 %v1732, %v286
    %v1737 = vmul.f32 %v1735, %v286
    %v1738 = vadd.f32 %v1736, 1e-05
    %v1739 = vadd.f32 %v1737, 1e-05
    %v1740 = vrsqrt.pop %v1738
    %v1741 = vrsqrt.pop %v1739
    %v1742 = vmul.f32 %v1726, %v1740
    %v1743 = vmul.f32 %v1727, %v1741
    %v1745 = vlaneseq
    %v1746 = vshrl.u32 %v1745, 7
    %v1747 = vsub.s32 0, %v1746
    %v1748 = vrot.slane %v1716, %v1747
    %v1750 = vmul.f32 %v1748, %v1742
    %v1751 = vmul.f32 %v1748, %v1743
    %v1753 = vlaneseq
    %v1754 = vshrl.u32 %v1753, 7
    %v1755 = vsub.s32 0, %v1754
    %v1756 = vrot.slane %v1717, %v1755
    %v1758 = vadd.f32 %v1750, %v1756
    %v1759 = vadd.f32 %v1751, %v1756
    %v1760 = vld [vmem:[%s11] sm:$0xff]
    %v1761 = vld [vmem:[%s11 + $0x8] sm:$0xff]
    %v1762 = vld [vmem:[%s11 + $0x10] sm:$0xff]
    %v1763 = vld [vmem:[%s11 + $0x18] sm:$0xff]
    %v1764 = vld [vmem:[%s12] sm:$0x1]
    %v1766 = vlaneseq
    %v1767 = vshrl.u32 %v1766, 7
    %v1768 = vsub.s32 0, %v1767
    %v1769 = vrot.slane %v1764, %v1768
    %v1772 = vsel %vm279, %v1758, 0
    %v1775 = vsel %vm279, %v1759, 0
    %1777 = vmatprep.subr.mxu0 0.0
    %1778 = vmatpush1.msra.mxu0 0.0
    %1779 = vmatprep.subr.mxu0 0.0
    %1780 = vmatpush1.msra.mxu0 0.0
    %1781 = vmatprep.subr.mxu0 0.0
    %1782 = vmatpush1.msra.mxu0 0.0
    %1783 = vmatprep.subr.mxu0 0.0
    %1784 = vmatpush1.msra.mxu0 0.0
    %1785 = vmatprep.subr.mxu0 0.0
    %1786 = vmatpush1.msra.mxu0 0.0
    %1787 = vmatprep.subr.mxu0 0.0
    %1788 = vmatpush1.msra.mxu0 0.0
    %1789 = vmatprep.subr.mxu0 0.0
    %1790 = vmatpush1.msra.mxu0 0.0
    %1791 = vmatprep.subr.mxu0 0.0
    %1792 = vmatpush1.msra.mxu0 0.0
    %1793 = vmatprep.subr.mxu0 0.0
    %1794 = vmatpush1.msra.mxu0 0.0
    %1795 = vmatprep.subr.mxu0 0.0
    %1796 = vmatpush1.msra.mxu0 0.0
    %1797 = vmatprep.subr.mxu0 0.0
    %1798 = vmatpush1.msra.mxu0 0.0
    %1799 = vmatprep.subr.mxu0 0.0
    %1800 = vmatpush1.msra.mxu0 0.0
    %1801 = vmatprep.subr.mxu0 0.0
    %1802 = vmatpush1.msra.mxu0 %v1763
    %1803 = vmatprep.subr.mxu0 0.0
    %1804 = vmatpush1.msra.mxu0 %v1762
    %1805 = vmatprep.subr.mxu0 0.0
    %1806 = vmatpush1.msra.mxu0 %v1761
    %1807 = vmatprep.subr.mxu0 0.0
    %1808 = vmatpush1.msra.mxu0 %v1760
    %1809 = vmatprep.subr.mxu0 0.0
    %1810 = vmatpush2.msra.mxu0 0.0
    %1811 = vmatprep.subr.mxu0 0.0
    %1812 = vmatpush2.msra.mxu0 0.0
    %1813 = vmatprep.subr.mxu0 0.0
    %1814 = vmatpush2.msra.mxu0 0.0
    %1815 = vmatprep.subr.mxu0 0.0
    %1816 = vmatpush2.msra.mxu0 0.0
    %1817 = vmatprep.subr.mxu0 0.0
    %1818 = vmatpush2.msra.mxu0 0.0
    %1819 = vmatprep.subr.mxu0 0.0
    %1820 = vmatpush2.msra.mxu0 0.0
    %1821 = vmatprep.subr.mxu0 0.0
    %1822 = vmatpush2.msra.mxu0 0.0
    %1823 = vmatprep.subr.mxu0 0.0
    %1824 = vmatpush2.msra.mxu0 0.0
    %1825 = vmatprep.subr.mxu0 0.0
    %1826 = vmatpush2.msra.mxu0 0.0
    %1827 = vmatprep.subr.mxu0 0.0
    %1828 = vmatpush2.msra.mxu0 0.0
    %1829 = vmatprep.subr.mxu0 0.0
    %1830 = vmatpush2.msra.mxu0 0.0
    %1831 = vmatprep.subr.mxu0 0.0
    %1832 = vmatpush2.msra.mxu0 0.0
    %1833 = vmatprep.subr.mxu0 0.0
    %1834 = vmatpush2.msra.mxu0 0.0
    %1835 = vmatprep.subr.mxu0 0.0
    %1836 = vmatpush2.msra.mxu0 0.0
    %1837 = vmatprep.subr.mxu0 0.0
    %1838 = vmatpush2.msra.mxu0 0.0
    %1839 = vmatprep.subr.mxu0 0.0
    %1840 = vmatpush2.msra.mxu0 0.0
    %1841 = vmatprep.mubr.f32.mxu0 0.0
    %1842 = vmatmul.mubr.f32.gmra.mxu0 %v1772
    %v1843 = vpop.f32.mrf.mxu0
    %v1844 = vadd.f32 %v1769, %v1843
    %v1845 = vpop.f32.mrf.mxu0
    %1846 = vmatprep.mubr.f32.mxu0 0.0
    %1847 = vmatmul.mubr.f32.gmra.mxu0 %v1775
    %v1848 = vpop.f32.mrf.mxu0
    %v1849 = vadd.f32 %v1769, %v1848
    %v1850 = vpop.f32.mrf.mxu0
    %1851 = vdwg.mxu0
    %v1852 = vmul.f32 %v1844, 0.5
    %v1853 = vmul.f32 %v1849, 0.5
    %v1854 = vmul.f32 %v1844, %v1844
    %v1855 = vmul.f32 %v1849, %v1849
    %v1856 = vmul.f32 %v1844, %v1854
    %v1857 = vmul.f32 %v1849, %v1855
    %v1858 = vmul.f32 %v1856, 0.044715
    %v1859 = vmul.f32 %v1857, 0.044715
    %v1860 = vadd.f32 %v1844, %v1858
    %v1861 = vadd.f32 %v1849, %v1859
    %v1862 = vmul.f32 %v1860, 0.7978846
    %v1863 = vmul.f32 %v1861, 0.7978846
    %v1864 = vtanh.pop %v1862
    %v1865 = vtanh.pop %v1863
    %v1866 = vadd.f32 %v1864, 1.0
    %v1867 = vadd.f32 %v1865, 1.0
    %v1868 = vmul.f32 %v1852, %v1866
    %v1869 = vmul.f32 %v1853, %v1867
    %v1870 = vld [vmem:[%s13] sm:$0xff]
    %v1871 = vld [vmem:[%s13 + $0x8] sm:$0xff]
    %v1872 = vld [vmem:[%s13 + $0x10] sm:$0xff]
    %v1873 = vld [vmem:[%s13 + $0x18] sm:$0xff]
    %v1874 = vld [vmem:[%s13 + $0x20] sm:$0xff]
    %v1875 = vld [vmem:[%s13 + $0x28] sm:$0xff]
    %v1876 = vld [vmem:[%s13 + $0x30] sm:$0xff]
    %v1877 = vld [vmem:[%s13 + $0x38] sm:$0xff]
    %v1878 = vld [vmem:[%s13 + $0x40] sm:$0xff]
    %v1879 = vld [vmem:[%s13 + $0x48] sm:$0xff]
    %v1880 = vld [vmem:[%s13 + $0x50] sm:$0xff]
    %v1881 = vld [vmem:[%s13 + $0x58] sm:$0xff]
    %v1882 = vld [vmem:[%s13 + $0x60] sm:$0xff]
    %v1883 = vld [vmem:[%s13 + $0x68] sm:$0xff]
    %v1884 = vld [vmem:[%s13 + $0x70] sm:$0xff]
    %v1885 = vld [vmem:[%s13 + $0x78] sm:$0xff]
    %1886 = vmatprep.subr.mxu0 0.0
    %1887 = vmatpush1.msra.mxu0 %v1885
    %1888 = vmatprep.subr.mxu0 0.0
    %1889 = vmatpush1.msra.mxu0 %v1884
    %1890 = vmatprep.subr.mxu0 0.0
    %1891 = vmatpush1.msra.mxu0 %v1883
    %1892 = vmatprep.subr.mxu0 0.0
    %1893 = vmatpush1.msra.mxu0 %v1882
    %1894 = vmatprep.subr.mxu0 0.0
    %1895 = vmatpush1.msra.mxu0 %v1881
    %1896 = vmatprep.subr.mxu0 0.0
    %1897 = vmatpush1.msra.mxu0 %v1880
    %1898 = vmatprep.subr.mxu0 0.0
    %1899 = vmatpush1.msra.mxu0 %v1879
    %1900 = vmatprep.subr.mxu0 0.0
    %1901 = vmatpush1.msra.mxu0 %v1878
    %1902 = vmatprep.subr.mxu0 0.0
    %1903 = vmatpush1.msra.mxu0 %v1877
    %1904 = vmatprep.subr.mxu0 0.0
    %1905 = vmatpush1.msra.mxu0 %v1876
    %1906 = vmatprep.subr.mxu0 0.0
    %1907 = vmatpush1.msra.mxu0 %v1875
    %1908 = vmatprep.subr.mxu0 0.0
    %1909 = vmatpush1.msra.mxu0 %v1874
    %1910 = vmatprep.subr.mxu0 0.0
    %1911 = vmatpush1.msra.mxu0 %v1873
    %1912 = vmatprep.subr.mxu0 0.0
    %1913 = vmatpush1.msra.mxu0 %v1872
    %1914 = vmatprep.subr.mxu0 0.0
    %1915 = vmatpush1.msra.mxu0 %v1871
    %1916 = vmatprep.subr.mxu0 0.0
    %1917 = vmatpush1.msra.mxu0 %v1870
    %1918 = vmatprep.subr.mxu0 0.0
    %1919 = vmatpush2.msra.mxu0 0.0
    %1920 = vmatprep.subr.mxu0 0.0
    %1921 = vmatpush2.msra.mxu0 0.0
    %1922 = vmatprep.subr.mxu0 0.0
    %1923 = vmatpush2.msra.mxu0 0.0
    %1924 = vmatprep.subr.mxu0 0.0
    %1925 = vmatpush2.msra.mxu0 0.0
    %1926 = vmatprep.subr.mxu0 0.0
    %1927 = vmatpush2.msra.mxu0 0.0
    %1928 = vmatprep.subr.mxu0 0.0
    %1929 = vmatpush2.msra.mxu0 0.0
    %1930 = vmatprep.subr.mxu0 0.0
    %1931 = vmatpush2.msra.mxu0 0.0
    %1932 = vmatprep.subr.mxu0 0.0
    %1933 = vmatpush2.msra.mxu0 0.0
    %1934 = vmatprep.subr.mxu0 0.0
    %1935 = vmatpush2.msra.mxu0 0.0
    %1936 = vmatprep.subr.mxu0 0.0
    %1937 = vmatpush2.msra.mxu0 0.0
    %1938 = vmatprep.subr.mxu0 0.0
    %1939 = vmatpush2.msra.mxu0 0.0
    %1940 = vmatprep.subr.mxu0 0.0
    %1941 = vmatpush2.msra.mxu0 0.0
    %1942 = vmatprep.subr.mxu0 0.0
    %1943 = vmatpush2.msra.mxu0 0.0
    %1944 = vmatprep.subr.mxu0 0.0
    %1945 = vmatpush2.msra.mxu0 0.0
    %1946 = vmatprep.subr.mxu0 0.0
    %1947 = vmatpush2.msra.mxu0 0.0
    %1948 = vmatprep.subr.mxu0 0.0
    %1949 = vmatpush2.msra.mxu0 0.0
    %1950 = vmatprep.mubr.f32.mxu0 0.0
    %1951 = vmatmul.mubr.f32.gmra.mxu0 %v1868
    %v1952 = vpop.f32.mrf.mxu0
    %v1953 = vadd.f32 0.0, %v1952
    %v1954 = vpop.f32.mrf.mxu0
    %1955 = vmatprep.mubr.f32.mxu0 0.0
    %1956 = vmatmul.mubr.f32.gmra.mxu0 %v1869
    %v1957 = vpop.f32.mrf.mxu0
    %v1958 = vadd.f32 0.0, %v1957
    %v1959 = vpop.f32.mrf.mxu0
    %1960 = vdwg.mxu0
    %v1961 = vadd.f32 %v1714, %v1953
    %v1962 = vadd.f32 %v1715, %v1958
    %v1963 = vld [vmem:[%s14] sm:$0x1]
    %v1965 = vlaneseq
    %v1966 = vshrl.u32 %v1965, 7
    %v1967 = vsub.s32 0, %v1966
    %v1968 = vrot.slane %v1963, %v1967
    %v1970 = vadd.f32 %v1961, %v1968
    %v1971 = vadd.f32 %v1962, %v1968
    %s1972 = scalar_lea.vmem [#allocation8], 1
    %v1973 = vld [vmem:[%s1972] sm:$0x1]
    %s1974 = scalar_lea.vmem [#allocation10], 1
    %v1975 = vld [vmem:[%s1974] sm:$0x1]
    %v1976 = vsel %vm279, %v1970, 0.0
    %1977 = vadd.xlane.f32.xlu0 %v1976
    %v1978 = vpop.xlane.xlu0 %1977
    %v1979 = vsel %vm279, %v1971, 0.0
    %1980 = vadd.xlane.f32.xlu0 %v1979
    %v1981 = vpop.xlane.xlu0 %1980
    %v1982 = vmul.f32 %v1978, %v286
    %v1983 = vmul.f32 %v1981, %v286
    %v1984 = vsub.f32 %v1970, %v1982
    %v1985 = vsub.f32 %v1971, %v1983
    %v1986 = vmul.f32 %v1984, %v1984
    %v1987 = vmul.f32 %v1985, %v1985
    %v1988 = vsel %vm279, %v1986, 0.0
    %1989 = vadd.xlane.f32.xlu0 %v1988
    %v1990 = vpop.xlane.xlu0 %1989
    %v1991 = vsel %vm279, %v1987, 0.0
    %1992 = vadd.xlane.f32.xlu0 %v1991
    %v1993 = vpop.xlane.xlu0 %1992
    %v1994 = vmul.f32 %v1990, %v286
    %v1995 = vmul.f32 %v1993, %v286
    %v1996 = vadd.f32 %v1994, 1e-05
    %v1997 = vadd.f32 %v1995, 1e-05
    %v1998 = vrsqrt.pop %v1996
    %v1999 = vrsqrt.pop %v1997
    %v2000 = vmul.f32 %v1984, %v1998
    %v2001 = vmul.f32 %v1985, %v1999
    %v2003 = vlaneseq
    %v2004 = vshrl.u32 %v2003, 7
    %v2005 = vsub.s32 0, %v2004
    %v2006 = vrot.slane %v1973, %v2005
    %v2008 = vmul.f32 %v2006, %v2000
    %v2009 = vmul.f32 %v2006, %v2001
    %v2011 = vlaneseq
    %v2012 = vshrl.u32 %v2011, 7
    %v2013 = vsub.s32 0, %v2012
    %v2014 = vrot.slane %v1975, %v2013
    %v2016 = vadd.f32 %v2008, %v2014
    %v2017 = vadd.f32 %v2009, %v2014
    %s2018 = scalar_lea.vmem [#allocation11], 256
    %v2019 = vld [vmem:[%s2018] sm:$0xff]
    %v2020 = vld [vmem:[%s2018 + $0x8] sm:$0xff]
    %v2021 = vld [vmem:[%s2018 + $0x10] sm:$0xff]
    %v2022 = vld [vmem:[%s2018 + $0x18] sm:$0xff]
    %v2023 = vld [vmem:[%s2018 + $0x20] sm:$0xff]
    %v2024 = vld [vmem:[%s2018 + $0x28] sm:$0xff]
    %v2025 = vld [vmem:[%s2018 + $0x30] sm:$0xff]
    %v2026 = vld [vmem:[%s2018 + $0x38] sm:$0xff]
    %v2027 = vld [vmem:[%s2018 + $0x40] sm:$0xff]
    %v2028 = vld [vmem:[%s2018 + $0x48] sm:$0xff]
    %v2029 = vld [vmem:[%s2018 + $0x50] sm:$0xff]
    %v2030 = vld [vmem:[%s2018 + $0x58] sm:$0xff]
    %v2031 = vld [vmem:[%s2018 + $0x60] sm:$0xff]
    %v2032 = vld [vmem:[%s2018 + $0x68] sm:$0xff]
    %v2033 = vld [vmem:[%s2018 + $0x70] sm:$0xff]
    %v2034 = vld [vmem:[%s2018 + $0x78] sm:$0xff]
    %v2035 = vld [vmem:[%s2018 + $0x80] sm:$0xff]
    %v2036 = vld [vmem:[%s2018 + $0x88] sm:$0xff]
    %v2037 = vld [vmem:[%s2018 + $0x90] sm:$0xff]
    %v2038 = vld [vmem:[%s2018 + $0x98] sm:$0xff]
    %v2039 = vld [vmem:[%s2018 + $0xa0] sm:$0xff]
    %v2040 = vld [vmem:[%s2018 + $0xa8] sm:$0xff]
    %v2041 = vld [vmem:[%s2018 + $0xb0] sm:$0xff]
    %v2042 = vld [vmem:[%s2018 + $0xb8] sm:$0xff]
    %v2043 = vld [vmem:[%s2018 + $0xc0] sm:$0xff]
    %v2044 = vld [vmem:[%s2018 + $0xc8] sm:$0xff]
    %v2045 = vld [vmem:[%s2018 + $0xd0] sm:$0xff]
    %v2046 = vld [vmem:[%s2018 + $0xd8] sm:$0xff]
    %v2047 = vld [vmem:[%s2018 + $0xe0] sm:$0xff]
    %v2048 = vld [vmem:[%s2018 + $0xe8] sm:$0xff]
    %v2049 = vld [vmem:[%s2018 + $0xf0] sm:$0xff]
    %v2050 = vld [vmem:[%s2018 + $0xf8] sm:$0xff]
    %v2052 = vsel %vm279, %v2016, 0
    %v2055 = vsel %vm279, %v2017, 0
    %2057 = vmatprep.subr.mxu0 0.0
    %2058 = vmatpush1.msra.mxu0 0.0
    %2059 = vmatprep.subr.mxu0 0.0
    %2060 = vmatpush1.msra.mxu0 0.0
    %2061 = vmatprep.subr.mxu0 0.0
    %2062 = vmatpush1.msra.mxu0 0.0
    %2063 = vmatprep.subr.mxu0 0.0
    %2064 = vmatpush1.msra.mxu0 0.0
    %2065 = vmatprep.subr.mxu0 0.0
    %2066 = vmatpush1.msra.mxu0 0.0
    %2067 = vmatprep.subr.mxu0 0.0
    %2068 = vmatpush1.msra.mxu0 0.0
    %2069 = vmatprep.subr.mxu0 0.0
    %2070 = vmatpush1.msra.mxu0 0.0
    %2071 = vmatprep.subr.mxu0 0.0
    %2072 = vmatpush1.msra.mxu0 0.0
    %2073 = vmatprep.subr.mxu0 0.0
    %2074 = vmatpush1.msra.mxu0 0.0
    %2075 = vmatprep.subr.mxu0 0.0
    %2076 = vmatpush1.msra.mxu0 0.0
    %2077 = vmatprep.subr.mxu0 0.0
    %2078 = vmatpush1.msra.mxu0 0.0
    %2079 = vmatprep.subr.mxu0 0.0
    %2080 = vmatpush1.msra.mxu0 0.0
    %2081 = vmatprep.subr.mxu0 %v2044
    %2082 = vmatpush1.msra.mxu0 %v2043
    %2083 = vmatprep.subr.mxu0 %v2036
    %2084 = vmatpush1.msra.mxu0 %v2035
    %2085 = vmatprep.subr.mxu0 %v2028
    %2086 = vmatpush1.msra.mxu0 %v2027
    %2087 = vmatprep.subr.mxu0 %v2020
    %2088 = vmatpush1.msra.mxu0 %v2019
    %2089 = vmatprep.subr.mxu0 0.0
    %2090 = vmatpush2.msra.mxu0 0.0
    %2091 = vmatprep.subr.mxu0 0.0
    %2092 = vmatpush2.msra.mxu0 0.0
    %2093 = vmatprep.subr.mxu0 0.0
    %2094 = vmatpush2.msra.mxu0 0.0
    %2095 = vmatprep.subr.mxu0 0.0
    %2096 = vmatpush2.msra.mxu0 0.0
    %2097 = vmatprep.subr.mxu0 0.0
    %2098 = vmatpush2.msra.mxu0 0.0
    %2099 = vmatprep.subr.mxu0 0.0
    %2100 = vmatpush2.msra.mxu0 0.0
    %2101 = vmatprep.subr.mxu0 0.0
    %2102 = vmatpush2.msra.mxu0 0.0
    %2103 = vmatprep.subr.mxu0 0.0
    %2104 = vmatpush2.msra.mxu0 0.0
    %2105 = vmatprep.subr.mxu0 0.0
    %2106 = vmatpush2.msra.mxu0 0.0
    %2107 = vmatprep.subr.mxu0 0.0
    %2108 = vmatpush2.msra.mxu0 0.0
    %2109 = vmatprep.subr.mxu0 0.0
    %2110 = vmatpush2.msra.mxu0 0.0
    %2111 = vmatprep.subr.mxu0 0.0
    %2112 = vmatpush2.msra.mxu0 0.0
    %2113 = vmatprep.subr.mxu0 0.0
    %2114 = vmatpush2.msra.mxu0 0.0
    %2115 = vmatprep.subr.mxu0 0.0
    %2116 = vmatpush2.msra.mxu0 0.0
    %2117 = vmatprep.subr.mxu0 0.0
    %2118 = vmatpush2.msra.mxu0 0.0
    %2119 = vmatprep.subr.mxu0 0.0
    %2120 = vmatpush2.msra.mxu0 0.0
    %2121 = vmatprep.mubr.f32.mxu0 0.0
    %2122 = vmatmul.mubr.f32.gmra.mxu0 %v2052
    %v2123 = vpop.f32.mrf.mxu0
    %v2124 = vadd.f32 0.0, %v2123
    %v2125 = vpop.f32.mrf.mxu0
    %v2126 = vadd.f32 0.0, %v2125
    %2127 = vmatprep.mubr.f32.mxu0 0.0
    %2128 = vmatmul.mubr.f32.gmra.mxu0 %v2055
    %v2129 = vpop.f32.mrf.mxu0
    %v2130 = vadd.f32 0.0, %v2129
    %v2131 = vpop.f32.mrf.mxu0
    %v2132 = vadd.f32 0.0, %v2131
    %2133 = vdwg.mxu0
    %2134 = vmatprep.subr.mxu0 0.0
    %2135 = vmatpush1.msra.mxu0 0.0
    %2136 = vmatprep.subr.mxu0 0.0
    %2137 = vmatpush1.msra.mxu0 0.0
    %2138 = vmatprep.subr.mxu0 0.0
    %2139 = vmatpush1.msra.mxu0 0.0
    %2140 = vmatprep.subr.mxu0 0.0
    %2141 = vmatpush1.msra.mxu0 0.0
    %2142 = vmatprep.subr.mxu0 0.0
    %2143 = vmatpush1.msra.mxu0 0.0
    %2144 = vmatprep.subr.mxu0 0.0
    %2145 = vmatpush1.msra.mxu0 0.0
    %2146 = vmatprep.subr.mxu0 0.0
    %2147 = vmatpush1.msra.mxu0 0.0
    %2148 = vmatprep.subr.mxu0 0.0
    %2149 = vmatpush1.msra.mxu0 0.0
    %2150 = vmatprep.subr.mxu0 0.0
    %2151 = vmatpush1.msra.mxu0 0.0
    %2152 = vmatprep.subr.mxu0 0.0
    %2153 = vmatpush1.msra.mxu0 0.0
    %2154 = vmatprep.subr.mxu0 0.0
    %2155 = vmatpush1.msra.mxu0 0.0
    %2156 = vmatprep.subr.mxu0 0.0
    %2157 = vmatpush1.msra.mxu0 0.0
    %2158 = vmatprep.subr.mxu0 %v2046
    %2159 = vmatpush1.msra.mxu0 %v2045
    %2160 = vmatprep.subr.mxu0 %v2038
    %2161 = vmatpush1.msra.mxu0 %v2037
    %2162 = vmatprep.subr.mxu0 %v2030
    %2163 = vmatpush1.msra.mxu0 %v2029
    %2164 = vmatprep.subr.mxu0 %v2022
    %2165 = vmatpush1.msra.mxu0 %v2021
    %2166 = vmatprep.subr.mxu0 0.0
    %2167 = vmatpush2.msra.mxu0 0.0
    %2168 = vmatprep.subr.mxu0 0.0
    %2169 = vmatpush2.msra.mxu0 0.0
    %2170 = vmatprep.subr.mxu0 0.0
    %2171 = vmatpush2.msra.mxu0 0.0
    %2172 = vmatprep.subr.mxu0 0.0
    %2173 = vmatpush2.msra.mxu0 0.0
    %2174 = vmatprep.subr.mxu0 0.0
    %2175 = vmatpush2.msra.mxu0 0.0
    %2176 = vmatprep.subr.mxu0 0.0
    %2177 = vmatpush2.msra.mxu0 0.0
    %2178 = vmatprep.subr.mxu0 0.0
    %2179 = vmatpush2.msra.mxu0 0.0
    %2180 = vmatprep.subr.mxu0 0.0
    %2181 = vmatpush2.msra.mxu0 0.0
    %2182 = vmatprep.subr.mxu0 0.0
    %2183 = vmatpush2.msra.mxu0 0.0
    %2184 = vmatprep.subr.mxu0 0.0
    %2185 = vmatpush2.msra.mxu0 0.0
    %2186 = vmatprep.subr.mxu0 0.0
    %2187 = vmatpush2.msra.mxu0 0.0
    %2188 = vmatprep.subr.mxu0 0.0
    %2189 = vmatpush2.msra.mxu0 0.0
    %2190 = vmatprep.subr.mxu0 0.0
    %2191 = vmatpush2.msra.mxu0 0.0
    %2192 = vmatprep.subr.mxu0 0.0
    %2193 = vmatpush2.msra.mxu0 0.0
    %2194 = vmatprep.subr.mxu0 0.0
    %2195 = vmatpush2.msra.mxu0 0.0
    %2196 = vmatprep.subr.mxu0 0.0
    %2197 = vmatpush2.msra.mxu0 0.0
    %2198 = vmatprep.mubr.f32.mxu0 0.0
    %2199 = vmatmul.mubr.f32.gmra.mxu0 %v2052
    %v2200 = vpop.f32.mrf.mxu0
    %v2201 = vadd.f32 0.0, %v2200
    %v2202 = vpop.f32.mrf.mxu0
    %v2203 = vadd.f32 0.0, %v2202
    %2204 = vmatprep.mubr.f32.mxu0 0.0
    %2205 = vmatmul.mubr.f32.gmra.mxu0 %v2055
    %v2206 = vpop.f32.mrf.mxu0
    %v2207 = vadd.f32 0.0, %v2206
    %v2208 = vpop.f32.mrf.mxu0
    %v2209 = vadd.f32 0.0, %v2208
    %2210 = vdwg.mxu0
    %2211 = vmatprep.subr.mxu0 0.0
    %2212 = vmatpush1.msra.mxu0 0.0
    %2213 = vmatprep.subr.mxu0 0.0
    %2214 = vmatpush1.msra.mxu0 0.0
    %2215 = vmatprep.subr.mxu0 0.0
    %2216 = vmatpush1.msra.mxu0 0.0
    %2217 = vmatprep.subr.mxu0 0.0
    %2218 = vmatpush1.msra.mxu0 0.0
    %2219 = vmatprep.subr.mxu0 0.0
    %2220 = vmatpush1.msra.mxu0 0.0
    %2221 = vmatprep.subr.mxu0 0.0
    %2222 = vmatpush1.msra.mxu0 0.0
    %2223 = vmatprep.subr.mxu0 0.0
    %2224 = vmatpush1.msra.mxu0 0.0
    %2225 = vmatprep.subr.mxu0 0.0
    %2226 = vmatpush1.msra.mxu0 0.0
    %2227 = vmatprep.subr.mxu0 0.0
    %2228 = vmatpush1.msra.mxu0 0.0
    %2229 = vmatprep.subr.mxu0 0.0
    %2230 = vmatpush1.msra.mxu0 0.0
    %2231 = vmatprep.subr.mxu0 0.0
    %2232 = vmatpush1.msra.mxu0 0.0
    %2233 = vmatprep.subr.mxu0 0.0
    %2234 = vmatpush1.msra.mxu0 0.0
    %2235 = vmatprep.subr.mxu0 %v2048
    %2236 = vmatpush1.msra.mxu0 %v2047
    %2237 = vmatprep.subr.mxu0 %v2040
    %2238 = vmatpush1.msra.mxu0 %v2039
    %2239 = vmatprep.subr.mxu0 %v2032
    %2240 = vmatpush1.msra.mxu0 %v2031
    %2241 = vmatprep.subr.mxu0 %v2024
    %2242 = vmatpush1.msra.mxu0 %v2023
    %2243 = vmatprep.subr.mxu0 0.0
    %2244 = vmatpush2.msra.mxu0 0.0
    %2245 = vmatprep.subr.mxu0 0.0
    %2246 = vmatpush2.msra.mxu0 0.0
    %2247 = vmatprep.subr.mxu0 0.0
    %2248 = vmatpush2.msra.mxu0 0.0
    %2249 = vmatprep.subr.mxu0 0.0
    %2250 = vmatpush2.msra.mxu0 0.0
    %2251 = vmatprep.subr.mxu0 0.0
    %2252 = vmatpush2.msra.mxu0 0.0
    %2253 = vmatprep.subr.mxu0 0.0
    %2254 = vmatpush2.msra.mxu0 0.0
    %2255 = vmatprep.subr.mxu0 0.0
    %2256 = vmatpush2.msra.mxu0 0.0
    %2257 = vmatprep.subr.mxu0 0.0
    %2258 = vmatpush2.msra.mxu0 0.0
    %2259 = vmatprep.subr.mxu0 0.0
    %2260 = vmatpush2.msra.mxu0 0.0
    %2261 = vmatprep.subr.mxu0 0.0
    %2262 = vmatpush2.msra.mxu0 0.0
    %2263 = vmatprep.subr.mxu0 0.0
    %2264 = vmatpush2.msra.mxu0 0.0
    %2265 = vmatprep.subr.mxu0 0.0
    %2266 = vmatpush2.msra.mxu0 0.0
    %2267 = vmatprep.subr.mxu0 0.0
    %2268 = vmatpush2.msra.mxu0 0.0
    %2269 = vmatprep.subr.mxu0 0.0
    %2270 = vmatpush2.msra.mxu0 0.0
    %2271 = vmatprep.subr.mxu0 0.0
    %2272 = vmatpush2.msra.mxu0 0.0
    %2273 = vmatprep.subr.mxu0 0.0
    %2274 = vmatpush2.msra.mxu0 0.0
    %2275 = vmatprep.mubr.f32.mxu0 0.0
    %2276 = vmatmul.mubr.f32.gmra.mxu0 %v2052
    %v2277 = vpop.f32.mrf.mxu0
    %v2278 = vadd.f32 0.0, %v2277
    %v2279 = vpop.f32.mrf.mxu0
    %v2280 = vadd.f32 0.0, %v2279
    %2281 = vmatprep.mubr.f32.mxu0 0.0
    %2282 = vmatmul.mubr.f32.gmra.mxu0 %v2055
    %v2283 = vpop.f32.mrf.mxu0
    %v2284 = vadd.f32 0.0, %v2283
    %v2285 = vpop.f32.mrf.mxu0
    %v2286 = vadd.f32 0.0, %v2285
    %2287 = vdwg.mxu0
    %2288 = vmatprep.subr.mxu0 0.0
    %2289 = vmatpush1.msra.mxu0 0.0
    %2290 = vmatprep.subr.mxu0 0.0
    %2291 = vmatpush1.msra.mxu0 0.0
    %2292 = vmatprep.subr.mxu0 0.0
    %2293 = vmatpush1.msra.mxu0 0.0
    %2294 = vmatprep.subr.mxu0 0.0
    %2295 = vmatpush1.msra.mxu0 0.0
    %2296 = vmatprep.subr.mxu0 0.0
    %2297 = vmatpush1.msra.mxu0 0.0
    %2298 = vmatprep.subr.mxu0 0.0
    %2299 = vmatpush1.msra.mxu0 0.0
    %2300 = vmatprep.subr.mxu0 0.0
    %2301 = vmatpush1.msra.mxu0 0.0
    %2302 = vmatprep.subr.mxu0 0.0
    %2303 = vmatpush1.msra.mxu0 0.0
    %2304 = vmatprep.subr.mxu0 0.0
    %2305 = vmatpush1.msra.mxu0 0.0
    %2306 = vmatprep.subr.mxu0 0.0
    %2307 = vmatpush1.msra.mxu0 0.0
    %2308 = vmatprep.subr.mxu0 0.0
    %2309 = vmatpush1.msra.mxu0 0.0
    %2310 = vmatprep.subr.mxu0 0.0
    %2311 = vmatpush1.msra.mxu0 0.0
    %2312 = vmatprep.subr.mxu0 %v2050
    %2313 = vmatpush1.msra.mxu0 %v2049
    %2314 = vmatprep.subr.mxu0 %v2042
    %2315 = vmatpush1.msra.mxu0 %v2041
    %2316 = vmatprep.subr.mxu0 %v2034
    %2317 = vmatpush1.msra.mxu0 %v2033
    %2318 = vmatprep.subr.mxu0 %v2026
    %2319 = vmatpush1.msra.mxu0 %v2025
    %2320 = vmatprep.subr.mxu0 0.0
    %2321 = vmatpush2.msra.mxu0 0.0
    %2322 = vmatprep.subr.mxu0 0.0
    %2323 = vmatpush2.msra.mxu0 0.0
    %2324 = vmatprep.subr.mxu0 0.0
    %2325 = vmatpush2.msra.mxu0 0.0
    %2326 = vmatprep.subr.mxu0 0.0
    %2327 = vmatpush2.msra.mxu0 0.0
    %2328 = vmatprep.subr.mxu0 0.0
    %2329 = vmatpush2.msra.mxu0 0.0
    %2330 = vmatprep.subr.mxu0 0.0
    %2331 = vmatpush2.msra.mxu0 0.0
    %2332 = vmatprep.subr.mxu0 0.0
    %2333 = vmatpush2.msra.mxu0 0.0
    %2334 = vmatprep.subr.mxu0 0.0
    %2335 = vmatpush2.msra.mxu0 0.0
    %2336 = vmatprep.subr.mxu0 0.0
    %2337 = vmatpush2.msra.mxu0 0.0
    %2338 = vmatprep.subr.mxu0 0.0
    %2339 = vmatpush2.msra.mxu0 0.0
    %2340 = vmatprep.subr.mxu0 0.0
    %2341 = vmatpush2.msra.mxu0 0.0
    %2342 = vmatprep.subr.mxu0 0.0
    %2343 = vmatpush2.msra.mxu0 0.0
    %2344 = vmatprep.subr.mxu0 0.0
    %2345 = vmatpush2.msra.mxu0 0.0
    %2346 = vmatprep.subr.mxu0 0.0
    %2347 = vmatpush2.msra.mxu0 0.0
    %2348 = vmatprep.subr.mxu0 0.0
    %2349 = vmatpush2.msra.mxu0 0.0
    %2350 = vmatprep.subr.mxu0 0.0
    %2351 = vmatpush2.msra.mxu0 0.0
    %2352 = vmatprep.mubr.f32.mxu0 0.0
    %2353 = vmatmul.mubr.f32.gmra.mxu0 %v2052
    %v2354 = vpop.f32.mrf.mxu0
    %v2355 = vadd.f32 0.0, %v2354
    %v2356 = vpop.f32.mrf.mxu0
    %v2357 = vadd.f32 0.0, %v2356
    %2358 = vmatprep.mubr.f32.mxu0 0.0
    %2359 = vmatmul.mubr.f32.gmra.mxu0 %v2055
    %v2360 = vpop.f32.mrf.mxu0
    %v2361 = vadd.f32 0.0, %v2360
    %v2362 = vpop.f32.mrf.mxu0
    %v2363 = vadd.f32 0.0, %v2362
    %2364 = vdwg.mxu0
    %2365 = vmatprep.subr.mxu0 0.0
    %2366 = vmatpush1.xpose.msra.mxu0 0.0
    %2367 = vmatprep.subr.mxu0 0.0
    %2368 = vmatpush1.xpose.msra.mxu0 0.0
    %2369 = vmatprep.subr.mxu0 0.0
    %2370 = vmatpush1.xpose.msra.mxu0 0.0
    %2371 = vmatprep.subr.mxu0 0.0
    %2372 = vmatpush1.xpose.msra.mxu0 0.0
    %2373 = vmatprep.subr.mxu0 0.0
    %2374 = vmatpush1.xpose.msra.mxu0 0.0
    %2375 = vmatprep.subr.mxu0 0.0
    %2376 = vmatpush1.xpose.msra.mxu0 0.0
    %2377 = vmatprep.subr.mxu0 0.0
    %2378 = vmatpush1.xpose.msra.mxu0 0.0
    %2379 = vmatprep.subr.mxu0 0.0
    %2380 = vmatpush1.xpose.msra.mxu0 0.0
    %2381 = vmatprep.subr.mxu0 0.0
    %2382 = vmatpush1.xpose.msra.mxu0 0.0
    %2383 = vmatprep.subr.mxu0 0.0
    %2384 = vmatpush1.xpose.msra.mxu0 0.0
    %2385 = vmatprep.subr.mxu0 0.0
    %2386 = vmatpush1.xpose.msra.mxu0 0.0
    %2387 = vmatprep.subr.mxu0 0.0
    %2388 = vmatpush1.xpose.msra.mxu0 0.0
    %2389 = vmatprep.subr.mxu0 0.0
    %2390 = vmatpush1.xpose.msra.mxu0 0.0
    %2391 = vmatprep.subr.mxu0 0.0
    %2392 = vmatpush1.xpose.msra.mxu0 0.0
    %2393 = vmatprep.subr.mxu0 0.0
    %2394 = vmatpush1.xpose.msra.mxu0 %v2284
    %2395 = vmatprep.subr.mxu0 0.0
    %2396 = vmatpush1.xpose.msra.mxu0 %v2278
    %2397 = vmatprep.subr.mxu0 0.0
    %2398 = vmatpush2.xpose.msra.mxu0 0.0
    %2399 = vmatprep.subr.mxu0 0.0
    %2400 = vmatpush2.xpose.msra.mxu0 0.0
    %2401 = vmatprep.subr.mxu0 0.0
    %2402 = vmatpush2.xpose.msra.mxu0 0.0
    %2403 = vmatprep.subr.mxu0 0.0
    %2404 = vmatpush2.xpose.msra.mxu0 0.0
    %2405 = vmatprep.subr.mxu0 0.0
    %2406 = vmatpush2.xpose.msra.mxu0 0.0
    %2407 = vmatprep.subr.mxu0 0.0
    %2408 = vmatpush2.xpose.msra.mxu0 0.0
    %2409 = vmatprep.subr.mxu0 0.0
    %2410 = vmatpush2.xpose.msra.mxu0 0.0
    %2411 = vmatprep.subr.mxu0 0.0
    %2412 = vmatpush2.xpose.msra.mxu0 0.0
    %2413 = vmatprep.subr.mxu0 0.0
    %2414 = vmatpush2.xpose.msra.mxu0 0.0
    %2415 = vmatprep.subr.mxu0 0.0
    %2416 = vmatpush2.xpose.msra.mxu0 0.0
    %2417 = vmatprep.subr.mxu0 0.0
    %2418 = vmatpush2.xpose.msra.mxu0 0.0
    %2419 = vmatprep.subr.mxu0 0.0
    %2420 = vmatpush2.xpose.msra.mxu0 0.0
    %2421 = vmatprep.subr.mxu0 0.0
    %2422 = vmatpush2.xpose.msra.mxu0 0.0
    %2423 = vmatprep.subr.mxu0 0.0
    %2424 = vmatpush2.xpose.msra.mxu0 0.0
    %2425 = vmatprep.subr.mxu0 0.0
    %2426 = vmatpush2.xpose.msra.mxu0 0.0
    %2427 = vmatprep.subr.mxu0 0.0
    %2428 = vmatpush2.xpose.msra.mxu0 0.0
    %2429 = vmatprep.mubr.f32.mxu0 0.0
    %2430 = vmatmul.mubr.f32.gmra.mxu0 %v2124
    %v2431 = vpop.f32.mrf.mxu0
    %v2432 = vadd.f32 %v275, %v2431
    %v2433 = vpop.f32.mrf.mxu0
    %2434 = vmatprep.mubr.f32.mxu0 0.0
    %2435 = vmatmul.mubr.f32.gmra.mxu0 %v2130
    %v2436 = vpop.f32.mrf.mxu0
    %v2437 = vadd.f32 %v276, %v2436
    %v2438 = vpop.f32.mrf.mxu0
    %2439 = vdwg.mxu0
    %v2440 = vsel %vm744, %v2432, -inf
    %2441 = vmax.xlane.f32.xlu0 %v2440
    %v2442 = vpop.xlane.xlu0 %2441
    %v2443 = vsel %vm744, %v2437, -inf
    %2444 = vmax.xlane.f32.xlu0 %v2443
    %v2445 = vpop.xlane.xlu0 %2444
    %v2446 = vsub.f32 %v2432, %v2442
    %v2447 = vsub.f32 %v2437, %v2445
    %v2448 = vmul.f32 %v2446, 1.442695
    %v2449 = vpow.pop %v2448
    %v2450 = vmul.f32 %v2447, 1.442695
    %v2451 = vpow.pop %v2450
    %v2452 = vsel %vm744, %v2449, 0.0
    %2453 = vadd.xlane.f32.xlu0 %v2452
    %v2454 = vpop.xlane.xlu0 %2453
    %v2455 = vsel %vm744, %v2451, 0.0
    %2456 = vadd.xlane.f32.xlu0 %v2455
    %v2457 = vpop.xlane.xlu0 %2456
    %v2458 = vrcp.pop %v2454
    %v2459 = vmul.f32 %v2449, %v2458
    %v2460 = vrcp.pop %v2457
    %v2461 = vmul.f32 %v2451, %v2460
    %s2462 = scalar_lea.vmem %s7, 128
    %v2463 = vld [vmem:[%s2462] sm:$0xff]
    %v2464 = vld [vmem:[%s2462 + $0x8] sm:$0xff]
    %v2465 = vld [vmem:[%s2462 + $0x10] sm:$0xff]
    %v2466 = vld [vmem:[%s2462 + $0x18] sm:$0xff]
    %2467 = vmatprep.subr.mxu0 0.0
    %2468 = vmatpush1.msra.mxu0 0.0
    %2469 = vmatprep.subr.mxu0 0.0
    %2470 = vmatpush1.msra.mxu0 0.0
    %2471 = vmatprep.subr.mxu0 0.0
    %2472 = vmatpush1.msra.mxu0 0.0
    %2473 = vmatprep.subr.mxu0 0.0
    %2474 = vmatpush1.msra.mxu0 0.0
    %2475 = vmatprep.subr.mxu0 0.0
    %2476 = vmatpush1.msra.mxu0 0.0
    %2477 = vmatprep.subr.mxu0 0.0
    %2478 = vmatpush1.msra.mxu0 0.0
    %2479 = vmatprep.subr.mxu0 0.0
    %2480 = vmatpush1.msra.mxu0 0.0
    %2481 = vmatprep.subr.mxu0 0.0
    %2482 = vmatpush1.msra.mxu0 0.0
    %2483 = vmatprep.subr.mxu0 0.0
    %2484 = vmatpush1.msra.mxu0 0.0
    %2485 = vmatprep.subr.mxu0 0.0
    %2486 = vmatpush1.msra.mxu0 0.0
    %2487 = vmatprep.subr.mxu0 0.0
    %2488 = vmatpush1.msra.mxu0 0.0
    %2489 = vmatprep.subr.mxu0 0.0
    %2490 = vmatpush1.msra.mxu0 0.0
    %2491 = vmatprep.subr.mxu0 0.0
    %2492 = vmatpush1.msra.mxu0 %v2466
    %2493 = vmatprep.subr.mxu0 0.0
    %2494 = vmatpush1.msra.mxu0 %v2465
    %2495 = vmatprep.subr.mxu0 0.0
    %2496 = vmatpush1.msra.mxu0 %v2464
    %2497 = vmatprep.subr.mxu0 0.0
    %2498 = vmatpush1.msra.mxu0 %v2463
    %2499 = vmatprep.subr.mxu0 0.0
    %2500 = vmatpush2.msra.mxu0 0.0
    %2501 = vmatprep.subr.mxu0 0.0
    %2502 = vmatpush2.msra.mxu0 0.0
    %2503 = vmatprep.subr.mxu0 0.0
    %2504 = vmatpush2.msra.mxu0 0.0
    %2505 = vmatprep.subr.mxu0 0.0
    %2506 = vmatpush2.msra.mxu0 0.0
    %2507 = vmatprep.subr.mxu0 0.0
    %2508 = vmatpush2.msra.mxu0 0.0
    %2509 = vmatprep.subr.mxu0 0.0
    %2510 = vmatpush2.msra.mxu0 0.0
    %2511 = vmatprep.subr.mxu0 0.0
    %2512 = vmatpush2.msra.mxu0 0.0
    %2513 = vmatprep.subr.mxu0 0.0
    %2514 = vmatpush2.msra.mxu0 0.0
    %2515 = vmatprep.subr.mxu0 0.0
    %2516 = vmatpush2.msra.mxu0 0.0
    %2517 = vmatprep.subr.mxu0 0.0
    %2518 = vmatpush2.msra.mxu0 0.0
    %2519 = vmatprep.subr.mxu0 0.0
    %2520 = vmatpush2.msra.mxu0 0.0
    %2521 = vmatprep.subr.mxu0 0.0
    %2522 = vmatpush2.msra.mxu0 0.0
    %2523 = vmatprep.subr.mxu0 0.0
    %2524 = vmatpush2.msra.mxu0 0.0
    %2525 = vmatprep.subr.mxu0 0.0
    %2526 = vmatpush2.msra.mxu0 0.0
    %2527 = vmatprep.subr.mxu0 0.0
    %2528 = vmatpush2.msra.mxu0 0.0
    %2529 = vmatprep.subr.mxu0 0.0
    %2530 = vmatpush2.msra.mxu0 0.0
    %2531 = vmatprep.mubr.f32.mxu0 0.0
    %2532 = vmatmul.mubr.f32.gmra.mxu0 %v2052
    %v2533 = vpop.f32.mrf.mxu0
    %v2534 = vadd.f32 0.0, %v2533
    %v2535 = vpop.f32.mrf.mxu0
    %2536 = vmatprep.mubr.f32.mxu0 0.0
    %2537 = vmatmul.mubr.f32.gmra.mxu0 %v2055
    %v2538 = vpop.f32.mrf.mxu0
    %v2539 = vadd.f32 0.0, %v2538
    %v2540 = vpop.f32.mrf.mxu0
    %2541 = vdwg.mxu0
    %2542 = vmatprep.subr.mxu0 0.0
    %2543 = vmatpush1.xpose.msra.mxu0 0.0
    %2544 = vmatprep.subr.mxu0 0.0
    %2545 = vmatpush1.xpose.msra.mxu0 0.0
    %2546 = vmatprep.subr.mxu0 0.0
    %2547 = vmatpush1.xpose.msra.mxu0 0.0
    %2548 = vmatprep.subr.mxu0 0.0
    %2549 = vmatpush1.xpose.msra.mxu0 0.0
    %2550 = vmatprep.subr.mxu0 0.0
    %2551 = vmatpush1.xpose.msra.mxu0 0.0
    %2552 = vmatprep.subr.mxu0 0.0
    %2553 = vmatpush1.xpose.msra.mxu0 0.0
    %2554 = vmatprep.subr.mxu0 0.0
    %2555 = vmatpush1.xpose.msra.mxu0 0.0
    %2556 = vmatprep.subr.mxu0 0.0
    %2557 = vmatpush1.xpose.msra.mxu0 0.0
    %2558 = vmatprep.subr.mxu0 0.0
    %2559 = vmatpush1.xpose.msra.mxu0 0.0
    %2560 = vmatprep.subr.mxu0 0.0
    %2561 = vmatpush1.xpose.msra.mxu0 0.0
    %2562 = vmatprep.subr.mxu0 0.0
    %2563 = vmatpush1.xpose.msra.mxu0 0.0
    %2564 = vmatprep.subr.mxu0 0.0
    %2565 = vmatpush1.xpose.msra.mxu0 0.0
    %2566 = vmatprep.subr.mxu0 0.0
    %2567 = vmatpush1.xpose.msra.mxu0 0.0
    %2568 = vmatprep.subr.mxu0 0.0
    %2569 = vmatpush1.xpose.msra.mxu0 0.0
    %2570 = vmatprep.subr.mxu0 0.0
    %2571 = vmatpush1.xpose.msra.mxu0 %v2286
    %2572 = vmatprep.subr.mxu0 0.0
    %2573 = vmatpush1.xpose.msra.mxu0 %v2280
    %2574 = vmatprep.subr.mxu0 0.0
    %2575 = vmatpush2.xpose.msra.mxu0 0.0
    %2576 = vmatprep.subr.mxu0 0.0
    %2577 = vmatpush2.xpose.msra.mxu0 0.0
    %2578 = vmatprep.subr.mxu0 0.0
    %2579 = vmatpush2.xpose.msra.mxu0 0.0
    %2580 = vmatprep.subr.mxu0 0.0
    %2581 = vmatpush2.xpose.msra.mxu0 0.0
    %2582 = vmatprep.subr.mxu0 0.0
    %2583 = vmatpush2.xpose.msra.mxu0 0.0
    %2584 = vmatprep.subr.mxu0 0.0
    %2585 = vmatpush2.xpose.msra.mxu0 0.0
    %2586 = vmatprep.subr.mxu0 0.0
    %2587 = vmatpush2.xpose.msra.mxu0 0.0
    %2588 = vmatprep.subr.mxu0 0.0
    %2589 = vmatpush2.xpose.msra.mxu0 0.0
    %2590 = vmatprep.subr.mxu0 0.0
    %2591 = vmatpush2.xpose.msra.mxu0 0.0
    %2592 = vmatprep.subr.mxu0 0.0
    %2593 = vmatpush2.xpose.msra.mxu0 0.0
    %2594 = vmatprep.subr.mxu0 0.0
    %2595 = vmatpush2.xpose.msra.mxu0 0.0
    %2596 = vmatprep.subr.mxu0 0.0
    %2597 = vmatpush2.xpose.msra.mxu0 0.0
    %2598 = vmatprep.subr.mxu0 0.0
    %2599 = vmatpush2.xpose.msra.mxu0 0.0
    %2600 = vmatprep.subr.mxu0 0.0
    %2601 = vmatpush2.xpose.msra.mxu0 0.0
    %2602 = vmatprep.subr.mxu0 0.0
    %2603 = vmatpush2.xpose.msra.mxu0 0.0
    %2604 = vmatprep.subr.mxu0 0.0
    %2605 = vmatpush2.xpose.msra.mxu0 0.0
    %2606 = vmatprep.mubr.f32.mxu0 0.0
    %2607 = vmatmul.mubr.f32.gmra.mxu0 %v2126
    %v2608 = vpop.f32.mrf.mxu0
    %v2609 = vadd.f32 %v275, %v2608
    %v2610 = vpop.f32.mrf.mxu0
    %2611 = vmatprep.mubr.f32.mxu0 0.0
    %2612 = vmatmul.mubr.f32.gmra.mxu0 %v2132
    %v2613 = vpop.f32.mrf.mxu0
    %v2614 = vadd.f32 %v276, %v2613
    %v2615 = vpop.f32.mrf.mxu0
    %2616 = vdwg.mxu0
    %v2617 = vsel %vm744, %v2609, -inf
    %2618 = vmax.xlane.f32.xlu0 %v2617
    %v2619 = vpop.xlane.xlu0 %2618
    %v2620 = vsel %vm744, %v2614, -inf
    %2621 = vmax.xlane.f32.xlu0 %v2620
    %v2622 = vpop.xlane.xlu0 %2621
    %v2623 = vsub.f32 %v2609, %v2619
    %v2624 = vsub.f32 %v2614, %v2622
    %v2625 = vmul.f32 %v2623, 1.442695
    %v2626 = vpow.pop %v2625
    %v2627 = vmul.f32 %v2624, 1.442695
    %v2628 = vpow.pop %v2627
    %v2629 = vsel %vm744, %v2626, 0.0
    %2630 = vadd.xlane.f32.xlu0 %v2629
    %v2631 = vpop.xlane.xlu0 %2630
    %v2632 = vsel %vm744, %v2628, 0.0
    %2633 = vadd.xlane.f32.xlu0 %v2632
    %v2634 = vpop.xlane.xlu0 %2633
    %v2635 = vrcp.pop %v2631
    %v2636 = vmul.f32 %v2626, %v2635
    %v2637 = vrcp.pop %v2634
    %v2638 = vmul.f32 %v2628, %v2637
    %s2639 = scalar_lea.vmem %s7, 160
    %v2640 = vld [vmem:[%s2639] sm:$0xff]
    %v2641 = vld [vmem:[%s2639 + $0x8] sm:$0xff]
    %v2642 = vld [vmem:[%s2639 + $0x10] sm:$0xff]
    %v2643 = vld [vmem:[%s2639 + $0x18] sm:$0xff]
    %2644 = vmatprep.subr.mxu0 0.0
    %2645 = vmatpush1.msra.mxu0 0.0
    %2646 = vmatprep.subr.mxu0 0.0
    %2647 = vmatpush1.msra.mxu0 0.0
    %2648 = vmatprep.subr.mxu0 0.0
    %2649 = vmatpush1.msra.mxu0 0.0
    %2650 = vmatprep.subr.mxu0 0.0
    %2651 = vmatpush1.msra.mxu0 0.0
    %2652 = vmatprep.subr.mxu0 0.0
    %2653 = vmatpush1.msra.mxu0 0.0
    %2654 = vmatprep.subr.mxu0 0.0
    %2655 = vmatpush1.msra.mxu0 0.0
    %2656 = vmatprep.subr.mxu0 0.0
    %2657 = vmatpush1.msra.mxu0 0.0
    %2658 = vmatprep.subr.mxu0 0.0
    %2659 = vmatpush1.msra.mxu0 0.0
    %2660 = vmatprep.subr.mxu0 0.0
    %2661 = vmatpush1.msra.mxu0 0.0
    %2662 = vmatprep.subr.mxu0 0.0
    %2663 = vmatpush1.msra.mxu0 0.0
    %2664 = vmatprep.subr.mxu0 0.0
    %2665 = vmatpush1.msra.mxu0 0.0
    %2666 = vmatprep.subr.mxu0 0.0
    %2667 = vmatpush1.msra.mxu0 0.0
    %2668 = vmatprep.subr.mxu0 0.0
    %2669 = vmatpush1.msra.mxu0 %v2643
    %2670 = vmatprep.subr.mxu0 0.0
    %2671 = vmatpush1.msra.mxu0 %v2642
    %2672 = vmatprep.subr.mxu0 0.0
    %2673 = vmatpush1.msra.mxu0 %v2641
    %2674 = vmatprep.subr.mxu0 0.0
    %2675 = vmatpush1.msra.mxu0 %v2640
    %2676 = vmatprep.subr.mxu0 0.0
    %2677 = vmatpush2.msra.mxu0 0.0
    %2678 = vmatprep.subr.mxu0 0.0
    %2679 = vmatpush2.msra.mxu0 0.0
    %2680 = vmatprep.subr.mxu0 0.0
    %2681 = vmatpush2.msra.mxu0 0.0
    %2682 = vmatprep.subr.mxu0 0.0
    %2683 = vmatpush2.msra.mxu0 0.0
    %2684 = vmatprep.subr.mxu0 0.0
    %2685 = vmatpush2.msra.mxu0 0.0
    %2686 = vmatprep.subr.mxu0 0.0
    %2687 = vmatpush2.msra.mxu0 0.0
    %2688 = vmatprep.subr.mxu0 0.0
    %2689 = vmatpush2.msra.mxu0 0.0
    %2690 = vmatprep.subr.mxu0 0.0
    %2691 = vmatpush2.msra.mxu0 0.0
    %2692 = vmatprep.subr.mxu0 0.0
    %2693 = vmatpush2.msra.mxu0 0.0
    %2694 = vmatprep.subr.mxu0 0.0
    %2695 = vmatpush2.msra.mxu0 0.0
    %2696 = vmatprep.subr.mxu0 0.0
    %2697 = vmatpush2.msra.mxu0 0.0
    %2698 = vmatprep.subr.mxu0 0.0
    %2699 = vmatpush2.msra.mxu0 0.0
    %2700 = vmatprep.subr.mxu0 0.0
    %2701 = vmatpush2.msra.mxu0 0.0
    %2702 = vmatprep.subr.mxu0 0.0
    %2703 = vmatpush2.msra.mxu0 0.0
    %2704 = vmatprep.subr.mxu0 0.0
    %2705 = vmatpush2.msra.mxu0 0.0
    %2706 = vmatprep.subr.mxu0 0.0
    %2707 = vmatpush2.msra.mxu0 0.0
    %2708 = vmatprep.mubr.f32.mxu0 0.0
    %2709 = vmatmul.mubr.f32.gmra.mxu0 %v2052
    %v2710 = vpop.f32.mrf.mxu0
    %v2711 = vadd.f32 0.0, %v2710
    %v2712 = vpop.f32.mrf.mxu0
    %2713 = vmatprep.mubr.f32.mxu0 0.0
    %2714 = vmatmul.mubr.f32.gmra.mxu0 %v2055
    %v2715 = vpop.f32.mrf.mxu0
    %v2716 = vadd.f32 0.0, %v2715
    %v2717 = vpop.f32.mrf.mxu0
    %2718 = vdwg.mxu0
    %v2720 = vsel %vm744, %v2636, 0
    %v2723 = vsel %vm744, %v2638, 0
    %2725 = vmatprep.subr.mxu0 0.0
    %2726 = vmatpush1.msra.mxu0 0.0
    %2727 = vmatprep.subr.mxu0 0.0
    %2728 = vmatpush1.msra.mxu0 0.0
    %2729 = vmatprep.subr.mxu0 0.0
    %2730 = vmatpush1.msra.mxu0 0.0
    %2731 = vmatprep.subr.mxu0 0.0
    %2732 = vmatpush1.msra.mxu0 0.0
    %2733 = vmatprep.subr.mxu0 0.0
    %2734 = vmatpush1.msra.mxu0 0.0
    %2735 = vmatprep.subr.mxu0 0.0
    %2736 = vmatpush1.msra.mxu0 0.0
    %2737 = vmatprep.subr.mxu0 0.0
    %2738 = vmatpush1.msra.mxu0 0.0
    %2739 = vmatprep.subr.mxu0 0.0
    %2740 = vmatpush1.msra.mxu0 0.0
    %2741 = vmatprep.subr.mxu0 0.0
    %2742 = vmatpush1.msra.mxu0 0.0
    %2743 = vmatprep.subr.mxu0 0.0
    %2744 = vmatpush1.msra.mxu0 0.0
    %2745 = vmatprep.subr.mxu0 0.0
    %2746 = vmatpush1.msra.mxu0 0.0
    %2747 = vmatprep.subr.mxu0 0.0
    %2748 = vmatpush1.msra.mxu0 0.0
    %2749 = vmatprep.subr.mxu0 0.0
    %2750 = vmatpush1.msra.mxu0 0.0
    %2751 = vmatprep.subr.mxu0 0.0
    %2752 = vmatpush1.msra.mxu0 0.0
    %2753 = vmatprep.subr.mxu0 0.0
    %2754 = vmatpush1.msra.mxu0 %v2716
    %2755 = vmatprep.subr.mxu0 0.0
    %2756 = vmatpush1.msra.mxu0 %v2711
    %2757 = vmatprep.subr.mxu0 0.0
    %2758 = vmatpush2.msra.mxu0 0.0
    %2759 = vmatprep.subr.mxu0 0.0
    %2760 = vmatpush2.msra.mxu0 0.0
    %2761 = vmatprep.subr.mxu0 0.0
    %2762 = vmatpush2.msra.mxu0 0.0
    %2763 = vmatprep.subr.mxu0 0.0
    %2764 = vmatpush2.msra.mxu0 0.0
    %2765 = vmatprep.subr.mxu0 0.0
    %2766 = vmatpush2.msra.mxu0 0.0
    %2767 = vmatprep.subr.mxu0 0.0
    %2768 = vmatpush2.msra.mxu0 0.0
    %2769 = vmatprep.subr.mxu0 0.0
    %2770 = vmatpush2.msra.mxu0 0.0
    %2771 = vmatprep.subr.mxu0 0.0
    %2772 = vmatpush2.msra.mxu0 0.0
    %2773 = vmatprep.subr.mxu0 0.0
    %2774 = vmatpush2.msra.mxu0 0.0
    %2775 = vmatprep.subr.mxu0 0.0
    %2776 = vmatpush2.msra.mxu0 0.0
    %2777 = vmatprep.subr.mxu0 0.0
    %2778 = vmatpush2.msra.mxu0 0.0
    %2779 = vmatprep.subr.mxu0 0.0
    %2780 = vmatpush2.msra.mxu0 0.0
    %2781 = vmatprep.subr.mxu0 0.0
    %2782 = vmatpush2.msra.mxu0 0.0
    %2783 = vmatprep.subr.mxu0 0.0
    %2784 = vmatpush2.msra.mxu0 0.0
    %2785 = vmatprep.subr.mxu0 0.0
    %2786 = vmatpush2.msra.mxu0 0.0
    %2787 = vmatprep.subr.mxu0 0.0
    %2788 = vmatpush2.msra.mxu0 0.0
    %2789 = vmatprep.mubr.f32.mxu0 0.0
    %2790 = vmatmul.mubr.f32.gmra.mxu0 %v2720
    %v2791 = vpop.f32.mrf.mxu0
    %v2792 = vadd.f32 0.0, %v2791
    %v2793 = vpop.f32.mrf.mxu0
    %2794 = vmatprep.mubr.f32.mxu0 0.0
    %2795 = vmatmul.mubr.f32.gmra.mxu0 %v2723
    %v2796 = vpop.f32.mrf.mxu0
    %v2797 = vadd.f32 0.0, %v2796
    %v2798 = vpop.f32.mrf.mxu0
    %2799 = vdwg.mxu0
    %v2801 = vsel %vm744, %v2459, 0
    %v2804 = vsel %vm744, %v2461, 0
    %2806 = vmatprep.subr.mxu0 0.0
    %2807 = vmatpush1.msra.mxu0 0.0
    %2808 = vmatprep.subr.mxu0 0.0
    %2809 = vmatpush1.msra.mxu0 0.0
    %2810 = vmatprep.subr.mxu0 0.0
    %2811 = vmatpush1.msra.mxu0 0.0
    %2812 = vmatprep.subr.mxu0 0.0
    %2813 = vmatpush1.msra.mxu0 0.0
    %2814 = vmatprep.subr.mxu0 0.0
    %2815 = vmatpush1.msra.mxu0 0.0
    %2816 = vmatprep.subr.mxu0 0.0
    %2817 = vmatpush1.msra.mxu0 0.0
    %2818 = vmatprep.subr.mxu0 0.0
    %2819 = vmatpush1.msra.mxu0 0.0
    %2820 = vmatprep.subr.mxu0 0.0
    %2821 = vmatpush1.msra.mxu0 0.0
    %2822 = vmatprep.subr.mxu0 0.0
    %2823 = vmatpush1.msra.mxu0 0.0
    %2824 = vmatprep.subr.mxu0 0.0
    %2825 = vmatpush1.msra.mxu0 0.0
    %2826 = vmatprep.subr.mxu0 0.0
    %2827 = vmatpush1.msra.mxu0 0.0
    %2828 = vmatprep.subr.mxu0 0.0
    %2829 = vmatpush1.msra.mxu0 0.0
    %2830 = vmatprep.subr.mxu0 0.0
    %2831 = vmatpush1.msra.mxu0 0.0
    %2832 = vmatprep.subr.mxu0 0.0
    %2833 = vmatpush1.msra.mxu0 0.0
    %2834 = vmatprep.subr.mxu0 0.0
    %2835 = vmatpush1.msra.mxu0 %v2539
    %2836 = vmatprep.subr.mxu0 0.0
    %2837 = vmatpush1.msra.mxu0 %v2534
    %2838 = vmatprep.subr.mxu0 0.0
    %2839 = vmatpush2.msra.mxu0 0.0
    %2840 = vmatprep.subr.mxu0 0.0
    %2841 = vmatpush2.msra.mxu0 0.0
    %2842 = vmatprep.subr.mxu0 0.0
    %2843 = vmatpush2.msra.mxu0 0.0
    %2844 = vmatprep.subr.mxu0 0.0
    %2845 = vmatpush2.msra.mxu0 0.0
    %2846 = vmatprep.subr.mxu0 0.0
    %2847 = vmatpush2.msra.mxu0 0.0
    %2848 = vmatprep.subr.mxu0 0.0
    %2849 = vmatpush2.msra.mxu0 0.0
    %2850 = vmatprep.subr.mxu0 0.0
    %2851 = vmatpush2.msra.mxu0 0.0
    %2852 = vmatprep.subr.mxu0 0.0
    %2853 = vmatpush2.msra.mxu0 0.0
    %2854 = vmatprep.subr.mxu0 0.0
    %2855 = vmatpush2.msra.mxu0 0.0
    %2856 = vmatprep.subr.mxu0 0.0
    %2857 = vmatpush2.msra.mxu0 0.0
    %2858 = vmatprep.subr.mxu0 0.0
    %2859 = vmatpush2.msra.mxu0 0.0
    %2860 = vmatprep.subr.mxu0 0.0
    %2861 = vmatpush2.msra.mxu0 0.0
    %2862 = vmatprep.subr.mxu0 0.0
    %2863 = vmatpush2.msra.mxu0 0.0
    %2864 = vmatprep.subr.mxu0 0.0
    %2865 = vmatpush2.msra.mxu0 0.0
    %2866 = vmatprep.subr.mxu0 0.0
    %2867 = vmatpush2.msra.mxu0 0.0
    %2868 = vmatprep.subr.mxu0 0.0
    %2869 = vmatpush2.msra.mxu0 0.0
    %2870 = vmatprep.mubr.f32.mxu0 0.0
    %2871 = vmatmul.mubr.f32.gmra.mxu0 %v2801
    %v2872 = vpop.f32.mrf.mxu0
    %v2873 = vadd.f32 %v2792, %v2872
    %v2874 = vpop.f32.mrf.mxu0
    %2875 = vmatprep.mubr.f32.mxu0 0.0
    %2876 = vmatmul.mubr.f32.gmra.mxu0 %v2804
    %v2877 = vpop.f32.mrf.mxu0
    %v2878 = vadd.f32 %v2797, %v2877
    %v2879 = vpop.f32.mrf.mxu0
    %2880 = vdwg.mxu0
    %2881 = vmatprep.subr.mxu0 0.0
    %2882 = vmatpush1.xpose.msra.mxu0 0.0
    %2883 = vmatprep.subr.mxu0 0.0
    %2884 = vmatpush1.xpose.msra.mxu0 0.0
    %2885 = vmatprep.subr.mxu0 0.0
    %2886 = vmatpush1.xpose.msra.mxu0 0.0
    %2887 = vmatprep.subr.mxu0 0.0
    %2888 = vmatpush1.xpose.msra.mxu0 0.0
    %2889 = vmatprep.subr.mxu0 0.0
    %2890 = vmatpush1.xpose.msra.mxu0 0.0
    %2891 = vmatprep.subr.mxu0 0.0
    %2892 = vmatpush1.xpose.msra.mxu0 0.0
    %2893 = vmatprep.subr.mxu0 0.0
    %2894 = vmatpush1.xpose.msra.mxu0 0.0
    %2895 = vmatprep.subr.mxu0 0.0
    %2896 = vmatpush1.xpose.msra.mxu0 0.0
    %2897 = vmatprep.subr.mxu0 0.0
    %2898 = vmatpush1.xpose.msra.mxu0 0.0
    %2899 = vmatprep.subr.mxu0 0.0
    %2900 = vmatpush1.xpose.msra.mxu0 0.0
    %2901 = vmatprep.subr.mxu0 0.0
    %2902 = vmatpush1.xpose.msra.mxu0 0.0
    %2903 = vmatprep.subr.mxu0 0.0
    %2904 = vmatpush1.xpose.msra.mxu0 0.0
    %2905 = vmatprep.subr.mxu0 0.0
    %2906 = vmatpush1.xpose.msra.mxu0 0.0
    %2907 = vmatprep.subr.mxu0 0.0
    %2908 = vmatpush1.xpose.msra.mxu0 0.0
    %2909 = vmatprep.subr.mxu0 0.0
    %2910 = vmatpush1.xpose.msra.mxu0 %v2361
    %2911 = vmatprep.subr.mxu0 0.0
    %2912 = vmatpush1.xpose.msra.mxu0 %v2355
    %2913 = vmatprep.subr.mxu0 0.0
    %2914 = vmatpush2.xpose.msra.mxu0 0.0
    %2915 = vmatprep.subr.mxu0 0.0
    %2916 = vmatpush2.xpose.msra.mxu0 0.0
    %2917 = vmatprep.subr.mxu0 0.0
    %2918 = vmatpush2.xpose.msra.mxu0 0.0
    %2919 = vmatprep.subr.mxu0 0.0
    %2920 = vmatpush2.xpose.msra.mxu0 0.0
    %2921 = vmatprep.subr.mxu0 0.0
    %2922 = vmatpush2.xpose.msra.mxu0 0.0
    %2923 = vmatprep.subr.mxu0 0.0
    %2924 = vmatpush2.xpose.msra.mxu0 0.0
    %2925 = vmatprep.subr.mxu0 0.0
    %2926 = vmatpush2.xpose.msra.mxu0 0.0
    %2927 = vmatprep.subr.mxu0 0.0
    %2928 = vmatpush2.xpose.msra.mxu0 0.0
    %2929 = vmatprep.subr.mxu0 0.0
    %2930 = vmatpush2.xpose.msra.mxu0 0.0
    %2931 = vmatprep.subr.mxu0 0.0
    %2932 = vmatpush2.xpose.msra.mxu0 0.0
    %2933 = vmatprep.subr.mxu0 0.0
    %2934 = vmatpush2.xpose.msra.mxu0 0.0
    %2935 = vmatprep.subr.mxu0 0.0
    %2936 = vmatpush2.xpose.msra.mxu0 0.0
    %2937 = vmatprep.subr.mxu0 0.0
    %2938 = vmatpush2.xpose.msra.mxu0 0.0
    %2939 = vmatprep.subr.mxu0 0.0
    %2940 = vmatpush2.xpose.msra.mxu0 0.0
    %2941 = vmatprep.subr.mxu0 0.0
    %2942 = vmatpush2.xpose.msra.mxu0 0.0
    %2943 = vmatprep.subr.mxu0 0.0
    %2944 = vmatpush2.xpose.msra.mxu0 0.0
    %2945 = vmatprep.mubr.f32.mxu0 0.0
    %2946 = vmatmul.mubr.f32.gmra.mxu0 %v2201
    %v2947 = vpop.f32.mrf.mxu0
    %v2948 = vadd.f32 %v275, %v2947
    %v2949 = vpop.f32.mrf.mxu0
    %2950 = vmatprep.mubr.f32.mxu0 0.0
    %2951 = vmatmul.mubr.f32.gmra.mxu0 %v2207
    %v2952 = vpop.f32.mrf.mxu0
    %v2953 = vadd.f32 %v276, %v2952
    %v2954 = vpop.f32.mrf.mxu0
    %2955 = vdwg.mxu0
    %v2956 = vsel %vm744, %v2948, -inf
    %2957 = vmax.xlane.f32.xlu0 %v2956
    %v2958 = vpop.xlane.xlu0 %2957
    %v2959 = vsel %vm744, %v2953, -inf
    %2960 = vmax.xlane.f32.xlu0 %v2959
    %v2961 = vpop.xlane.xlu0 %2960
    %v2962 = vsub.f32 %v2948, %v2958
    %v2963 = vsub.f32 %v2953, %v2961
    %v2964 = vmul.f32 %v2962, 1.442695
    %v2965 = vpow.pop %v2964
    %v2966 = vmul.f32 %v2963, 1.442695
    %v2967 = vpow.pop %v2966
    %v2968 = vsel %vm744, %v2965, 0.0
    %2969 = vadd.xlane.f32.xlu0 %v2968
    %v2970 = vpop.xlane.xlu0 %2969
    %v2971 = vsel %vm744, %v2967, 0.0
    %2972 = vadd.xlane.f32.xlu0 %v2971
    %v2973 = vpop.xlane.xlu0 %2972
    %v2974 = vrcp.pop %v2970
    %v2975 = vmul.f32 %v2965, %v2974
    %v2976 = vrcp.pop %v2973
    %v2977 = vmul.f32 %v2967, %v2976
    %s2978 = scalar_lea.vmem %s7, 192
    %v2979 = vld [vmem:[%s2978] sm:$0xff]
    %v2980 = vld [vmem:[%s2978 + $0x8] sm:$0xff]
    %v2981 = vld [vmem:[%s2978 + $0x10] sm:$0xff]
    %v2982 = vld [vmem:[%s2978 + $0x18] sm:$0xff]
    %2983 = vmatprep.subr.mxu0 0.0
    %2984 = vmatpush1.msra.mxu0 0.0
    %2985 = vmatprep.subr.mxu0 0.0
    %2986 = vmatpush1.msra.mxu0 0.0
    %2987 = vmatprep.subr.mxu0 0.0
    %2988 = vmatpush1.msra.mxu0 0.0
    %2989 = vmatprep.subr.mxu0 0.0
    %2990 = vmatpush1.msra.mxu0 0.0
    %2991 = vmatprep.subr.mxu0 0.0
    %2992 = vmatpush1.msra.mxu0 0.0
    %2993 = vmatprep.subr.mxu0 0.0
    %2994 = vmatpush1.msra.mxu0 0.0
    %2995 = vmatprep.subr.mxu0 0.0
    %2996 = vmatpush1.msra.mxu0 0.0
    %2997 = vmatprep.subr.mxu0 0.0
    %2998 = vmatpush1.msra.mxu0 0.0
    %2999 = vmatprep.subr.mxu0 0.0
    %3000 = vmatpush1.msra.mxu0 0.0
    %3001 = vmatprep.subr.mxu0 0.0
    %3002 = vmatpush1.msra.mxu0 0.0
    %3003 = vmatprep.subr.mxu0 0.0
    %3004 = vmatpush1.msra.mxu0 0.0
    %3005 = vmatprep.subr.mxu0 0.0
    %3006 = vmatpush1.msra.mxu0 0.0
    %3007 = vmatprep.subr.mxu0 0.0
    %3008 = vmatpush1.msra.mxu0 %v2982
    %3009 = vmatprep.subr.mxu0 0.0
    %3010 = vmatpush1.msra.mxu0 %v2981
    %3011 = vmatprep.subr.mxu0 0.0
    %3012 = vmatpush1.msra.mxu0 %v2980
    %3013 = vmatprep.subr.mxu0 0.0
    %3014 = vmatpush1.msra.mxu0 %v2979
    %3015 = vmatprep.subr.mxu0 0.0
    %3016 = vmatpush2.msra.mxu0 0.0
    %3017 = vmatprep.subr.mxu0 0.0
    %3018 = vmatpush2.msra.mxu0 0.0
    %3019 = vmatprep.subr.mxu0 0.0
    %3020 = vmatpush2.msra.mxu0 0.0
    %3021 = vmatprep.subr.mxu0 0.0
    %3022 = vmatpush2.msra.mxu0 0.0
    %3023 = vmatprep.subr.mxu0 0.0
    %3024 = vmatpush2.msra.mxu0 0.0
    %3025 = vmatprep.subr.mxu0 0.0
    %3026 = vmatpush2.msra.mxu0 0.0
    %3027 = vmatprep.subr.mxu0 0.0
    %3028 = vmatpush2.msra.mxu0 0.0
    %3029 = vmatprep.subr.mxu0 0.0
    %3030 = vmatpush2.msra.mxu0 0.0
    %3031 = vmatprep.subr.mxu0 0.0
    %3032 = vmatpush2.msra.mxu0 0.0
    %3033 = vmatprep.subr.mxu0 0.0
    %3034 = vmatpush2.msra.mxu0 0.0
    %3035 = vmatprep.subr.mxu0 0.0
    %3036 = vmatpush2.msra.mxu0 0.0
    %3037 = vmatprep.subr.mxu0 0.0
    %3038 = vmatpush2.msra.mxu0 0.0
    %3039 = vmatprep.subr.mxu0 0.0
    %3040 = vmatpush2.msra.mxu0 0.0
    %3041 = vmatprep.subr.mxu0 0.0
    %3042 = vmatpush2.msra.mxu0 0.0
    %3043 = vmatprep.subr.mxu0 0.0
    %3044 = vmatpush2.msra.mxu0 0.0
    %3045 = vmatprep.subr.mxu0 0.0
    %3046 = vmatpush2.msra.mxu0 0.0
    %3047 = vmatprep.mubr.f32.mxu0 0.0
    %3048 = vmatmul.mubr.f32.gmra.mxu0 %v2052
    %v3049 = vpop.f32.mrf.mxu0
    %v3050 = vadd.f32 0.0, %v3049
    %v3051 = vpop.f32.mrf.mxu0
    %3052 = vmatprep.mubr.f32.mxu0 0.0
    %3053 = vmatmul.mubr.f32.gmra.mxu0 %v2055
    %v3054 = vpop.f32.mrf.mxu0
    %v3055 = vadd.f32 0.0, %v3054
    %v3056 = vpop.f32.mrf.mxu0
    %3057 = vdwg.mxu0
    %v3059 = vsel %vm744, %v2975, 0
    %v3062 = vsel %vm744, %v2977, 0
    %3064 = vmatprep.subr.mxu0 0.0
    %3065 = vmatpush1.msra.mxu0 0.0
    %3066 = vmatprep.subr.mxu0 0.0
    %3067 = vmatpush1.msra.mxu0 0.0
    %3068 = vmatprep.subr.mxu0 0.0
    %3069 = vmatpush1.msra.mxu0 0.0
    %3070 = vmatprep.subr.mxu0 0.0
    %3071 = vmatpush1.msra.mxu0 0.0
    %3072 = vmatprep.subr.mxu0 0.0
    %3073 = vmatpush1.msra.mxu0 0.0
    %3074 = vmatprep.subr.mxu0 0.0
    %3075 = vmatpush1.msra.mxu0 0.0
    %3076 = vmatprep.subr.mxu0 0.0
    %3077 = vmatpush1.msra.mxu0 0.0
    %3078 = vmatprep.subr.mxu0 0.0
    %3079 = vmatpush1.msra.mxu0 0.0
    %3080 = vmatprep.subr.mxu0 0.0
    %3081 = vmatpush1.msra.mxu0 0.0
    %3082 = vmatprep.subr.mxu0 0.0
    %3083 = vmatpush1.msra.mxu0 0.0
    %3084 = vmatprep.subr.mxu0 0.0
    %3085 = vmatpush1.msra.mxu0 0.0
    %3086 = vmatprep.subr.mxu0 0.0
    %3087 = vmatpush1.msra.mxu0 0.0
    %3088 = vmatprep.subr.mxu0 0.0
    %3089 = vmatpush1.msra.mxu0 0.0
    %3090 = vmatprep.subr.mxu0 0.0
    %3091 = vmatpush1.msra.mxu0 0.0
    %3092 = vmatprep.subr.mxu0 0.0
    %3093 = vmatpush1.msra.mxu0 %v3055
    %3094 = vmatprep.subr.mxu0 0.0
    %3095 = vmatpush1.msra.mxu0 %v3050
    %3096 = vmatprep.subr.mxu0 0.0
    %3097 = vmatpush2.msra.mxu0 0.0
    %3098 = vmatprep.subr.mxu0 0.0
    %3099 = vmatpush2.msra.mxu0 0.0
    %3100 = vmatprep.subr.mxu0 0.0
    %3101 = vmatpush2.msra.mxu0 0.0
    %3102 = vmatprep.subr.mxu0 0.0
    %3103 = vmatpush2.msra.mxu0 0.0
    %3104 = vmatprep.subr.mxu0 0.0
    %3105 = vmatpush2.msra.mxu0 0.0
    %3106 = vmatprep.subr.mxu0 0.0
    %3107 = vmatpush2.msra.mxu0 0.0
    %3108 = vmatprep.subr.mxu0 0.0
    %3109 = vmatpush2.msra.mxu0 0.0
    %3110 = vmatprep.subr.mxu0 0.0
    %3111 = vmatpush2.msra.mxu0 0.0
    %3112 = vmatprep.subr.mxu0 0.0
    %3113 = vmatpush2.msra.mxu0 0.0
    %3114 = vmatprep.subr.mxu0 0.0
    %3115 = vmatpush2.msra.mxu0 0.0
    %3116 = vmatprep.subr.mxu0 0.0
    %3117 = vmatpush2.msra.mxu0 0.0
    %3118 = vmatprep.subr.mxu0 0.0
    %3119 = vmatpush2.msra.mxu0 0.0
    %3120 = vmatprep.subr.mxu0 0.0
    %3121 = vmatpush2.msra.mxu0 0.0
    %3122 = vmatprep.subr.mxu0 0.0
    %3123 = vmatpush2.msra.mxu0 0.0
    %3124 = vmatprep.subr.mxu0 0.0
    %3125 = vmatpush2.msra.mxu0 0.0
    %3126 = vmatprep.subr.mxu0 0.0
    %3127 = vmatpush2.msra.mxu0 0.0
    %3128 = vmatprep.mubr.f32.mxu0 0.0
    %3129 = vmatmul.mubr.f32.gmra.mxu0 %v3059
    %v3130 = vpop.f32.mrf.mxu0
    %v3131 = vadd.f32 0.0, %v3130
    %v3132 = vpop.f32.mrf.mxu0
    %3133 = vmatprep.mubr.f32.mxu0 0.0
    %3134 = vmatmul.mubr.f32.gmra.mxu0 %v3062
    %v3135 = vpop.f32.mrf.mxu0
    %v3136 = vadd.f32 0.0, %v3135
    %v3137 = vpop.f32.mrf.mxu0
    %3138 = vdwg.mxu0
    %v3139 = vadd.f32 %v2873, %v3131
    %v3140 = vadd.f32 %v2878, %v3136
    %3141 = vmatprep.subr.mxu0 0.0
    %3142 = vmatpush1.xpose.msra.mxu0 0.0
    %3143 = vmatprep.subr.mxu0 0.0
    %3144 = vmatpush1.xpose.msra.mxu0 0.0
    %3145 = vmatprep.subr.mxu0 0.0
    %3146 = vmatpush1.xpose.msra.mxu0 0.0
    %3147 = vmatprep.subr.mxu0 0.0
    %3148 = vmatpush1.xpose.msra.mxu0 0.0
    %3149 = vmatprep.subr.mxu0 0.0
    %3150 = vmatpush1.xpose.msra.mxu0 0.0
    %3151 = vmatprep.subr.mxu0 0.0
    %3152 = vmatpush1.xpose.msra.mxu0 0.0
    %3153 = vmatprep.subr.mxu0 0.0
    %3154 = vmatpush1.xpose.msra.mxu0 0.0
    %3155 = vmatprep.subr.mxu0 0.0
    %3156 = vmatpush1.xpose.msra.mxu0 0.0
    %3157 = vmatprep.subr.mxu0 0.0
    %3158 = vmatpush1.xpose.msra.mxu0 0.0
    %3159 = vmatprep.subr.mxu0 0.0
    %3160 = vmatpush1.xpose.msra.mxu0 0.0
    %3161 = vmatprep.subr.mxu0 0.0
    %3162 = vmatpush1.xpose.msra.mxu0 0.0
    %3163 = vmatprep.subr.mxu0 0.0
    %3164 = vmatpush1.xpose.msra.mxu0 0.0
    %3165 = vmatprep.subr.mxu0 0.0
    %3166 = vmatpush1.xpose.msra.mxu0 0.0
    %3167 = vmatprep.subr.mxu0 0.0
    %3168 = vmatpush1.xpose.msra.mxu0 0.0
    %3169 = vmatprep.subr.mxu0 0.0
    %3170 = vmatpush1.xpose.msra.mxu0 %v2363
    %3171 = vmatprep.subr.mxu0 0.0
    %3172 = vmatpush1.xpose.msra.mxu0 %v2357
    %3173 = vmatprep.subr.mxu0 0.0
    %3174 = vmatpush2.xpose.msra.mxu0 0.0
    %3175 = vmatprep.subr.mxu0 0.0
    %3176 = vmatpush2.xpose.msra.mxu0 0.0
    %3177 = vmatprep.subr.mxu0 0.0
    %3178 = vmatpush2.xpose.msra.mxu0 0.0
    %3179 = vmatprep.subr.mxu0 0.0
    %3180 = vmatpush2.xpose.msra.mxu0 0.0
    %3181 = vmatprep.subr.mxu0 0.0
    %3182 = vmatpush2.xpose.msra.mxu0 0.0
    %3183 = vmatprep.subr.mxu0 0.0
    %3184 = vmatpush2.xpose.msra.mxu0 0.0
    %3185 = vmatprep.subr.mxu0 0.0
    %3186 = vmatpush2.xpose.msra.mxu0 0.0
    %3187 = vmatprep.subr.mxu0 0.0
    %3188 = vmatpush2.xpose.msra.mxu0 0.0
    %3189 = vmatprep.subr.mxu0 0.0
    %3190 = vmatpush2.xpose.msra.mxu0 0.0
    %3191 = vmatprep.subr.mxu0 0.0
    %3192 = vmatpush2.xpose.msra.mxu0 0.0
    %3193 = vmatprep.subr.mxu0 0.0
    %3194 = vmatpush2.xpose.msra.mxu0 0.0
    %3195 = vmatprep.subr.mxu0 0.0
    %3196 = vmatpush2.xpose.msra.mxu0 0.0
    %3197 = vmatprep.subr.mxu0 0.0
    %3198 = vmatpush2.xpose.msra.mxu0 0.0
    %3199 = vmatprep.subr.mxu0 0.0
    %3200 = vmatpush2.xpose.msra.mxu0 0.0
    %3201 = vmatprep.subr.mxu0 0.0
    %3202 = vmatpush2.xpose.msra.mxu0 0.0
    %3203 = vmatprep.subr.mxu0 0.0
    %3204 = vmatpush2.xpose.msra.mxu0 0.0
    %3205 = vmatprep.mubr.f32.mxu0 0.0
    %3206 = vmatmul.mubr.f32.gmra.mxu0 %v2203
    %v3207 = vpop.f32.mrf.mxu0
    %v3208 = vadd.f32 %v275, %v3207
    %v3209 = vpop.f32.mrf.mxu0
    %3210 = vmatprep.mubr.f32.mxu0 0.0
    %3211 = vmatmul.mubr.f32.gmra.mxu0 %v2209
    %v3212 = vpop.f32.mrf.mxu0
    %v3213 = vadd.f32 %v276, %v3212
    %v3214 = vpop.f32.mrf.mxu0
    %3215 = vdwg.mxu0
    %v3216 = vsel %vm744, %v3208, -inf
    %3217 = vmax.xlane.f32.xlu0 %v3216
    %v3218 = vpop.xlane.xlu0 %3217
    %v3219 = vsel %vm744, %v3213, -inf
    %3220 = vmax.xlane.f32.xlu0 %v3219
    %v3221 = vpop.xlane.xlu0 %3220
    %v3222 = vsub.f32 %v3208, %v3218
    %v3223 = vsub.f32 %v3213, %v3221
    %v3224 = vmul.f32 %v3222, 1.442695
    %v3225 = vpow.pop %v3224
    %v3226 = vmul.f32 %v3223, 1.442695
    %v3227 = vpow.pop %v3226
    %v3228 = vsel %vm744, %v3225, 0.0
    %3229 = vadd.xlane.f32.xlu0 %v3228
    %v3230 = vpop.xlane.xlu0 %3229
    %v3231 = vsel %vm744, %v3227, 0.0
    %3232 = vadd.xlane.f32.xlu0 %v3231
    %v3233 = vpop.xlane.xlu0 %3232
    %v3234 = vrcp.pop %v3230
    %v3235 = vmul.f32 %v3225, %v3234
    %v3236 = vrcp.pop %v3233
    %v3237 = vmul.f32 %v3227, %v3236
    %s3238 = scalar_lea.vmem %s7, 224
    %v3239 = vld [vmem:[%s3238] sm:$0xff]
    %v3240 = vld [vmem:[%s3238 + $0x8] sm:$0xff]
    %v3241 = vld [vmem:[%s3238 + $0x10] sm:$0xff]
    %v3242 = vld [vmem:[%s3238 + $0x18] sm:$0xff]
    %3243 = vmatprep.subr.mxu0 0.0
    %3244 = vmatpush1.msra.mxu0 0.0
    %3245 = vmatprep.subr.mxu0 0.0
    %3246 = vmatpush1.msra.mxu0 0.0
    %3247 = vmatprep.subr.mxu0 0.0
    %3248 = vmatpush1.msra.mxu0 0.0
    %3249 = vmatprep.subr.mxu0 0.0
    %3250 = vmatpush1.msra.mxu0 0.0
    %3251 = vmatprep.subr.mxu0 0.0
    %3252 = vmatpush1.msra.mxu0 0.0
    %3253 = vmatprep.subr.mxu0 0.0
    %3254 = vmatpush1.msra.mxu0 0.0
    %3255 = vmatprep.subr.mxu0 0.0
    %3256 = vmatpush1.msra.mxu0 0.0
    %3257 = vmatprep.subr.mxu0 0.0
    %3258 = vmatpush1.msra.mxu0 0.0
    %3259 = vmatprep.subr.mxu0 0.0
    %3260 = vmatpush1.msra.mxu0 0.0
    %3261 = vmatprep.subr.mxu0 0.0
    %3262 = vmatpush1.msra.mxu0 0.0
    %3263 = vmatprep.subr.mxu0 0.0
    %3264 = vmatpush1.msra.mxu0 0.0
    %3265 = vmatprep.subr.mxu0 0.0
    %3266 = vmatpush1.msra.mxu0 0.0
    %3267 = vmatprep.subr.mxu0 0.0
    %3268 = vmatpush1.msra.mxu0 %v3242
    %3269 = vmatprep.subr.mxu0 0.0
    %3270 = vmatpush1.msra.mxu0 %v3241
    %3271 = vmatprep.subr.mxu0 0.0
    %3272 = vmatpush1.msra.mxu0 %v3240
    %3273 = vmatprep.subr.mxu0 0.0
    %3274 = vmatpush1.msra.mxu0 %v3239
    %3275 = vmatprep.subr.mxu0 0.0
    %3276 = vmatpush2.msra.mxu0 0.0
    %3277 = vmatprep.subr.mxu0 0.0
    %3278 = vmatpush2.msra.mxu0 0.0
    %3279 = vmatprep.subr.mxu0 0.0
    %3280 = vmatpush2.msra.mxu0 0.0
    %3281 = vmatprep.subr.mxu0 0.0
    %3282 = vmatpush2.msra.mxu0 0.0
    %3283 = vmatprep.subr.mxu0 0.0
    %3284 = vmatpush2.msra.mxu0 0.0
    %3285 = vmatprep.subr.mxu0 0.0
    %3286 = vmatpush2.msra.mxu0 0.0
    %3287 = vmatprep.subr.mxu0 0.0
    %3288 = vmatpush2.msra.mxu0 0.0
    %3289 = vmatprep.subr.mxu0 0.0
    %3290 = vmatpush2.msra.mxu0 0.0
    %3291 = vmatprep.subr.mxu0 0.0
    %3292 = vmatpush2.msra.mxu0 0.0
    %3293 = vmatprep.subr.mxu0 0.0
    %3294 = vmatpush2.msra.mxu0 0.0
    %3295 = vmatprep.subr.mxu0 0.0
    %3296 = vmatpush2.msra.mxu0 0.0
    %3297 = vmatprep.subr.mxu0 0.0
    %3298 = vmatpush2.msra.mxu0 0.0
    %3299 = vmatprep.subr.mxu0 0.0
    %3300 = vmatpush2.msra.mxu0 0.0
    %3301 = vmatprep.subr.mxu0 0.0
    %3302 = vmatpush2.msra.mxu0 0.0
    %3303 = vmatprep.subr.mxu0 0.0
    %3304 = vmatpush2.msra.mxu0 0.0
    %3305 = vmatprep.subr.mxu0 0.0
    %3306 = vmatpush2.msra.mxu0 0.0
    %3307 = vmatprep.mubr.f32.mxu0 0.0
    %3308 = vmatmul.mubr.f32.gmra.mxu0 %v2052
    %v3309 = vpop.f32.mrf.mxu0
    %v3310 = vadd.f32 0.0, %v3309
    %v3311 = vpop.f32.mrf.mxu0
    %3312 = vmatprep.mubr.f32.mxu0 0.0
    %3313 = vmatmul.mubr.f32.gmra.mxu0 %v2055
    %v3314 = vpop.f32.mrf.mxu0
    %v3315 = vadd.f32 0.0, %v3314
    %v3316 = vpop.f32.mrf.mxu0
    %3317 = vdwg.mxu0
    %v3319 = vsel %vm744, %v3235, 0
    %v3322 = vsel %vm744, %v3237, 0
    %3324 = vmatprep.subr.mxu0 0.0
    %3325 = vmatpush1.msra.mxu0 0.0
    %3326 = vmatprep.subr.mxu0 0.0
    %3327 = vmatpush1.msra.mxu0 0.0
    %3328 = vmatprep.subr.mxu0 0.0
    %3329 = vmatpush1.msra.mxu0 0.0
    %3330 = vmatprep.subr.mxu0 0.0
    %3331 = vmatpush1.msra.mxu0 0.0
    %3332 = vmatprep.subr.mxu0 0.0
    %3333 = vmatpush1.msra.mxu0 0.0
    %3334 = vmatprep.subr.mxu0 0.0
    %3335 = vmatpush1.msra.mxu0 0.0
    %3336 = vmatprep.subr.mxu0 0.0
    %3337 = vmatpush1.msra.mxu0 0.0
    %3338 = vmatprep.subr.mxu0 0.0
    %3339 = vmatpush1.msra.mxu0 0.0
    %3340 = vmatprep.subr.mxu0 0.0
    %3341 = vmatpush1.msra.mxu0 0.0
    %3342 = vmatprep.subr.mxu0 0.0
    %3343 = vmatpush1.msra.mxu0 0.0
    %3344 = vmatprep.subr.mxu0 0.0
    %3345 = vmatpush1.msra.mxu0 0.0
    %3346 = vmatprep.subr.mxu0 0.0
    %3347 = vmatpush1.msra.mxu0 0.0
    %3348 = vmatprep.subr.mxu0 0.0
    %3349 = vmatpush1.msra.mxu0 0.0
    %3350 = vmatprep.subr.mxu0 0.0
    %3351 = vmatpush1.msra.mxu0 0.0
    %3352 = vmatprep.subr.mxu0 0.0
    %3353 = vmatpush1.msra.mxu0 %v3315
    %3354 = vmatprep.subr.mxu0 0.0
    %3355 = vmatpush1.msra.mxu0 %v3310
    %3356 = vmatprep.subr.mxu0 0.0
    %3357 = vmatpush2.msra.mxu0 0.0
    %3358 = vmatprep.subr.mxu0 0.0
    %3359 = vmatpush2.msra.mxu0 0.0
    %3360 = vmatprep.subr.mxu0 0.0
    %3361 = vmatpush2.msra.mxu0 0.0
    %3362 = vmatprep.subr.mxu0 0.0
    %3363 = vmatpush2.msra.mxu0 0.0
    %3364 = vmatprep.subr.mxu0 0.0
    %3365 = vmatpush2.msra.mxu0 0.0
    %3366 = vmatprep.subr.mxu0 0.0
    %3367 = vmatpush2.msra.mxu0 0.0
    %3368 = vmatprep.subr.mxu0 0.0
    %3369 = vmatpush2.msra.mxu0 0.0
    %3370 = vmatprep.subr.mxu0 0.0
    %3371 = vmatpush2.msra.mxu0 0.0
    %3372 = vmatprep.subr.mxu0 0.0
    %3373 = vmatpush2.msra.mxu0 0.0
    %3374 = vmatprep.subr.mxu0 0.0
    %3375 = vmatpush2.msra.mxu0 0.0
    %3376 = vmatprep.subr.mxu0 0.0
    %3377 = vmatpush2.msra.mxu0 0.0
    %3378 = vmatprep.subr.mxu0 0.0
    %3379 = vmatpush2.msra.mxu0 0.0
    %3380 = vmatprep.subr.mxu0 0.0
    %3381 = vmatpush2.msra.mxu0 0.0
    %3382 = vmatprep.subr.mxu0 0.0
    %3383 = vmatpush2.msra.mxu0 0.0
    %3384 = vmatprep.subr.mxu0 0.0
    %3385 = vmatpush2.msra.mxu0 0.0
    %3386 = vmatprep.subr.mxu0 0.0
    %3387 = vmatpush2.msra.mxu0 0.0
    %3388 = vmatprep.mubr.f32.mxu0 0.0
    %3389 = vmatmul.mubr.f32.gmra.mxu0 %v3319
    %v3390 = vpop.f32.mrf.mxu0
    %v3391 = vadd.f32 0.0, %v3390
    %v3392 = vpop.f32.mrf.mxu0
    %3393 = vmatprep.mubr.f32.mxu0 0.0
    %3394 = vmatmul.mubr.f32.gmra.mxu0 %v3322
    %v3395 = vpop.f32.mrf.mxu0
    %v3396 = vadd.f32 0.0, %v3395
    %v3397 = vpop.f32.mrf.mxu0
    %3398 = vdwg.mxu0
    %v3399 = vadd.f32 %v3139, %v3391
    %v3400 = vadd.f32 %v3140, %v3396
    %v3401 = vadd.f32 %v1970, %v3399
    %v3402 = vadd.f32 %v1971, %v3400
    %s3403 = scalar_lea.vmem [#allocation13], 1
    %v3404 = vld [vmem:[%s3403] sm:$0x1]
    %v3406 = vlaneseq
    %v3407 = vshrl.u32 %v3406, 7
    %v3408 = vsub.s32 0, %v3407
    %v3409 = vrot.slane %v3404, %v3408
    %v3411 = vadd.f32 %v3401, %v3409
    %v3412 = vadd.f32 %v3402, %v3409
    %s3413 = scalar_lea.vmem [#allocation14], 1
    %v3414 = vld [vmem:[%s3413] sm:$0x1]
    %s3415 = scalar_lea.vmem %s10, 1
    %v3416 = vld [vmem:[%s3415] sm:$0x1]
    %v3417 = vsel %vm279, %v3411, 0.0
    %3418 = vadd.xlane.f32.xlu0 %v3417
    %v3419 = vpop.xlane.xlu0 %3418
    %v3420 = vsel %vm279, %v3412, 0.0
    %3421 = vadd.xlane.f32.xlu0 %v3420
    %v3422 = vpop.xlane.xlu0 %3421
    %v3423 = vmul.f32 %v3419, %v286
    %v3424 = vmul.f32 %v3422, %v286
    %v3425 = vsub.f32 %v3411, %v3423
    %v3426 = vsub.f32 %v3412, %v3424
    %v3427 = vmul.f32 %v3425, %v3425
    %v3428 = vmul.f32 %v3426, %v3426
    %v3429 = vsel %vm279, %v3427, 0.0
    %3430 = vadd.xlane.f32.xlu0 %v3429
    %v3431 = vpop.xlane.xlu0 %3430
    %v3432 = vsel %vm279, %v3428, 0.0
    %3433 = vadd.xlane.f32.xlu0 %v3432
    %v3434 = vpop.xlane.xlu0 %3433
    %v3435 = vmul.f32 %v3431, %v286
    %v3436 = vmul.f32 %v3434, %v286
    %v3437 = vadd.f32 %v3435, 1e-05
    %v3438 = vadd.f32 %v3436, 1e-05
    %v3439 = vrsqrt.pop %v3437
    %v3440 = vrsqrt.pop %v3438
    %v3441 = vmul.f32 %v3425, %v3439
    %v3442 = vmul.f32 %v3426, %v3440
    %v3444 = vlaneseq
    %v3445 = vshrl.u32 %v3444, 7
    %v3446 = vsub.s32 0, %v3445
    %v3447 = vrot.slane %v3414, %v3446
    %v3449 = vmul.f32 %v3447, %v3441
    %v3450 = vmul.f32 %v3447, %v3442
    %v3452 = vlaneseq
    %v3453 = vshrl.u32 %v3452, 7
    %v3454 = vsub.s32 0, %v3453
    %v3455 = vrot.slane %v3416, %v3454
    %v3457 = vadd.f32 %v3449, %v3455
    %v3458 = vadd.f32 %v3450, %v3455
    %s3459 = scalar_lea.vmem %s11, 32
    %v3460 = vld [vmem:[%s3459] sm:$0xff]
    %v3461 = vld [vmem:[%s3459 + $0x8] sm:$0xff]
    %v3462 = vld [vmem:[%s3459 + $0x10] sm:$0xff]
    %v3463 = vld [vmem:[%s3459 + $0x18] sm:$0xff]
    %s3464 = scalar_lea.vmem %s12, 1
    %v3465 = vld [vmem:[%s3464] sm:$0x1]
    %v3467 = vlaneseq
    %v3468 = vshrl.u32 %v3467, 7
    %v3469 = vsub.s32 0, %v3468
    %v3470 = vrot.slane %v3465, %v3469
    %v3473 = vsel %vm279, %v3457, 0
    %v3476 = vsel %vm279, %v3458, 0
    %3478 = vmatprep.subr.mxu0 0.0
    %3479 = vmatpush1.msra.mxu0 0.0
    %3480 = vmatprep.subr.mxu0 0.0
    %3481 = vmatpush1.msra.mxu0 0.0
    %3482 = vmatprep.subr.mxu0 0.0
    %3483 = vmatpush1.msra.mxu0 0.0
    %3484 = vmatprep.subr.mxu0 0.0
    %3485 = vmatpush1.msra.mxu0 0.0
    %3486 = vmatprep.subr.mxu0 0.0
    %3487 = vmatpush1.msra.mxu0 0.0
    %3488 = vmatprep.subr.mxu0 0.0
    %3489 = vmatpush1.msra.mxu0 0.0
    %3490 = vmatprep.subr.mxu0 0.0
    %3491 = vmatpush1.msra.mxu0 0.0
    %3492 = vmatprep.subr.mxu0 0.0
    %3493 = vmatpush1.msra.mxu0 0.0
    %3494 = vmatprep.subr.mxu0 0.0
    %3495 = vmatpush1.msra.mxu0 0.0
    %3496 = vmatprep.subr.mxu0 0.0
    %3497 = vmatpush1.msra.mxu0 0.0
    %3498 = vmatprep.subr.mxu0 0.0
    %3499 = vmatpush1.msra.mxu0 0.0
    %3500 = vmatprep.subr.mxu0 0.0
    %3501 = vmatpush1.msra.mxu0 0.0
    %3502 = vmatprep.subr.mxu0 0.0
    %3503 = vmatpush1.msra.mxu0 %v3463
    %3504 = vmatprep.subr.mxu0 0.0
    %3505 = vmatpush1.msra.mxu0 %v3462
    %3506 = vmatprep.subr.mxu0 0.0
    %3507 = vmatpush1.msra.mxu0 %v3461
    %3508 = vmatprep.subr.mxu0 0.0
    %3509 = vmatpush1.msra.mxu0 %v3460
    %3510 = vmatprep.subr.mxu0 0.0
    %3511 = vmatpush2.msra.mxu0 0.0
    %3512 = vmatprep.subr.mxu0 0.0
    %3513 = vmatpush2.msra.mxu0 0.0
    %3514 = vmatprep.subr.mxu0 0.0
    %3515 = vmatpush2.msra.mxu0 0.0
    %3516 = vmatprep.subr.mxu0 0.0
    %3517 = vmatpush2.msra.mxu0 0.0
    %3518 = vmatprep.subr.mxu0 0.0
    %3519 = vmatpush2.msra.mxu0 0.0
    %3520 = vmatprep.subr.mxu0 0.0
    %3521 = vmatpush2.msra.mxu0 0.0
    %3522 = vmatprep.subr.mxu0 0.0
    %3523 = vmatpush2.msra.mxu0 0.0
    %3524 = vmatprep.subr.mxu0 0.0
    %3525 = vmatpush2.msra.mxu0 0.0
    %3526 = vmatprep.subr.mxu0 0.0
    %3527 = vmatpush2.msra.mxu0 0.0
    %3528 = vmatprep.subr.mxu0 0.0
    %3529 = vmatpush2.msra.mxu0 0.0
    %3530 = vmatprep.subr.mxu0 0.0
    %3531 = vmatpush2.msra.mxu0 0.0
    %3532 = vmatprep.subr.mxu0 0.0
    %3533 = vmatpush2.msra.mxu0 0.0
    %3534 = vmatprep.subr.mxu0 0.0
    %3535 = vmatpush2.msra.mxu0 0.0
    %3536 = vmatprep.subr.mxu0 0.0
    %3537 = vmatpush2.msra.mxu0 0.0
    %3538 = vmatprep.subr.mxu0 0.0
    %3539 = vmatpush2.msra.mxu0 0.0
    %3540 = vmatprep.subr.mxu0 0.0
    %3541 = vmatpush2.msra.mxu0 0.0
    %3542 = vmatprep.mubr.f32.mxu0 0.0
    %3543 = vmatmul.mubr.f32.gmra.mxu0 %v3473
    %v3544 = vpop.f32.mrf.mxu0
    %v3545 = vadd.f32 %v3470, %v3544
    %v3546 = vpop.f32.mrf.mxu0
    %3547 = vmatprep.mubr.f32.mxu0 0.0
    %3548 = vmatmul.mubr.f32.gmra.mxu0 %v3476
    %v3549 = vpop.f32.mrf.mxu0
    %v3550 = vadd.f32 %v3470, %v3549
    %v3551 = vpop.f32.mrf.mxu0
    %3552 = vdwg.mxu0
    %v3553 = vmul.f32 %v3545, 0.5
    %v3554 = vmul.f32 %v3550, 0.5
    %v3555 = vmul.f32 %v3545, %v3545
    %v3556 = vmul.f32 %v3550, %v3550
    %v3557 = vmul.f32 %v3545, %v3555
    %v3558 = vmul.f32 %v3550, %v3556
    %v3559 = vmul.f32 %v3557, 0.044715
    %v3560 = vmul.f32 %v3558, 0.044715
    %v3561 = vadd.f32 %v3545, %v3559
    %v3562 = vadd.f32 %v3550, %v3560
    %v3563 = vmul.f32 %v3561, 0.7978846
    %v3564 = vmul.f32 %v3562, 0.7978846
    %v3565 = vtanh.pop %v3563
    %v3566 = vtanh.pop %v3564
    %v3567 = vadd.f32 %v3565, 1.0
    %v3568 = vadd.f32 %v3566, 1.0
    %v3569 = vmul.f32 %v3553, %v3567
    %v3570 = vmul.f32 %v3554, %v3568
    %s3571 = scalar_lea.vmem %s13, 128
    %v3572 = vld [vmem:[%s3571] sm:$0xff]
    %v3573 = vld [vmem:[%s3571 + $0x8] sm:$0xff]
    %v3574 = vld [vmem:[%s3571 + $0x10] sm:$0xff]
    %v3575 = vld [vmem:[%s3571 + $0x18] sm:$0xff]
    %v3576 = vld [vmem:[%s3571 + $0x20] sm:$0xff]
    %v3577 = vld [vmem:[%s3571 + $0x28] sm:$0xff]
    %v3578 = vld [vmem:[%s3571 + $0x30] sm:$0xff]
    %v3579 = vld [vmem:[%s3571 + $0x38] sm:$0xff]
    %v3580 = vld [vmem:[%s3571 + $0x40] sm:$0xff]
    %v3581 = vld [vmem:[%s3571 + $0x48] sm:$0xff]
    %v3582 = vld [vmem:[%s3571 + $0x50] sm:$0xff]
    %v3583 = vld [vmem:[%s3571 + $0x58] sm:$0xff]
    %v3584 = vld [vmem:[%s3571 + $0x60] sm:$0xff]
    %v3585 = vld [vmem:[%s3571 + $0x68] sm:$0xff]
    %v3586 = vld [vmem:[%s3571 + $0x70] sm:$0xff]
    %v3587 = vld [vmem:[%s3571 + $0x78] sm:$0xff]
    %3588 = vmatprep.subr.mxu0 0.0
    %3589 = vmatpush1.msra.mxu0 %v3587
    %3590 = vmatprep.subr.mxu0 0.0
    %3591 = vmatpush1.msra.mxu0 %v3586
    %3592 = vmatprep.subr.mxu0 0.0
    %3593 = vmatpush1.msra.mxu0 %v3585
    %3594 = vmatprep.subr.mxu0 0.0
    %3595 = vmatpush1.msra.mxu0 %v3584
    %3596 = vmatprep.subr.mxu0 0.0
    %3597 = vmatpush1.msra.mxu0 %v3583
    %3598 = vmatprep.subr.mxu0 0.0
    %3599 = vmatpush1.msra.mxu0 %v3582
    %3600 = vmatprep.subr.mxu0 0.0
    %3601 = vmatpush1.msra.mxu0 %v3581
    %3602 = vmatprep.subr.mxu0 0.0
    %3603 = vmatpush1.msra.mxu0 %v3580
    %3604 = vmatprep.subr.mxu0 0.0
    %3605 = vmatpush1.msra.mxu0 %v3579
    %3606 = vmatprep.subr.mxu0 0.0
    %3607 = vmatpush1.msra.mxu0 %v3578
    %3608 = vmatprep.subr.mxu0 0.0
    %3609 = vmatpush1.msra.mxu0 %v3577
    %3610 = vmatprep.subr.mxu0 0.0
    %3611 = vmatpush1.msra.mxu0 %v3576
    %3612 = vmatprep.subr.mxu0 0.0
    %3613 = vmatpush1.msra.mxu0 %v3575
    %3614 = vmatprep.subr.mxu0 0.0
    %3615 = vmatpush1.msra.mxu0 %v3574
    %3616 = vmatprep.subr.mxu0 0.0
    %3617 = vmatpush1.msra.mxu0 %v3573
    %3618 = vmatprep.subr.mxu0 0.0
    %3619 = vmatpush1.msra.mxu0 %v3572
    %3620 = vmatprep.subr.mxu0 0.0
    %3621 = vmatpush2.msra.mxu0 0.0
    %3622 = vmatprep.subr.mxu0 0.0
    %3623 = vmatpush2.msra.mxu0 0.0
    %3624 = vmatprep.subr.mxu0 0.0
    %3625 = vmatpush2.msra.mxu0 0.0
    %3626 = vmatprep.subr.mxu0 0.0
    %3627 = vmatpush2.msra.mxu0 0.0
    %3628 = vmatprep.subr.mxu0 0.0
    %3629 = vmatpush2.msra.mxu0 0.0
    %3630 = vmatprep.subr.mxu0 0.0
    %3631 = vmatpush2.msra.mxu0 0.0
    %3632 = vmatprep.subr.mxu0 0.0
    %3633 = vmatpush2.msra.mxu0 0.0
    %3634 = vmatprep.subr.mxu0 0.0
    %3635 = vmatpush2.msra.mxu0 0.0
    %3636 = vmatprep.subr.mxu0 0.0
    %3637 = vmatpush2.msra.mxu0 0.0
    %3638 = vmatprep.subr.mxu0 0.0
    %3639 = vmatpush2.msra.mxu0 0.0
    %3640 = vmatprep.subr.mxu0 0.0
    %3641 = vmatpush2.msra.mxu0 0.0
    %3642 = vmatprep.subr.mxu0 0.0
    %3643 = vmatpush2.msra.mxu0 0.0
    %3644 = vmatprep.subr.mxu0 0.0
    %3645 = vmatpush2.msra.mxu0 0.0
    %3646 = vmatprep.subr.mxu0 0.0
    %3647 = vmatpush2.msra.mxu0 0.0
    %3648 = vmatprep.subr.mxu0 0.0
    %3649 = vmatpush2.msra.mxu0 0.0
    %3650 = vmatprep.subr.mxu0 0.0
    %3651 = vmatpush2.msra.mxu0 0.0
    %3652 = vmatprep.mubr.f32.mxu0 0.0
    %3653 = vmatmul.mubr.f32.gmra.mxu0 %v3569
    %v3654 = vpop.f32.mrf.mxu0
    %v3655 = vadd.f32 0.0, %v3654
    %v3656 = vpop.f32.mrf.mxu0
    %3657 = vmatprep.mubr.f32.mxu0 0.0
    %3658 = vmatmul.mubr.f32.gmra.mxu0 %v3570
    %v3659 = vpop.f32.mrf.mxu0
    %v3660 = vadd.f32 0.0, %v3659
    %v3661 = vpop.f32.mrf.mxu0
    %3662 = vdwg.mxu0
    %v3663 = vadd.f32 %v3411, %v3655
    %v3664 = vadd.f32 %v3412, %v3660
    %s3665 = scalar_lea.vmem %s14, 1
    %v3666 = vld [vmem:[%s3665] sm:$0x1]
    %v3668 = vlaneseq
    %v3669 = vshrl.u32 %v3668, 7
    %v3670 = vsub.s32 0, %v3669
    %v3671 = vrot.slane %v3666, %v3670
    %v3673 = vadd.f32 %v3663, %v3671
    %v3674 = vadd.f32 %v3664, %v3671
    %v3675 = vld [vmem:[%s15] sm:$0x1]
    %v3676 = vld [vmem:[%s16] sm:$0x1]
    %v3677 = vsel %vm279, %v3673, 0.0
    %3678 = vadd.xlane.f32.xlu0 %v3677
    %v3679 = vpop.xlane.xlu0 %3678
    %v3680 = vsel %vm279, %v3674, 0.0
    %3681 = vadd.xlane.f32.xlu0 %v3680
    %v3682 = vpop.xlane.xlu0 %3681
    %v3683 = vmul.f32 %v3679, %v286
    %v3684 = vmul.f32 %v3682, %v286
    %v3685 = vsub.f32 %v3673, %v3683
    %v3686 = vsub.f32 %v3674, %v3684
    %v3687 = vmul.f32 %v3685, %v3685
    %v3688 = vmul.f32 %v3686, %v3686
    %v3689 = vsel %vm279, %v3687, 0.0
    %3690 = vadd.xlane.f32.xlu0 %v3689
    %v3691 = vpop.xlane.xlu0 %3690
    %v3692 = vsel %vm279, %v3688, 0.0
    %3693 = vadd.xlane.f32.xlu0 %v3692
    %v3694 = vpop.xlane.xlu0 %3693
    %v3695 = vmul.f32 %v3691, %v286
    %v3696 = vmul.f32 %v3694, %v286
    %v3697 = vadd.f32 %v3695, 1e-05
    %v3698 = vadd.f32 %v3696, 1e-05
    %v3699 = vrsqrt.pop %v3697
    %v3700 = vrsqrt.pop %v3698
    %v3701 = vmul.f32 %v3685, %v3699
    %v3702 = vmul.f32 %v3686, %v3700
    %v3704 = vlaneseq
    %v3705 = vshrl.u32 %v3704, 7
    %v3706 = vsub.s32 0, %v3705
    %v3707 = vrot.slane %v3675, %v3706
    %v3709 = vmul.f32 %v3707, %v3701
    %v3710 = vmul.f32 %v3707, %v3702
    %v3712 = vlaneseq
    %v3713 = vshrl.u32 %v3712, 7
    %v3714 = vsub.s32 0, %v3713
    %v3715 = vrot.slane %v3676, %v3714
    %v3717 = vadd.f32 %v3709, %v3715
    %v3718 = vadd.f32 %v3710, %v3715
    %v3719 = vld [vmem:[%s17] sm:$0xff]
    %v3720 = vld [vmem:[%s17 + $0x8] sm:$0xff]
    %v3721 = vld [vmem:[%s17 + $0x10] sm:$0xff]
    %v3722 = vld [vmem:[%s17 + $0x18] sm:$0xff]
    %v3724 = vsel %vm279, %v3717, 0
    %v3727 = vsel %vm279, %v3718, 0
    %3729 = vmatprep.subr.mxu0 0.0
    %3730 = vmatpush1.msra.mxu0 0.0
    %3731 = vmatprep.subr.mxu0 0.0
    %3732 = vmatpush1.msra.mxu0 0.0
    %3733 = vmatprep.subr.mxu0 0.0
    %3734 = vmatpush1.msra.mxu0 0.0
    %3735 = vmatprep.subr.mxu0 0.0
    %3736 = vmatpush1.msra.mxu0 0.0
    %3737 = vmatprep.subr.mxu0 0.0
    %3738 = vmatpush1.msra.mxu0 0.0
    %3739 = vmatprep.subr.mxu0 0.0
    %3740 = vmatpush1.msra.mxu0 0.0
    %3741 = vmatprep.subr.mxu0 0.0
    %3742 = vmatpush1.msra.mxu0 0.0
    %3743 = vmatprep.subr.mxu0 0.0
    %3744 = vmatpush1.msra.mxu0 0.0
    %3745 = vmatprep.subr.mxu0 0.0
    %3746 = vmatpush1.msra.mxu0 0.0
    %3747 = vmatprep.subr.mxu0 0.0
    %3748 = vmatpush1.msra.mxu0 0.0
    %3749 = vmatprep.subr.mxu0 0.0
    %3750 = vmatpush1.msra.mxu0 0.0
    %3751 = vmatprep.subr.mxu0 0.0
    %3752 = vmatpush1.msra.mxu0 0.0
    %3753 = vmatprep.subr.mxu0 0.0
    %3754 = vmatpush1.msra.mxu0 %v3722
    %3755 = vmatprep.subr.mxu0 0.0
    %3756 = vmatpush1.msra.mxu0 %v3721
    %3757 = vmatprep.subr.mxu0 0.0
    %3758 = vmatpush1.msra.mxu0 %v3720
    %3759 = vmatprep.subr.mxu0 0.0
    %3760 = vmatpush1.msra.mxu0 %v3719
    %3761 = vmatprep.subr.mxu0 0.0
    %3762 = vmatpush2.msra.mxu0 0.0
    %3763 = vmatprep.subr.mxu0 0.0
    %3764 = vmatpush2.msra.mxu0 0.0
    %3765 = vmatprep.subr.mxu0 0.0
    %3766 = vmatpush2.msra.mxu0 0.0
    %3767 = vmatprep.subr.mxu0 0.0
    %3768 = vmatpush2.msra.mxu0 0.0
    %3769 = vmatprep.subr.mxu0 0.0
    %3770 = vmatpush2.msra.mxu0 0.0
    %3771 = vmatprep.subr.mxu0 0.0
    %3772 = vmatpush2.msra.mxu0 0.0
    %3773 = vmatprep.subr.mxu0 0.0
    %3774 = vmatpush2.msra.mxu0 0.0
    %3775 = vmatprep.subr.mxu0 0.0
    %3776 = vmatpush2.msra.mxu0 0.0
    %3777 = vmatprep.subr.mxu0 0.0
    %3778 = vmatpush2.msra.mxu0 0.0
    %3779 = vmatprep.subr.mxu0 0.0
    %3780 = vmatpush2.msra.mxu0 0.0
    %3781 = vmatprep.subr.mxu0 0.0
    %3782 = vmatpush2.msra.mxu0 0.0
    %3783 = vmatprep.subr.mxu0 0.0
    %3784 = vmatpush2.msra.mxu0 0.0
    %3785 = vmatprep.subr.mxu0 0.0
    %3786 = vmatpush2.msra.mxu0 0.0
    %3787 = vmatprep.subr.mxu0 0.0
    %3788 = vmatpush2.msra.mxu0 0.0
    %3789 = vmatprep.subr.mxu0 0.0
    %3790 = vmatpush2.msra.mxu0 0.0
    %3791 = vmatprep.subr.mxu0 0.0
    %3792 = vmatpush2.msra.mxu0 0.0
    %3793 = vmatprep.mubr.f32.mxu0 0.0
    %3794 = vmatmul.mubr.f32.gmra.mxu0 %v3724
    %v3795 = vpop.f32.mrf.mxu0
    %v3796 = vadd.f32 0.0, %v3795
    %v3797 = vpop.f32.mrf.mxu0
    %3798 = vmatprep.mubr.f32.mxu0 0.0
    %3799 = vmatmul.mubr.f32.gmra.mxu0 %v3727
    %v3800 = vpop.f32.mrf.mxu0
    %v3801 = vadd.f32 0.0, %v3800
    %v3802 = vpop.f32.mrf.mxu0
    %3803 = vdwg.mxu0
    %3804 = vst [vmem:[#allocation16] sm:$0xff] %v3796
    %3805 = vst [vmem:[#allocation16 + $0x8] sm:$0xff] %v3801
    // Predicated region
    $region106: #{tpu_custom_call.1} parent=1 // pred_check
      _
    $region107: #{tpu_custom_call.1} parent=1 // pred_check_branch
      %3807 = sbr.rel (0) target = $region109
    $region108: #{tpu_custom_call.1} parent=1 // pred_region
      %s3809 = ssub.s32 256, 256
      %3810 = vsyncadd [#allocation4], %s3809
      %s3811 = sshll.u32 [#allocation16], 4
      %s3812 = int_to_ptr.vmem [resolvable:$true] %s3811
      %3817 = dma.vmem_to_hbm [thread:$0]  %s3812, 256, %s18, [#allocation4], 128, 128, 8
    $region109: #{tpu_custom_call.1} parent=1 // pred_fallthru
      _
    // Predicated region
    $region110: #{tpu_custom_call.1} parent=1 // pred_check
      _
    $region111: #{tpu_custom_call.1} parent=1 // pred_check_branch
      %3819 = sbr.rel (0) target = $region113
    $region112: #{tpu_custom_call.1} parent=1 // pred_region
      %3820 = dma.done [#allocation4], 256
    $region113: #{tpu_custom_call.1} parent=1 // pred_fallthru
      _
    %3821 = vsyncpa [#allocation3], 1
    %3822 = vsyncpa [#allocation6], 1
    %3823 = vsyncpa [#allocation9], 1
    %3824 = vsyncpa [#allocation12], 1
    %3825 = vsyncpa [#allocation15], 1
    %3826 = vsyncpa [#allocation4], 1

</llo_original>
